<compile_context>
chip_gen: v7x
topology: tpu7x:2x2x1
jax: 0.10.0
libtpu: 0.0.40
codegen_flags: <defaults>
</compile_context>

<pallas_src>
import jax
import jax.numpy as jnp
from jax.experimental import pallas as pl
from jax.experimental.pallas import tpu as pltpu

NEG_SLOPE = 0.01  # nn.LeakyReLU default


def _leaky(z):
    # slope < 1 -> max(z, slope*z) == LeakyReLU(z)
    return jnp.maximum(z, NEG_SLOPE * z)


def _round_up(x, m):
    return ((x + m - 1) // m) * m


def parameter_ml_kernel(*refs):
    (in1_ref, in23_ref,
     wn1_23, wn1_1, bn1, wn2, bn2, wn3, bn3,          # noise_layer
     wa1, ba1, wa2, ba2, wa3, ba3,                    # attention_layer
     wx1, bx1, wx2, bx2, wx3, bx3,                    # aux_layer (zero-padded first W)
     wm1_a, wm1_x, bm1, wm2, bm2, wm3, bm3, wm4, bm4, # main_layer (wm4 padded to 128 cols)
     scale_ref, shift_ref, o_ref) = refs

    f32 = jnp.float32

    def dot(x, w_ref):
        # Cast the activation to the (possibly bf16) weight dtype at the MXU boundary;
        # accumulate in f32.
        w = w_ref[...]
        return jnp.dot(x.astype(w.dtype), w, preferred_element_type=f32)

    x1 = in1_ref[...]            # (TB, 52)  f32
    x23 = in23_ref[...]          # (TB, D3+D2) f32 (= [input3 | input2])

    # ---- noise_layer(cat(x3, x2, x1)): concat folded into two partial dots.
    h = _leaky(dot(x23, wn1_23) + dot(x1, wn1_1) + bn1[...])
    h = _leaky(dot(h, wn2) + bn2[...])
    noise = dot(h, wn3) + bn3[...]                    # (TB, 52), no final activation
    a = x1 * noise

    # ---- attention_layer(a)
    t = _leaky(dot(a, wa1) + ba1[...])
    t = _leaky(dot(t, wa2) + ba2[...])
    att = dot(t, wa3) + ba3[...]                      # (TB, 52)
    a_att = a * att

    # ---- aux_layer(x2): wx1 is zero-padded over the x3 rows, so x23 @ wx1 == x2 @ wx1_orig.
    u = _leaky(dot(x23, wx1) + bx1[...])
    u = _leaky(dot(u, wx2) + bx2[...])
    aux = dot(u, wx3) + bx3[...]                      # (TB, 64)

    # ---- main_layer(cat(a*att, aux)): concat folded into two partial dots.
    m = _leaky(dot(a_att, wm1_a) + dot(aux, wm1_x) + bm1[...])
    m = _leaky(dot(m, wm2) + bm2[...])
    m = _leaky(dot(m, wm3) + bm3[...])
    y = jax.nn.sigmoid(dot(m, wm4) + bm4[...])        # (TB, 128) lane-dense (cols >=20 are junk)

    # ---- reshape(B,4,5) * [1,11,11,-6] - [0,12,12,-6], flattened + zero-padded to (1, 128).
    o_ref[...] = (y * scale_ref[...] - shift_ref[...]).astype(o_ref.dtype)


def parameter_ml_forward(input1, input2, input3, params, *,
                         block_b=None, dot_dtype=jnp.bfloat16):
    """params: dict with 'noise', 'attention', 'aux', 'main' -> list of (W, b).

    W are (in_features, out_features); b are (1, out_features).
    dot_dtype: dtype for matmul operands (bf16 recommended on v5e/v6e/v7x; f32 for exactness).
    """
    B, D1 = input1.shape
    D2 = input2.shape[1]
    D3 = input3.shape[1]
    D23 = D3 + D2

    (wn1, bn1), (wn2, bn2), (wn3, bn3) = params["noise"]
    (wa1, ba1), (wa2, ba2), (wa3, ba3) = params["attention"]
    (wx1, bx1), (wx2, bx2), (wx3, bx3) = params["aux"]
    (wm1, bm1), (wm2, bm2), (wm3, bm3), (wm4, bm4) = params["main"]

    # Split first-layer weights so the in-kernel concats become partial dots.
    # noise_layer input is cat(input3, input2, input1) -> row blocks [D3+D2 | D1].
    wn1_23 = wn1[:D23]
    wn1_1 = wn1[D23:]
    # aux_layer consumes the merged (B, D3+D2) operand: zero rows for the input3 half.
    wx1p = jnp.concatenate([jnp.zeros((D3, wx1.shape[1]), wx1.dtype), wx1], axis=0)
    # main_layer input is cat(a*att, aux) -> row blocks [D1 | 64].
    wm1_a = wm1[:D1]
    wm1_x = wm1[D1:]

    out_dim = wm4.shape[1]                 # 20
    n_groups, per_group = 4, out_dim // 4
    out_pad = _round_up(out_dim, 128)      # lane-dense output (128)

    # Pad last main-layer weight/bias and the folded scale/shift to 128 output lanes.
    wm4p = jnp.pad(wm4, ((0, 0), (0, out_pad - out_dim)))
    bm4p = jnp.pad(bm4, ((0, 0), (0, out_pad - out_dim)))
    scale_flat = jnp.pad(
        jnp.repeat(jnp.array([1.0, 11.0, 11.0, -6.0], jnp.float32), per_group)[None, :],
        ((0, 0), (0, out_pad - out_dim)))
    shift_flat = jnp.pad(
        jnp.repeat(jnp.array([0.0, 12.0, 12.0, -6.0], jnp.float32), per_group)[None, :],
        ((0, 0), (0, out_pad - out_dim)))

    # Batch tiling: pad B to a multiple of the tile (f32 sublane = 8). 512 rows keeps
    # VMEM at a few MB (fine even on v7x's 64 MiB) while amortizing per-step overhead,
    # and gives >=2 grid steps (2-TC sharding on v7x) once B > 512.
    if block_b is None:
        block_b = max(8, min(512, _round_up(B, 8)))
    block_b = _round_up(block_b, 8)
    B_pad = _round_up(B, block_b)

    def pad_b(x):
        return jnp.pad(x, ((0, B_pad - B), (0, 0))) if B_pad != B else x

    x1 = pad_b(input1).astype(jnp.float32)
    x23 = pad_b(jnp.concatenate([input3, input2], axis=1)).astype(jnp.float32)

    dd = dot_dtype
    f32 = jnp.float32
    consts = [
        wn1_23.astype(dd), wn1_1.astype(dd), bn1.astype(f32),
        wn2.astype(dd), bn2.astype(f32), wn3.astype(dd), bn3.astype(f32),
        wa1.astype(dd), ba1.astype(f32), wa2.astype(dd), ba2.astype(f32),
        wa3.astype(dd), ba3.astype(f32),
        wx1p.astype(dd), bx1.astype(f32), wx2.astype(dd), bx2.astype(f32),
        wx3.astype(dd), bx3.astype(f32),
        wm1_a.astype(dd), wm1_x.astype(dd), bm1.astype(f32),
        wm2.astype(dd), bm2.astype(f32), wm3.astype(dd), bm3.astype(f32),
        wm4p.astype(dd), bm4p.astype(f32),
        scale_flat, shift_flat,
    ]

    operands = [x1, x23] + consts
    grid = (B_pad // block_b,)

    def batch_spec(feat):
        return pl.BlockSpec((block_b, feat), lambda i: (i, 0))

    def const_spec(arr):
        # Full-array block, constant index -> fetched once, VMEM-resident.
        return pl.BlockSpec(arr.shape, lambda i: (0,) * arr.ndim)

    in_specs = ([batch_spec(D1), batch_spec(D23)]
                + [const_spec(c) for c in consts])
    out_specs = pl.BlockSpec((block_b, out_pad), lambda i: (i, 0))

    # Advisory cost estimate (helps XLA overlap this small, compute-bound kernel).
    dot_kn = (D23 * wn1.shape[1] + D1 * wn1.shape[1]
              + wn2.shape[0] * wn2.shape[1] + wn3.shape[0] * wn3.shape[1]
              + wa1.shape[0] * wa1.shape[1] + wa2.shape[0] * wa2.shape[1]
              + wa3.shape[0] * wa3.shape[1]
              + wx1p.shape[0] * wx1p.shape[1] + wx2.shape[0] * wx2.shape[1]
              + wx3.shape[0] * wx3.shape[1]
              + wm1.shape[0] * wm1.shape[1] + wm2.shape[0] * wm2.shape[1]
              + wm3.shape[0] * wm3.shape[1] + wm4p.shape[0] * wm4p.shape[1])
    bytes_accessed = (sum(int(x.size) * x.dtype.itemsize for x in operands)
                      + B_pad * out_pad * 4)
    cost = pl.CostEstimate(flops=int(2 * B_pad * dot_kn),
                           transcendentals=int(B_pad * out_pad),
                           bytes_accessed=int(bytes_accessed))

    out_flat = pl.pallas_call(
        parameter_ml_kernel,
        out_shape=jax.ShapeDtypeStruct((B_pad, out_pad), jnp.float32),
        grid=grid,
        in_specs=in_specs,
        out_specs=out_specs,
        compiler_params=pltpu.CompilerParams(dimension_semantics=("parallel",)),
        cost_estimate=cost,
    )(*operands)

    return out_flat[:B, :out_dim].reshape(B, n_groups, per_group)


# ---------------------------------------------------------------------------
# Parameter init + pure-JAX reference (for the correctness check).
# ---------------------------------------------------------------------------
def _init_linear(key, fan_in, fan_out):
    kw, kb = jax.random.split(key)
    bound = 1.0 / jnp.sqrt(jnp.float32(fan_in))
    w = jax.random.uniform(kw, (fan_in, fan_out), jnp.float32, -bound, bound)
    b = jax.random.uniform(kb, (1, fan_out), jnp.float32, -bound, bound)
    return w, b


def _init_fnn(key, dims):
    keys = jax.random.split(key, len(dims) - 1)
    return [_init_linear(keys[i], dims[i], dims[i + 1]) for i in range(len(dims) - 1)]


def _fnn_apply(x, layers, output_activation=None):
    n = len(layers)
    for i, (w, b) in enumerate(layers):
        x = x @ w + b
        if i < n - 1:
            x = jnp.where(x >= 0, x, NEG_SLOPE * x)
    if output_activation is not None:
        x = output_activation(x)
    return x


def _reference_forward(input1, input2, input3, params):
    noise = _fnn_apply(jnp.concatenate([input3, input2, input1], axis=1),
                       params["noise"])
    a = input1 * noise
    att = _fnn_apply(a, params["attention"])
    aux = _fnn_apply(input2, params["aux"])
    b = jnp.concatenate([a * att, aux], axis=1)
    y = _fnn_apply(b, params["main"], output_activation=jax.nn.sigmoid)
    y = y.reshape(a.shape[0], 4, 5)
    scale = jnp.array([1.0, 11.0, 11.0, -6.0], jnp.float32)[None, :, None]
    shift = jnp.array([0.0, 12.0, 12.0, -6.0], jnp.float32)[None, :, None]
    return y * scale - shift


if __name__ == "__main__":
    # Small shapes consistent with the module:
    #   input1 must have 52 features (a = input1 * noise_layer(...) with 52 outputs).
    B, D1, D2, D3 = 8, 52, 64, 64

    key = jax.random.PRNGKey(0)
    k_in1, k_in2, k_in3, k_noise, k_att, k_aux, k_main = jax.random.split(key, 7)

    input1 = jax.random.normal(k_in1, (B, D1), jnp.float32)
    input2 = jax.random.normal(k_in2, (B, D2), jnp.float32)
    input3 = jax.random.normal(k_in3, (B, D3), jnp.float32)

    params = {
        "noise":     _init_fnn(k_noise, [D3 + D2 + D1, 64, 64, 52]),
        "attention": _init_fnn(k_att,   [52, 64, 64, 52]),
        "aux":       _init_fnn(k_aux,   [D2, 64, 64, 64]),
        "main":      _init_fnn(k_main,  [52 + 64, 192, 384, 384, 20]),
    }

    ref = _reference_forward(input1, input2, input3, params)

    # Exact-arithmetic check (f32 dots).
    out_f32 = parameter_ml_forward(input1, input2, input3, params,
                                   dot_dtype=jnp.float32)
    out_f32 = jax.block_until_ready(out_f32)
    assert out_f32.shape == (B, 4, 5)
    assert jnp.allclose(out_f32, ref, atol=1e-4, rtol=1e-4), "f32 mismatch vs reference"

    # Default fast path: bf16 matmul operands, f32 accumulation / elementwise.
    out_bf16 = parameter_ml_forward(input1, input2, input3, params)
    out_bf16 = jax.block_until_ready(out_bf16)
    assert out_bf16.shape == (B, 4, 5)
    assert jnp.allclose(out_bf16, ref, atol=1e-1, rtol=1e-1), "bf16 mismatch vs reference"

    print("KERNEL_OK")
</pallas_src>

<mosaic_0001>
module attributes {stable_mosaic.version = 11 : i64} {
  func.func @parameter_ml_kernel(%arg0: i32, %arg1: memref<8x52xf32, #tpu.memory_space<vmem>>, %arg2: memref<8x128xf32, #tpu.memory_space<vmem>>, %arg3: memref<128x64xf32, #tpu.memory_space<vmem>>, %arg4: memref<52x64xf32, #tpu.memory_space<vmem>>, %arg5: memref<1x64xf32, #tpu.memory_space<vmem>>, %arg6: memref<64x64xf32, #tpu.memory_space<vmem>>, %arg7: memref<1x64xf32, #tpu.memory_space<vmem>>, %arg8: memref<64x52xf32, #tpu.memory_space<vmem>>, %arg9: memref<1x52xf32, #tpu.memory_space<vmem>>, %arg10: memref<52x64xf32, #tpu.memory_space<vmem>>, %arg11: memref<1x64xf32, #tpu.memory_space<vmem>>, %arg12: memref<64x64xf32, #tpu.memory_space<vmem>>, %arg13: memref<1x64xf32, #tpu.memory_space<vmem>>, %arg14: memref<64x52xf32, #tpu.memory_space<vmem>>, %arg15: memref<1x52xf32, #tpu.memory_space<vmem>>, %arg16: memref<128x64xf32, #tpu.memory_space<vmem>>, %arg17: memref<1x64xf32, #tpu.memory_space<vmem>>, %arg18: memref<64x64xf32, #tpu.memory_space<vmem>>, %arg19: memref<1x64xf32, #tpu.memory_space<vmem>>, %arg20: memref<64x64xf32, #tpu.memory_space<vmem>>, %arg21: memref<1x64xf32, #tpu.memory_space<vmem>>, %arg22: memref<52x192xf32, #tpu.memory_space<vmem>>, %arg23: memref<64x192xf32, #tpu.memory_space<vmem>>, %arg24: memref<1x192xf32, #tpu.memory_space<vmem>>, %arg25: memref<192x384xf32, #tpu.memory_space<vmem>>, %arg26: memref<1x384xf32, #tpu.memory_space<vmem>>, %arg27: memref<384x384xf32, #tpu.memory_space<vmem>>, %arg28: memref<1x384xf32, #tpu.memory_space<vmem>>, %arg29: memref<384x128xf32, #tpu.memory_space<vmem>>, %arg30: memref<1x128xf32, #tpu.memory_space<vmem>>, %arg31: memref<1x128xf32, #tpu.memory_space<vmem>>, %arg32: memref<1x128xf32, #tpu.memory_space<vmem>>, %arg33: memref<8x128xf32, #tpu.memory_space<vmem>>) attributes {dimension_semantics = [#tpu.dimension_semantics<parallel>], iteration_bounds = array<i64: 1>, scalar_prefetch = 0 : i64, scratch_operands = 0 : i64, tpu.core_type = #tpu.core_type<tc>, window_params = [{transform_indices = @transform_0, window_bounds = array<i64: 8, 52>}, {transform_indices = @transform_1, window_bounds = array<i64: 8, 128>}, {pipeline_mode = #tpu.pipeline_mode<synchronous>, transform_indices = @transform_2, window_bounds = array<i64: 128, 64>}, {pipeline_mode = #tpu.pipeline_mode<synchronous>, transform_indices = @transform_3, window_bounds = array<i64: 52, 64>}, {pipeline_mode = #tpu.pipeline_mode<synchronous>, transform_indices = @transform_4, window_bounds = array<i64: 1, 64>}, {pipeline_mode = #tpu.pipeline_mode<synchronous>, transform_indices = @transform_5, window_bounds = array<i64: 64, 64>}, {pipeline_mode = #tpu.pipeline_mode<synchronous>, transform_indices = @transform_6, window_bounds = array<i64: 1, 64>}, {pipeline_mode = #tpu.pipeline_mode<synchronous>, transform_indices = @transform_7, window_bounds = array<i64: 64, 52>}, {pipeline_mode = #tpu.pipeline_mode<synchronous>, transform_indices = @transform_8, window_bounds = array<i64: 1, 52>}, {pipeline_mode = #tpu.pipeline_mode<synchronous>, transform_indices = @transform_9, window_bounds = array<i64: 52, 64>}, {pipeline_mode = #tpu.pipeline_mode<synchronous>, transform_indices = @transform_10, window_bounds = array<i64: 1, 64>}, {pipeline_mode = #tpu.pipeline_mode<synchronous>, transform_indices = @transform_11, window_bounds = array<i64: 64, 64>}, {pipeline_mode = #tpu.pipeline_mode<synchronous>, transform_indices = @transform_12, window_bounds = array<i64: 1, 64>}, {pipeline_mode = #tpu.pipeline_mode<synchronous>, transform_indices = @transform_13, window_bounds = array<i64: 64, 52>}, {pipeline_mode = #tpu.pipeline_mode<synchronous>, transform_indices = @transform_14, window_bounds = array<i64: 1, 52>}, {pipeline_mode = #tpu.pipeline_mode<synchronous>, transform_indices = @transform_15, window_bounds = array<i64: 128, 64>}, {pipeline_mode = #tpu.pipeline_mode<synchronous>, transform_indices = @transform_16, window_bounds = array<i64: 1, 64>}, {pipeline_mode = #tpu.pipeline_mode<synchronous>, transform_indices = @transform_17, window_bounds = array<i64: 64, 64>}, {pipeline_mode = #tpu.pipeline_mode<synchronous>, transform_indices = @transform_18, window_bounds = array<i64: 1, 64>}, {pipeline_mode = #tpu.pipeline_mode<synchronous>, transform_indices = @transform_19, window_bounds = array<i64: 64, 64>}, {pipeline_mode = #tpu.pipeline_mode<synchronous>, transform_indices = @transform_20, window_bounds = array<i64: 1, 64>}, {pipeline_mode = #tpu.pipeline_mode<synchronous>, transform_indices = @transform_21, window_bounds = array<i64: 52, 192>}, {pipeline_mode = #tpu.pipeline_mode<synchronous>, transform_indices = @transform_22, window_bounds = array<i64: 64, 192>}, {pipeline_mode = #tpu.pipeline_mode<synchronous>, transform_indices = @transform_23, window_bounds = array<i64: 1, 192>}, {pipeline_mode = #tpu.pipeline_mode<synchronous>, transform_indices = @transform_24, window_bounds = array<i64: 192, 384>}, {pipeline_mode = #tpu.pipeline_mode<synchronous>, transform_indices = @transform_25, window_bounds = array<i64: 1, 384>}, {pipeline_mode = #tpu.pipeline_mode<synchronous>, transform_indices = @transform_26, window_bounds = array<i64: 384, 384>}, {pipeline_mode = #tpu.pipeline_mode<synchronous>, transform_indices = @transform_27, window_bounds = array<i64: 1, 384>}, {pipeline_mode = #tpu.pipeline_mode<synchronous>, transform_indices = @transform_28, window_bounds = array<i64: 384, 128>}, {pipeline_mode = #tpu.pipeline_mode<synchronous>, transform_indices = @transform_29, window_bounds = array<i64: 1, 128>}, {pipeline_mode = #tpu.pipeline_mode<synchronous>, transform_indices = @transform_30, window_bounds = array<i64: 1, 128>}, {pipeline_mode = #tpu.pipeline_mode<synchronous>, transform_indices = @transform_31, window_bounds = array<i64: 1, 128>}, {transform_indices = @transform_32, window_bounds = array<i64: 8, 128>}]} {
    %c0 = arith.constant 0 : index
    %c0_0 = arith.constant 0 : index
    %0 = vector.load %arg1[%c0, %c0_0] : memref<8x52xf32, #tpu.memory_space<vmem>>, vector<8x52xf32>
    %c0_1 = arith.constant 0 : index
    %c0_2 = arith.constant 0 : index
    %1 = vector.load %arg2[%c0_1, %c0_2] : memref<8x128xf32, #tpu.memory_space<vmem>>, vector<8x128xf32>
    %c0_3 = arith.constant 0 : index
    %c0_4 = arith.constant 0 : index
    %2 = vector.load %arg3[%c0_3, %c0_4] : memref<128x64xf32, #tpu.memory_space<vmem>>, vector<128x64xf32>
    %cst = arith.constant dense<0.000000e+00> : vector<8x64xf32>
    %3 = tpu.matmul %1, %2, %cst {dimension_numbers = #tpu.dot_dimension_numbers<[1], [0], [0], [1], [0, 0, 1, 1], [], []>} : vector<8x128xf32>, vector<128x64xf32>, vector<8x64xf32> -> vector<8x64xf32>
    %c0_5 = arith.constant 0 : index
    %c0_6 = arith.constant 0 : index
    %4 = vector.load %arg4[%c0_5, %c0_6] : memref<52x64xf32, #tpu.memory_space<vmem>>, vector<52x64xf32>
    %cst_7 = arith.constant dense<0.000000e+00> : vector<8x64xf32>
    %5 = tpu.matmul %0, %4, %cst_7 {dimension_numbers = #tpu.dot_dimension_numbers<[1], [0], [0], [1], [0, 0, 1, 1], [], []>} : vector<8x52xf32>, vector<52x64xf32>, vector<8x64xf32> -> vector<8x64xf32>
    %6 = arith.addf %3, %5 : vector<8x64xf32>
    %c0_8 = arith.constant 0 : index
    %c0_9 = arith.constant 0 : index
    %7 = vector.load %arg5[%c0_8, %c0_9] : memref<1x64xf32, #tpu.memory_space<vmem>>, vector<1x64xf32>
    %8 = vector.broadcast %7 : vector<1x64xf32> to vector<8x64xf32>
    %9 = arith.addf %6, %8 : vector<8x64xf32>
    %cst_10 = arith.constant 0.00999999977 : f32
    %10 = vector.broadcast %cst_10 : f32 to vector<8x64xf32>
    %11 = arith.mulf %10, %9 : vector<8x64xf32>
    %12 = arith.maximumf %9, %11 : vector<8x64xf32>
    %c0_11 = arith.constant 0 : index
    %c0_12 = arith.constant 0 : index
    %13 = vector.load %arg6[%c0_11, %c0_12] : memref<64x64xf32, #tpu.memory_space<vmem>>, vector<64x64xf32>
    %cst_13 = arith.constant dense<0.000000e+00> : vector<8x64xf32>
    %14 = tpu.matmul %12, %13, %cst_13 {dimension_numbers = #tpu.dot_dimension_numbers<[1], [0], [0], [1], [0, 0, 1, 1], [], []>} : vector<8x64xf32>, vector<64x64xf32>, vector<8x64xf32> -> vector<8x64xf32>
    %c0_14 = arith.constant 0 : index
    %c0_15 = arith.constant 0 : index
    %15 = vector.load %arg7[%c0_14, %c0_15] : memref<1x64xf32, #tpu.memory_space<vmem>>, vector<1x64xf32>
    %16 = vector.broadcast %15 : vector<1x64xf32> to vector<8x64xf32>
    %17 = arith.addf %14, %16 : vector<8x64xf32>
    %cst_16 = arith.constant 0.00999999977 : f32
    %18 = vector.broadcast %cst_16 : f32 to vector<8x64xf32>
    %19 = arith.mulf %18, %17 : vector<8x64xf32>
    %20 = arith.maximumf %17, %19 : vector<8x64xf32>
    %c0_17 = arith.constant 0 : index
    %c0_18 = arith.constant 0 : index
    %21 = vector.load %arg8[%c0_17, %c0_18] : memref<64x52xf32, #tpu.memory_space<vmem>>, vector<64x52xf32>
    %cst_19 = arith.constant dense<0.000000e+00> : vector<8x52xf32>
    %22 = tpu.matmul %20, %21, %cst_19 {dimension_numbers = #tpu.dot_dimension_numbers<[1], [0], [0], [1], [0, 0, 1, 1], [], []>} : vector<8x64xf32>, vector<64x52xf32>, vector<8x52xf32> -> vector<8x52xf32>
    %c0_20 = arith.constant 0 : index
    %c0_21 = arith.constant 0 : index
    %23 = vector.load %arg9[%c0_20, %c0_21] : memref<1x52xf32, #tpu.memory_space<vmem>>, vector<1x52xf32>
    %24 = vector.broadcast %23 : vector<1x52xf32> to vector<8x52xf32>
    %25 = arith.addf %22, %24 : vector<8x52xf32>
    %26 = arith.mulf %0, %25 : vector<8x52xf32>
    %c0_22 = arith.constant 0 : index
    %c0_23 = arith.constant 0 : index
    %27 = vector.load %arg10[%c0_22, %c0_23] : memref<52x64xf32, #tpu.memory_space<vmem>>, vector<52x64xf32>
    %cst_24 = arith.constant dense<0.000000e+00> : vector<8x64xf32>
    %28 = tpu.matmul %26, %27, %cst_24 {dimension_numbers = #tpu.dot_dimension_numbers<[1], [0], [0], [1], [0, 0, 1, 1], [], []>} : vector<8x52xf32>, vector<52x64xf32>, vector<8x64xf32> -> vector<8x64xf32>
    %c0_25 = arith.constant 0 : index
    %c0_26 = arith.constant 0 : index
    %29 = vector.load %arg11[%c0_25, %c0_26] : memref<1x64xf32, #tpu.memory_space<vmem>>, vector<1x64xf32>
    %30 = vector.broadcast %29 : vector<1x64xf32> to vector<8x64xf32>
    %31 = arith.addf %28, %30 : vector<8x64xf32>
    %cst_27 = arith.constant 0.00999999977 : f32
    %32 = vector.broadcast %cst_27 : f32 to vector<8x64xf32>
    %33 = arith.mulf %32, %31 : vector<8x64xf32>
    %34 = arith.maximumf %31, %33 : vector<8x64xf32>
    %c0_28 = arith.constant 0 : index
    %c0_29 = arith.constant 0 : index
    %35 = vector.load %arg12[%c0_28, %c0_29] : memref<64x64xf32, #tpu.memory_space<vmem>>, vector<64x64xf32>
    %cst_30 = arith.constant dense<0.000000e+00> : vector<8x64xf32>
    %36 = tpu.matmul %34, %35, %cst_30 {dimension_numbers = #tpu.dot_dimension_numbers<[1], [0], [0], [1], [0, 0, 1, 1], [], []>} : vector<8x64xf32>, vector<64x64xf32>, vector<8x64xf32> -> vector<8x64xf32>
    %c0_31 = arith.constant 0 : index
    %c0_32 = arith.constant 0 : index
    %37 = vector.load %arg13[%c0_31, %c0_32] : memref<1x64xf32, #tpu.memory_space<vmem>>, vector<1x64xf32>
    %38 = vector.broadcast %37 : vector<1x64xf32> to vector<8x64xf32>
    %39 = arith.addf %36, %38 : vector<8x64xf32>
    %cst_33 = arith.constant 0.00999999977 : f32
    %40 = vector.broadcast %cst_33 : f32 to vector<8x64xf32>
    %41 = arith.mulf %40, %39 : vector<8x64xf32>
    %42 = arith.maximumf %39, %41 : vector<8x64xf32>
    %c0_34 = arith.constant 0 : index
    %c0_35 = arith.constant 0 : index
    %43 = vector.load %arg14[%c0_34, %c0_35] : memref<64x52xf32, #tpu.memory_space<vmem>>, vector<64x52xf32>
    %cst_36 = arith.constant dense<0.000000e+00> : vector<8x52xf32>
    %44 = tpu.matmul %42, %43, %cst_36 {dimension_numbers = #tpu.dot_dimension_numbers<[1], [0], [0], [1], [0, 0, 1, 1], [], []>} : vector<8x64xf32>, vector<64x52xf32>, vector<8x52xf32> -> vector<8x52xf32>
    %c0_37 = arith.constant 0 : index
    %c0_38 = arith.constant 0 : index
    %45 = vector.load %arg15[%c0_37, %c0_38] : memref<1x52xf32, #tpu.memory_space<vmem>>, vector<1x52xf32>
    %46 = vector.broadcast %45 : vector<1x52xf32> to vector<8x52xf32>
    %47 = arith.addf %44, %46 : vector<8x52xf32>
    %48 = arith.mulf %26, %47 : vector<8x52xf32>
    %c0_39 = arith.constant 0 : index
    %c0_40 = arith.constant 0 : index
    %49 = vector.load %arg16[%c0_39, %c0_40] : memref<128x64xf32, #tpu.memory_space<vmem>>, vector<128x64xf32>
    %cst_41 = arith.constant dense<0.000000e+00> : vector<8x64xf32>
    %50 = tpu.matmul %1, %49, %cst_41 {dimension_numbers = #tpu.dot_dimension_numbers<[1], [0], [0], [1], [0, 0, 1, 1], [], []>} : vector<8x128xf32>, vector<128x64xf32>, vector<8x64xf32> -> vector<8x64xf32>
    %c0_42 = arith.constant 0 : index
    %c0_43 = arith.constant 0 : index
    %51 = vector.load %arg17[%c0_42, %c0_43] : memref<1x64xf32, #tpu.memory_space<vmem>>, vector<1x64xf32>
    %52 = vector.broadcast %51 : vector<1x64xf32> to vector<8x64xf32>
    %53 = arith.addf %50, %52 : vector<8x64xf32>
    %cst_44 = arith.constant 0.00999999977 : f32
    %54 = vector.broadcast %cst_44 : f32 to vector<8x64xf32>
    %55 = arith.mulf %54, %53 : vector<8x64xf32>
    %56 = arith.maximumf %53, %55 : vector<8x64xf32>
    %c0_45 = arith.constant 0 : index
    %c0_46 = arith.constant 0 : index
    %57 = vector.load %arg18[%c0_45, %c0_46] : memref<64x64xf32, #tpu.memory_space<vmem>>, vector<64x64xf32>
    %cst_47 = arith.constant dense<0.000000e+00> : vector<8x64xf32>
    %58 = tpu.matmul %56, %57, %cst_47 {dimension_numbers = #tpu.dot_dimension_numbers<[1], [0], [0], [1], [0, 0, 1, 1], [], []>} : vector<8x64xf32>, vector<64x64xf32>, vector<8x64xf32> -> vector<8x64xf32>
    %c0_48 = arith.constant 0 : index
    %c0_49 = arith.constant 0 : index
    %59 = vector.load %arg19[%c0_48, %c0_49] : memref<1x64xf32, #tpu.memory_space<vmem>>, vector<1x64xf32>
    %60 = vector.broadcast %59 : vector<1x64xf32> to vector<8x64xf32>
    %61 = arith.addf %58, %60 : vector<8x64xf32>
    %cst_50 = arith.constant 0.00999999977 : f32
    %62 = vector.broadcast %cst_50 : f32 to vector<8x64xf32>
    %63 = arith.mulf %62, %61 : vector<8x64xf32>
    %64 = arith.maximumf %61, %63 : vector<8x64xf32>
    %c0_51 = arith.constant 0 : index
    %c0_52 = arith.constant 0 : index
    %65 = vector.load %arg20[%c0_51, %c0_52] : memref<64x64xf32, #tpu.memory_space<vmem>>, vector<64x64xf32>
    %cst_53 = arith.constant dense<0.000000e+00> : vector<8x64xf32>
    %66 = tpu.matmul %64, %65, %cst_53 {dimension_numbers = #tpu.dot_dimension_numbers<[1], [0], [0], [1], [0, 0, 1, 1], [], []>} : vector<8x64xf32>, vector<64x64xf32>, vector<8x64xf32> -> vector<8x64xf32>
    %c0_54 = arith.constant 0 : index
    %c0_55 = arith.constant 0 : index
    %67 = vector.load %arg21[%c0_54, %c0_55] : memref<1x64xf32, #tpu.memory_space<vmem>>, vector<1x64xf32>
    %68 = vector.broadcast %67 : vector<1x64xf32> to vector<8x64xf32>
    %69 = arith.addf %66, %68 : vector<8x64xf32>
    %c0_56 = arith.constant 0 : index
    %c0_57 = arith.constant 0 : index
    %70 = vector.load %arg22[%c0_56, %c0_57] : memref<52x192xf32, #tpu.memory_space<vmem>>, vector<52x192xf32>
    %cst_58 = arith.constant dense<0.000000e+00> : vector<8x192xf32>
    %71 = tpu.matmul %48, %70, %cst_58 {dimension_numbers = #tpu.dot_dimension_numbers<[1], [0], [0], [1], [0, 0, 1, 1], [], []>} : vector<8x52xf32>, vector<52x192xf32>, vector<8x192xf32> -> vector<8x192xf32>
    %c0_59 = arith.constant 0 : index
    %c0_60 = arith.constant 0 : index
    %72 = vector.load %arg23[%c0_59, %c0_60] : memref<64x192xf32, #tpu.memory_space<vmem>>, vector<64x192xf32>
    %cst_61 = arith.constant dense<0.000000e+00> : vector<8x192xf32>
    %73 = tpu.matmul %69, %72, %cst_61 {dimension_numbers = #tpu.dot_dimension_numbers<[1], [0], [0], [1], [0, 0, 1, 1], [], []>} : vector<8x64xf32>, vector<64x192xf32>, vector<8x192xf32> -> vector<8x192xf32>
    %74 = arith.addf %71, %73 : vector<8x192xf32>
    %c0_62 = arith.constant 0 : index
    %c0_63 = arith.constant 0 : index
    %75 = vector.load %arg24[%c0_62, %c0_63] : memref<1x192xf32, #tpu.memory_space<vmem>>, vector<1x192xf32>
    %76 = vector.broadcast %75 : vector<1x192xf32> to vector<8x192xf32>
    %77 = arith.addf %74, %76 : vector<8x192xf32>
    %cst_64 = arith.constant 0.00999999977 : f32
    %78 = vector.broadcast %cst_64 : f32 to vector<8x192xf32>
    %79 = arith.mulf %78, %77 : vector<8x192xf32>
    %80 = arith.maximumf %77, %79 : vector<8x192xf32>
    %c0_65 = arith.constant 0 : index
    %c0_66 = arith.constant 0 : index
    %81 = vector.load %arg25[%c0_65, %c0_66] : memref<192x384xf32, #tpu.memory_space<vmem>>, vector<192x384xf32>
    %cst_67 = arith.constant dense<0.000000e+00> : vector<8x384xf32>
    %82 = tpu.matmul %80, %81, %cst_67 {dimension_numbers = #tpu.dot_dimension_numbers<[1], [0], [0], [1], [0, 0, 1, 1], [], []>} : vector<8x192xf32>, vector<192x384xf32>, vector<8x384xf32> -> vector<8x384xf32>
    %c0_68 = arith.constant 0 : index
    %c0_69 = arith.constant 0 : index
    %83 = vector.load %arg26[%c0_68, %c0_69] : memref<1x384xf32, #tpu.memory_space<vmem>>, vector<1x384xf32>
    %84 = vector.broadcast %83 : vector<1x384xf32> to vector<8x384xf32>
    %85 = arith.addf %82, %84 : vector<8x384xf32>
    %cst_70 = arith.constant 0.00999999977 : f32
    %86 = vector.broadcast %cst_70 : f32 to vector<8x384xf32>
    %87 = arith.mulf %86, %85 : vector<8x384xf32>
    %88 = arith.maximumf %85, %87 : vector<8x384xf32>
    %c0_71 = arith.constant 0 : index
    %c0_72 = arith.constant 0 : index
    %89 = vector.load %arg27[%c0_71, %c0_72] : memref<384x384xf32, #tpu.memory_space<vmem>>, vector<384x384xf32>
    %cst_73 = arith.constant dense<0.000000e+00> : vector<8x384xf32>
    %90 = tpu.matmul %88, %89, %cst_73 {dimension_numbers = #tpu.dot_dimension_numbers<[1], [0], [0], [1], [0, 0, 1, 1], [], []>} : vector<8x384xf32>, vector<384x384xf32>, vector<8x384xf32> -> vector<8x384xf32>
    %c0_74 = arith.constant 0 : index
    %c0_75 = arith.constant 0 : index
    %91 = vector.load %arg28[%c0_74, %c0_75] : memref<1x384xf32, #tpu.memory_space<vmem>>, vector<1x384xf32>
    %92 = vector.broadcast %91 : vector<1x384xf32> to vector<8x384xf32>
    %93 = arith.addf %90, %92 : vector<8x384xf32>
    %cst_76 = arith.constant 0.00999999977 : f32
    %94 = vector.broadcast %cst_76 : f32 to vector<8x384xf32>
    %95 = arith.mulf %94, %93 : vector<8x384xf32>
    %96 = arith.maximumf %93, %95 : vector<8x384xf32>
    %c0_77 = arith.constant 0 : index
    %c0_78 = arith.constant 0 : index
    %97 = vector.load %arg29[%c0_77, %c0_78] : memref<384x128xf32, #tpu.memory_space<vmem>>, vector<384x128xf32>
    %cst_79 = arith.constant dense<0.000000e+00> : vector<8x128xf32>
    %98 = tpu.matmul %96, %97, %cst_79 {dimension_numbers = #tpu.dot_dimension_numbers<[1], [0], [0], [1], [0, 0, 1, 1], [], []>} : vector<8x384xf32>, vector<384x128xf32>, vector<8x128xf32> -> vector<8x128xf32>
    %c0_80 = arith.constant 0 : index
    %c0_81 = arith.constant 0 : index
    %99 = vector.load %arg30[%c0_80, %c0_81] : memref<1x128xf32, #tpu.memory_space<vmem>>, vector<1x128xf32>
    %100 = vector.broadcast %99 : vector<1x128xf32> to vector<8x128xf32>
    %101 = arith.addf %98, %100 : vector<8x128xf32>
    %102 = arith.negf %101 : vector<8x128xf32>
    %103 = math.exp %102 : vector<8x128xf32>
    %cst_82 = arith.constant 1.000000e+00 : f32
    %104 = vector.broadcast %cst_82 : f32 to vector<8x128xf32>
    %105 = arith.addf %104, %103 : vector<8x128xf32>
    %106 = arith.divf %104, %105 : vector<8x128xf32>
    %c0_83 = arith.constant 0 : index
    %c0_84 = arith.constant 0 : index
    %107 = vector.load %arg31[%c0_83, %c0_84] : memref<1x128xf32, #tpu.memory_space<vmem>>, vector<1x128xf32>
    %108 = vector.broadcast %107 : vector<1x128xf32> to vector<8x128xf32>
    %109 = arith.mulf %106, %108 : vector<8x128xf32>
    %c0_85 = arith.constant 0 : index
    %c0_86 = arith.constant 0 : index
    %110 = vector.load %arg32[%c0_85, %c0_86] : memref<1x128xf32, #tpu.memory_space<vmem>>, vector<1x128xf32>
    %111 = vector.broadcast %110 : vector<1x128xf32> to vector<8x128xf32>
    %112 = arith.subf %109, %111 : vector<8x128xf32>
    %c0_87 = arith.constant 0 : index
    %c0_88 = arith.constant 0 : index
    %113 = vector.load %arg33[%c0_87, %c0_88] : memref<8x128xf32, #tpu.memory_space<vmem>>, vector<8x128xf32>
    tpu.vector_store %arg33[%c0_87, %c0_88], %112 {strides = array<i32>} : memref<8x128xf32, #tpu.memory_space<vmem>>, vector<8x128xf32>,
    return
  }
  func.func @transform_0(%arg0: i32) -> (i32, i32) {
    %c0_i32 = arith.constant 0 : i32
    %c0_i32_0 = arith.constant 0 : i32
    return %arg0, %c0_i32 : i32, i32
  }
  func.func @transform_1(%arg0: i32) -> (i32, i32) {
    %c0_i32 = arith.constant 0 : i32
    %c0_i32_0 = arith.constant 0 : i32
    return %arg0, %c0_i32 : i32, i32
  }
  func.func @transform_2(%arg0: i32) -> (i32, i32) {
    %c0_i32 = arith.constant 0 : i32
    %c0_i32_0 = arith.constant 0 : i32
    %c0_i32_1 = arith.constant 0 : i32
    return %c0_i32, %c0_i32_0 : i32, i32
  }
  func.func @transform_3(%arg0: i32) -> (i32, i32) {
    %c0_i32 = arith.constant 0 : i32
    %c0_i32_0 = arith.constant 0 : i32
    %c0_i32_1 = arith.constant 0 : i32
    return %c0_i32, %c0_i32_0 : i32, i32
  }
  func.func @transform_4(%arg0: i32) -> (i32, i32) {
    %c0_i32 = arith.constant 0 : i32
    %c0_i32_0 = arith.constant 0 : i32
    %c0_i32_1 = arith.constant 0 : i32
    return %c0_i32, %c0_i32_0 : i32, i32
  }
  func.func @transform_5(%arg0: i32) -> (i32, i32) {
    %c0_i32 = arith.constant 0 : i32
    %c0_i32_0 = arith.constant 0 : i32
    %c0_i32_1 = arith.constant 0 : i32
    return %c0_i32, %c0_i32_0 : i32, i32
  }
  func.func @transform_6(%arg0: i32) -> (i32, i32) {
    %c0_i32 = arith.constant 0 : i32
    %c0_i32_0 = arith.constant 0 : i32
    %c0_i32_1 = arith.constant 0 : i32
    return %c0_i32, %c0_i32_0 : i32, i32
  }
  func.func @transform_7(%arg0: i32) -> (i32, i32) {
    %c0_i32 = arith.constant 0 : i32
    %c0_i32_0 = arith.constant 0 : i32
    %c0_i32_1 = arith.constant 0 : i32
    return %c0_i32, %c0_i32_0 : i32, i32
  }
  func.func @transform_8(%arg0: i32) -> (i32, i32) {
    %c0_i32 = arith.constant 0 : i32
    %c0_i32_0 = arith.constant 0 : i32
    %c0_i32_1 = arith.constant 0 : i32
    return %c0_i32, %c0_i32_0 : i32, i32
  }
  func.func @transform_9(%arg0: i32) -> (i32, i32) {
    %c0_i32 = arith.constant 0 : i32
    %c0_i32_0 = arith.constant 0 : i32
    %c0_i32_1 = arith.constant 0 : i32
    return %c0_i32, %c0_i32_0 : i32, i32
  }
  func.func @transform_10(%arg0: i32) -> (i32, i32) {
    %c0_i32 = arith.constant 0 : i32
    %c0_i32_0 = arith.constant 0 : i32
    %c0_i32_1 = arith.constant 0 : i32
    return %c0_i32, %c0_i32_0 : i32, i32
  }
  func.func @transform_11(%arg0: i32) -> (i32, i32) {
    %c0_i32 = arith.constant 0 : i32
    %c0_i32_0 = arith.constant 0 : i32
    %c0_i32_1 = arith.constant 0 : i32
    return %c0_i32, %c0_i32_0 : i32, i32
  }
  func.func @transform_12(%arg0: i32) -> (i32, i32) {
    %c0_i32 = arith.constant 0 : i32
    %c0_i32_0 = arith.constant 0 : i32
    %c0_i32_1 = arith.constant 0 : i32
    return %c0_i32, %c0_i32_0 : i32, i32
  }
  func.func @transform_13(%arg0: i32) -> (i32, i32) {
    %c0_i32 = arith.constant 0 : i32
    %c0_i32_0 = arith.constant 0 : i32
    %c0_i32_1 = arith.constant 0 : i32
    return %c0_i32, %c0_i32_0 : i32, i32
  }
  func.func @transform_14(%arg0: i32) -> (i32, i32) {
    %c0_i32 = arith.constant 0 : i32
    %c0_i32_0 = arith.constant 0 : i32
    %c0_i32_1 = arith.constant 0 : i32
    return %c0_i32, %c0_i32_0 : i32, i32
  }
  func.func @transform_15(%arg0: i32) -> (i32, i32) {
    %c0_i32 = arith.constant 0 : i32
    %c0_i32_0 = arith.constant 0 : i32
    %c0_i32_1 = arith.constant 0 : i32
    return %c0_i32, %c0_i32_0 : i32, i32
  }
  func.func @transform_16(%arg0: i32) -> (i32, i32) {
    %c0_i32 = arith.constant 0 : i32
    %c0_i32_0 = arith.constant 0 : i32
    %c0_i32_1 = arith.constant 0 : i32
    return %c0_i32, %c0_i32_0 : i32, i32
  }
  func.func @transform_17(%arg0: i32) -> (i32, i32) {
    %c0_i32 = arith.constant 0 : i32
    %c0_i32_0 = arith.constant 0 : i32
    %c0_i32_1 = arith.constant 0 : i32
    return %c0_i32, %c0_i32_0 : i32, i32
  }
  func.func @transform_18(%arg0: i32) -> (i32, i32) {
    %c0_i32 = arith.constant 0 : i32
    %c0_i32_0 = arith.constant 0 : i32
    %c0_i32_1 = arith.constant 0 : i32
    return %c0_i32, %c0_i32_0 : i32, i32
  }
  func.func @transform_19(%arg0: i32) -> (i32, i32) {
    %c0_i32 = arith.constant 0 : i32
    %c0_i32_0 = arith.constant 0 : i32
    %c0_i32_1 = arith.constant 0 : i32
    return %c0_i32, %c0_i32_0 : i32, i32
  }
  func.func @transform_20(%arg0: i32) -> (i32, i32) {
    %c0_i32 = arith.constant 0 : i32
    %c0_i32_0 = arith.constant 0 : i32
    %c0_i32_1 = arith.constant 0 : i32
    return %c0_i32, %c0_i32_0 : i32, i32
  }
  func.func @transform_21(%arg0: i32) -> (i32, i32) {
    %c0_i32 = arith.constant 0 : i32
    %c0_i32_0 = arith.constant 0 : i32
    %c0_i32_1 = arith.constant 0 : i32
    return %c0_i32, %c0_i32_0 : i32, i32
  }
  func.func @transform_22(%arg0: i32) -> (i32, i32) {
    %c0_i32 = arith.constant 0 : i32
    %c0_i32_0 = arith.constant 0 : i32
    %c0_i32_1 = arith.constant 0 : i32
    return %c0_i32, %c0_i32_0 : i32, i32
  }
  func.func @transform_23(%arg0: i32) -> (i32, i32) {
    %c0_i32 = arith.constant 0 : i32
    %c0_i32_0 = arith.constant 0 : i32
    %c0_i32_1 = arith.constant 0 : i32
    return %c0_i32, %c0_i32_0 : i32, i32
  }
  func.func @transform_24(%arg0: i32) -> (i32, i32) {
    %c0_i32 = arith.constant 0 : i32
    %c0_i32_0 = arith.constant 0 : i32
    %c0_i32_1 = arith.constant 0 : i32
    return %c0_i32, %c0_i32_0 : i32, i32
  }
  func.func @transform_25(%arg0: i32) -> (i32, i32) {
    %c0_i32 = arith.constant 0 : i32
    %c0_i32_0 = arith.constant 0 : i32
    %c0_i32_1 = arith.constant 0 : i32
    return %c0_i32, %c0_i32_0 : i32, i32
  }
  func.func @transform_26(%arg0: i32) -> (i32, i32) {
    %c0_i32 = arith.constant 0 : i32
    %c0_i32_0 = arith.constant 0 : i32
    %c0_i32_1 = arith.constant 0 : i32
    return %c0_i32, %c0_i32_0 : i32, i32
  }
  func.func @transform_27(%arg0: i32) -> (i32, i32) {
    %c0_i32 = arith.constant 0 : i32
    %c0_i32_0 = arith.constant 0 : i32
    %c0_i32_1 = arith.constant 0 : i32
    return %c0_i32, %c0_i32_0 : i32, i32
  }
  func.func @transform_28(%arg0: i32) -> (i32, i32) {
    %c0_i32 = arith.constant 0 : i32
    %c0_i32_0 = arith.constant 0 : i32
    %c0_i32_1 = arith.constant 0 : i32
    return %c0_i32, %c0_i32_0 : i32, i32
  }
  func.func @transform_29(%arg0: i32) -> (i32, i32) {
    %c0_i32 = arith.constant 0 : i32
    %c0_i32_0 = arith.constant 0 : i32
    %c0_i32_1 = arith.constant 0 : i32
    return %c0_i32, %c0_i32_0 : i32, i32
  }
  func.func @transform_30(%arg0: i32) -> (i32, i32) {
    %c0_i32 = arith.constant 0 : i32
    %c0_i32_0 = arith.constant 0 : i32
    %c0_i32_1 = arith.constant 0 : i32
    return %c0_i32, %c0_i32_0 : i32, i32
  }
  func.func @transform_31(%arg0: i32) -> (i32, i32) {
    %c0_i32 = arith.constant 0 : i32
    %c0_i32_0 = arith.constant 0 : i32
    %c0_i32_1 = arith.constant 0 : i32
    return %c0_i32, %c0_i32_0 : i32, i32
  }
  func.func @transform_32(%arg0: i32) -> (i32, i32) {
    %c0_i32 = arith.constant 0 : i32
    %c0_i32_0 = arith.constant 0 : i32
    return %arg0, %c0_i32 : i32, i32
  }
}

</mosaic_0001>

<llo_original>
// kernel: tpu_custom_call.1
$region0: #{tpu_custom_call.1}
  #allocation0 [shape = 'u32[]', space=smem, size = 0x4, offset = 0x4, fixed_abs, tag = 'smem constant byte address 0x4 - core index']
  #allocation1 [shape = 'u32[144,128]{1,0:T(1,128)}', space=vmem, size = 0x12000, scoped, tag = 'internal scratch']
  %s0 = inlined_call_operand.smem [shape: u32[33], index: -1, kind: input, shape index: {}]
  %s1 = sld [smem:[%s0]]
  %s2 = scalar_lea.smem %s0, 1
  %s3 = sld [smem:[%s2]]
  %s4 = scalar_lea.smem %s0, 2
  %s5 = sld [smem:[%s4]]
  %s6 = scalar_lea.smem %s0, 3
  %s7 = sld [smem:[%s6]]
  %s8 = scalar_lea.smem %s0, 4
  %s9 = sld [smem:[%s8]]
  %s10 = scalar_lea.smem %s0, 5
  %s11 = sld [smem:[%s10]]
  %s12 = scalar_lea.smem %s0, 6
  %s13 = sld [smem:[%s12]]
  %s14 = scalar_lea.smem %s0, 7
  %s15 = sld [smem:[%s14]]
  %s16 = scalar_lea.smem %s0, 8
  %s17 = sld [smem:[%s16]]
  %s18 = scalar_lea.smem %s0, 9
  %s19 = sld [smem:[%s18]]
  %s20 = scalar_lea.smem %s0, 10
  %s21 = sld [smem:[%s20]]
  %s22 = scalar_lea.smem %s0, 11
  %s23 = sld [smem:[%s22]]
  %s24 = scalar_lea.smem %s0, 12
  %s25 = sld [smem:[%s24]]
  %s26 = scalar_lea.smem %s0, 13
  %s27 = sld [smem:[%s26]]
  %s28 = scalar_lea.smem %s0, 14
  %s29 = sld [smem:[%s28]]
  %s30 = scalar_lea.smem %s0, 15
  %s31 = sld [smem:[%s30]]
  %s32 = scalar_lea.smem %s0, 16
  %s33 = sld [smem:[%s32]]
  %s34 = scalar_lea.smem %s0, 17
  %s35 = sld [smem:[%s34]]
  %s36 = scalar_lea.smem %s0, 18
  %s37 = sld [smem:[%s36]]
  %s38 = scalar_lea.smem %s0, 19
  %s39 = sld [smem:[%s38]]
  %s40 = scalar_lea.smem %s0, 20
  %s41 = sld [smem:[%s40]]
  %s42 = scalar_lea.smem %s0, 21
  %s43 = sld [smem:[%s42]]
  %s44 = scalar_lea.smem %s0, 22
  %s45 = sld [smem:[%s44]]
  %s46 = scalar_lea.smem %s0, 23
  %s47 = sld [smem:[%s46]]
  %s48 = scalar_lea.smem %s0, 24
  %s49 = sld [smem:[%s48]]
  %s50 = scalar_lea.smem %s0, 25
  %s51 = sld [smem:[%s50]]
  %s52 = scalar_lea.smem %s0, 26
  %s53 = sld [smem:[%s52]]
  %s54 = scalar_lea.smem %s0, 27
  %s55 = sld [smem:[%s54]]
  %s56 = scalar_lea.smem %s0, 28
  %s57 = sld [smem:[%s56]]
  %s58 = scalar_lea.smem %s0, 29
  %s59 = sld [smem:[%s58]]
  %s60 = scalar_lea.smem %s0, 30
  %s61 = sld [smem:[%s60]]
  %s62 = scalar_lea.smem %s0, 31
  %s63 = sld [smem:[%s62]]
  %s64 = scalar_lea.smem %s0, 32
  %s65 = sld [smem:[%s64]]
  %s66 = sld [smem:[#allocation0]]
  $region218: #{tpu_custom_call.1} parent=0
    _
  %s68 = ssub.s32 1, %s66
  %s69 = scalar_select 0, %s68, %s66
  $region1: #{tpu_custom_call.1} parent=0
    #allocation2 [shape = 'u8[4096]{0}', space=vmem, size = 0x1000, scoped, tag = 'input window, operand 1, single buffered']
    #allocation3 [shape = 's32[1]{0}', space=sflag, size = 0x4, scoped, tag = 'scoped memory for tpu_custom_call.1']
    #allocation4 [shape = 's32[1]{0}', space=sflag, size = 0x4, scoped, tag = 'scoped memory for tpu_custom_call.1']
    #allocation5 [shape = 'u8[28672]{0}', space=vmem, size = 0x7000, scoped, tag = 'input window, operand 3, single buffered']
    #allocation6 [shape = 's32[1]{0}', space=sflag, size = 0x4, scoped, tag = 'scoped memory for tpu_custom_call.1']
    #allocation7 [shape = 'u8[512]{0}', space=vmem, size = 0x400, scoped, tag = 'input window, operand 4, single buffered']
    #allocation8 [shape = 'u8[32768]{0}', space=vmem, size = 0x8000, scoped, tag = 'input window, operand 5, single buffered']
    #allocation9 [shape = 's32[1]{0}', space=sflag, size = 0x4, scoped, tag = 'scoped memory for tpu_custom_call.1']
    #allocation10 [shape = 'u8[512]{0}', space=vmem, size = 0x400, scoped, tag = 'input window, operand 6, single buffered']
    #allocation11 [shape = 'u8[512]{0}', space=vmem, size = 0x400, scoped, tag = 'input window, operand 8, single buffered']
    #allocation12 [shape = 's32[1]{0}', space=sflag, size = 0x4, scoped, tag = 'scoped memory for tpu_custom_call.1']
    #allocation13 [shape = 'u8[28672]{0}', space=vmem, size = 0x7000, scoped, tag = 'input window, operand 9, single buffered']
    #allocation14 [shape = 'u8[512]{0}', space=vmem, size = 0x400, scoped, tag = 'input window, operand 10, single buffered']
    #allocation15 [shape = 's32[1]{0}', space=sflag, size = 0x4, scoped, tag = 'scoped memory for tpu_custom_call.1']
    #allocation16 [shape = 'u8[32768]{0}', space=vmem, size = 0x8000, scoped, tag = 'input window, operand 11, single buffered']
    #allocation17 [shape = 'u8[512]{0}', space=vmem, size = 0x400, scoped, tag = 'input window, operand 12, single buffered']
    #allocation18 [shape = 's32[1]{0}', space=sflag, size = 0x4, scoped, tag = 'scoped memory for tpu_custom_call.1']
    #allocation19 [shape = 'u8[512]{0}', space=vmem, size = 0x400, scoped, tag = 'input window, operand 14, single buffered']
    #allocation20 [shape = 'u8[512]{0}', space=vmem, size = 0x400, scoped, tag = 'input window, operand 16, single buffered']
    #allocation21 [shape = 's32[1]{0}', space=sflag, size = 0x4, scoped, tag = 'scoped memory for tpu_custom_call.1']
    #allocation22 [shape = 'u8[32768]{0}', space=vmem, size = 0x8000, scoped, tag = 'input window, operand 17, single buffered']
    #allocation23 [shape = 'u8[512]{0}', space=vmem, size = 0x400, scoped, tag = 'input window, operand 18, single buffered']
    #allocation24 [shape = 's32[1]{0}', space=sflag, size = 0x4, scoped, tag = 'scoped memory for tpu_custom_call.1']
    #allocation25 [shape = 'u8[32768]{0}', space=vmem, size = 0x8000, scoped, tag = 'input window, operand 19, single buffered']
    #allocation26 [shape = 'u8[512]{0}', space=vmem, size = 0x400, scoped, tag = 'input window, operand 20, single buffered']
    #allocation27 [shape = 's32[1]{0}', space=sflag, size = 0x4, scoped, tag = 'scoped memory for tpu_custom_call.1']
    #allocation28 [shape = 'u8[57344]{0}', space=vmem, size = 0xe000, scoped, tag = 'input window, operand 21, single buffered']
    #allocation29 [shape = 'u8[1536]{0}', space=vmem, size = 0x800, scoped, tag = 'input window, operand 25, single buffered']
    #allocation30 [shape = 's32[1]{0}', space=sflag, size = 0x4, scoped, tag = 'scoped memory for tpu_custom_call.1']
    #allocation31 [shape = 'u8[589824]{0}', space=vmem, size = 0x90000, scoped, tag = 'input window, operand 26, single buffered']
    #allocation32 [shape = 'u8[196608]{0}', space=vmem, size = 0x30000, scoped, tag = 'input window, operand 28, single buffered']
    #allocation33 [shape = 's32[1]{0}', space=sflag, size = 0x4, scoped, tag = 'scoped memory for tpu_custom_call.1']
    #allocation34 [shape = 'u8[4096]{0}', space=vmem, size = 0x1000, scoped, tag = 'output window, operand 0, single buffered']
    %70 = vsyncpa [#allocation3], 0
    %71 = vsyncpa [#allocation6], 0
    %72 = vsyncpa [#allocation9], 0
    %73 = vsyncpa [#allocation12], 0
    %74 = vsyncpa [#allocation15], 0
    %75 = vsyncpa [#allocation18], 0
    %76 = vsyncpa [#allocation21], 0
    %77 = vsyncpa [#allocation24], 0
    %78 = vsyncpa [#allocation27], 0
    %79 = vsyncpa [#allocation30], 0
    %80 = vsyncpa [#allocation33], 0
    %81 = vsyncpa [#allocation4], 0
    // Predicated region
    $region2: #{tpu_custom_call.1} parent=1 // pred_check
      _
    $region3: #{tpu_custom_call.1} parent=1 // pred_check_branch
      %83 = sbr.rel (0) target = $region5
    $region4: #{tpu_custom_call.1} parent=1 // pred_region
      _
    $region5: #{tpu_custom_call.1} parent=1 // pred_fallthru
      _
    // Predicated region
    $region6: #{tpu_custom_call.1} parent=1 // pred_check
      _
    $region7: #{tpu_custom_call.1} parent=1 // pred_check_branch
      %85 = sbr.rel (0) target = $region9
    $region8: #{tpu_custom_call.1} parent=1 // pred_region
      %s87 = ssub.s32 128, 128
      %88 = vsyncadd [#allocation3], %s87
      %s90 = sshll.u32 [#allocation2], 4
      %s91 = int_to_ptr.vmem [resolvable:$true] %s90
      %93 = dma.hbm_to_vmem [thread:$0]  %s3, 128, %s91, [#allocation3]
    $region9: #{tpu_custom_call.1} parent=1 // pred_fallthru
      _
    // Predicated region
    $region10: #{tpu_custom_call.1} parent=1 // pred_check
      _
    $region11: #{tpu_custom_call.1} parent=1 // pred_check_branch
      %95 = sbr.rel (0) target = $region13
    $region12: #{tpu_custom_call.1} parent=1 // pred_region
      _
    $region13: #{tpu_custom_call.1} parent=1 // pred_fallthru
      _
    // Predicated region
    $region14: #{tpu_custom_call.1} parent=1 // pred_check
      _
    $region15: #{tpu_custom_call.1} parent=1 // pred_check_branch
      %97 = sbr.rel (0) target = $region17
    $region16: #{tpu_custom_call.1} parent=1 // pred_region
      %s99 = ssub.s32 896, 896
      %100 = vsyncadd [#allocation6], %s99
      %s101 = sshll.u32 [#allocation5], 4
      %s102 = int_to_ptr.vmem [resolvable:$true] %s101
      %107 = dma.hbm_to_vmem [thread:$0]  %s7, 896, %s102, [#allocation6], 128, 128, 8
    $region17: #{tpu_custom_call.1} parent=1 // pred_fallthru
      _
    // Predicated region
    $region18: #{tpu_custom_call.1} parent=1 // pred_check
      _
    $region19: #{tpu_custom_call.1} parent=1 // pred_check_branch
      %109 = sbr.rel (0) target = $region21
    $region20: #{tpu_custom_call.1} parent=1 // pred_region
      %s111 = ssub.s32 16, 16
      %112 = vsyncadd [#allocation6], %s111
      %s114 = sshll.u32 [#allocation7], 4
      %s115 = int_to_ptr.vmem [resolvable:$true] %s114
      %117 = dma.hbm_to_vmem [thread:$0]  %s9, 16, %s115, [#allocation6]
    $region21: #{tpu_custom_call.1} parent=1 // pred_fallthru
      _
    // Predicated region
    $region22: #{tpu_custom_call.1} parent=1 // pred_check
      _
    $region23: #{tpu_custom_call.1} parent=1 // pred_check_branch
      %119 = sbr.rel (0) target = $region25
    $region24: #{tpu_custom_call.1} parent=1 // pred_region
      %s121 = ssub.s32 1024, 1024
      %122 = vsyncadd [#allocation9], %s121
      %s123 = sshll.u32 [#allocation8], 4
      %s124 = int_to_ptr.vmem [resolvable:$true] %s123
      %129 = dma.hbm_to_vmem [thread:$0]  %s11, 1024, %s124, [#allocation9], 128, 128, 8
    $region25: #{tpu_custom_call.1} parent=1 // pred_fallthru
      _
    // Predicated region
    $region26: #{tpu_custom_call.1} parent=1 // pred_check
      _
    $region27: #{tpu_custom_call.1} parent=1 // pred_check_branch
      %131 = sbr.rel (0) target = $region29
    $region28: #{tpu_custom_call.1} parent=1 // pred_region
      %s133 = ssub.s32 16, 16
      %134 = vsyncadd [#allocation9], %s133
      %s136 = sshll.u32 [#allocation10], 4
      %s137 = int_to_ptr.vmem [resolvable:$true] %s136
      %139 = dma.hbm_to_vmem [thread:$0]  %s13, 16, %s137, [#allocation9]
    $region29: #{tpu_custom_call.1} parent=1 // pred_fallthru
      _
    // Predicated region
    $region30: #{tpu_custom_call.1} parent=1 // pred_check
      _
    $region31: #{tpu_custom_call.1} parent=1 // pred_check_branch
      %141 = sbr.rel (0) target = $region33
    $region32: #{tpu_custom_call.1} parent=1 // pred_region
      _
    $region33: #{tpu_custom_call.1} parent=1 // pred_fallthru
      _
    // Predicated region
    $region34: #{tpu_custom_call.1} parent=1 // pred_check
      _
    $region35: #{tpu_custom_call.1} parent=1 // pred_check_branch
      %143 = sbr.rel (0) target = $region37
    $region36: #{tpu_custom_call.1} parent=1 // pred_region
      %s145 = ssub.s32 16, 16
      %146 = vsyncadd [#allocation12], %s145
      %s148 = sshll.u32 [#allocation11], 4
      %s149 = int_to_ptr.vmem [resolvable:$true] %s148
      %151 = dma.hbm_to_vmem [thread:$0]  %s17, 16, %s149, [#allocation12]
    $region37: #{tpu_custom_call.1} parent=1 // pred_fallthru
      _
    // Predicated region
    $region38: #{tpu_custom_call.1} parent=1 // pred_check
      _
    $region39: #{tpu_custom_call.1} parent=1 // pred_check_branch
      %153 = sbr.rel (0) target = $region41
    $region40: #{tpu_custom_call.1} parent=1 // pred_region
      %s155 = ssub.s32 896, 896
      %156 = vsyncadd [#allocation12], %s155
      %s157 = sshll.u32 [#allocation13], 4
      %s158 = int_to_ptr.vmem [resolvable:$true] %s157
      %163 = dma.hbm_to_vmem [thread:$0]  %s19, 896, %s158, [#allocation12], 128, 128, 8
    $region41: #{tpu_custom_call.1} parent=1 // pred_fallthru
      _
    // Predicated region
    $region42: #{tpu_custom_call.1} parent=1 // pred_check
      _
    $region43: #{tpu_custom_call.1} parent=1 // pred_check_branch
      %165 = sbr.rel (0) target = $region45
    $region44: #{tpu_custom_call.1} parent=1 // pred_region
      %s167 = ssub.s32 16, 16
      %168 = vsyncadd [#allocation15], %s167
      %s170 = sshll.u32 [#allocation14], 4
      %s171 = int_to_ptr.vmem [resolvable:$true] %s170
      %173 = dma.hbm_to_vmem [thread:$0]  %s21, 16, %s171, [#allocation15]
    $region45: #{tpu_custom_call.1} parent=1 // pred_fallthru
      _
    // Predicated region
    $region46: #{tpu_custom_call.1} parent=1 // pred_check
      _
    $region47: #{tpu_custom_call.1} parent=1 // pred_check_branch
      %175 = sbr.rel (0) target = $region49
    $region48: #{tpu_custom_call.1} parent=1 // pred_region
      %s177 = ssub.s32 1024, 1024
      %178 = vsyncadd [#allocation15], %s177
      %s179 = sshll.u32 [#allocation16], 4
      %s180 = int_to_ptr.vmem [resolvable:$true] %s179
      %185 = dma.hbm_to_vmem [thread:$0]  %s23, 1024, %s180, [#allocation15], 128, 128, 8
    $region49: #{tpu_custom_call.1} parent=1 // pred_fallthru
      _
    // Predicated region
    $region50: #{tpu_custom_call.1} parent=1 // pred_check
      _
    $region51: #{tpu_custom_call.1} parent=1 // pred_check_branch
      %187 = sbr.rel (0) target = $region53
    $region52: #{tpu_custom_call.1} parent=1 // pred_region
      %s189 = ssub.s32 16, 16
      %190 = vsyncadd [#allocation18], %s189
      %s192 = sshll.u32 [#allocation17], 4
      %s193 = int_to_ptr.vmem [resolvable:$true] %s192
      %195 = dma.hbm_to_vmem [thread:$0]  %s25, 16, %s193, [#allocation18]
    $region53: #{tpu_custom_call.1} parent=1 // pred_fallthru
      _
    // Predicated region
    $region54: #{tpu_custom_call.1} parent=1 // pred_check
      _
    $region55: #{tpu_custom_call.1} parent=1 // pred_check_branch
      %197 = sbr.rel (0) target = $region57
    $region56: #{tpu_custom_call.1} parent=1 // pred_region
      _
    $region57: #{tpu_custom_call.1} parent=1 // pred_fallthru
      _
    // Predicated region
    $region58: #{tpu_custom_call.1} parent=1 // pred_check
      _
    $region59: #{tpu_custom_call.1} parent=1 // pred_check_branch
      %199 = sbr.rel (0) target = $region61
    $region60: #{tpu_custom_call.1} parent=1 // pred_region
      %s201 = ssub.s32 16, 16
      %202 = vsyncadd [#allocation18], %s201
      %s204 = sshll.u32 [#allocation19], 4
      %s205 = int_to_ptr.vmem [resolvable:$true] %s204
      %207 = dma.hbm_to_vmem [thread:$0]  %s29, 16, %s205, [#allocation18]
    $region61: #{tpu_custom_call.1} parent=1 // pred_fallthru
      _
    // Predicated region
    $region62: #{tpu_custom_call.1} parent=1 // pred_check
      _
    $region63: #{tpu_custom_call.1} parent=1 // pred_check_branch
      %209 = sbr.rel (0) target = $region65
    $region64: #{tpu_custom_call.1} parent=1 // pred_region
      _
    $region65: #{tpu_custom_call.1} parent=1 // pred_fallthru
      _
    // Predicated region
    $region66: #{tpu_custom_call.1} parent=1 // pred_check
      _
    $region67: #{tpu_custom_call.1} parent=1 // pred_check_branch
      %211 = sbr.rel (0) target = $region69
    $region68: #{tpu_custom_call.1} parent=1 // pred_region
      %s213 = ssub.s32 16, 16
      %214 = vsyncadd [#allocation21], %s213
      %s216 = sshll.u32 [#allocation20], 4
      %s217 = int_to_ptr.vmem [resolvable:$true] %s216
      %219 = dma.hbm_to_vmem [thread:$0]  %s33, 16, %s217, [#allocation21]
    $region69: #{tpu_custom_call.1} parent=1 // pred_fallthru
      _
    // Predicated region
    $region70: #{tpu_custom_call.1} parent=1 // pred_check
      _
    $region71: #{tpu_custom_call.1} parent=1 // pred_check_branch
      %221 = sbr.rel (0) target = $region73
    $region72: #{tpu_custom_call.1} parent=1 // pred_region
      %s223 = ssub.s32 1024, 1024
      %224 = vsyncadd [#allocation21], %s223
      %s225 = sshll.u32 [#allocation22], 4
      %s226 = int_to_ptr.vmem [resolvable:$true] %s225
      %231 = dma.hbm_to_vmem [thread:$0]  %s35, 1024, %s226, [#allocation21], 128, 128, 8
    $region73: #{tpu_custom_call.1} parent=1 // pred_fallthru
      _
    // Predicated region
    $region74: #{tpu_custom_call.1} parent=1 // pred_check
      _
    $region75: #{tpu_custom_call.1} parent=1 // pred_check_branch
      %233 = sbr.rel (0) target = $region77
    $region76: #{tpu_custom_call.1} parent=1 // pred_region
      %s235 = ssub.s32 16, 16
      %236 = vsyncadd [#allocation24], %s235
      %s238 = sshll.u32 [#allocation23], 4
      %s239 = int_to_ptr.vmem [resolvable:$true] %s238
      %241 = dma.hbm_to_vmem [thread:$0]  %s37, 16, %s239, [#allocation24]
    $region77: #{tpu_custom_call.1} parent=1 // pred_fallthru
      _
    // Predicated region
    $region78: #{tpu_custom_call.1} parent=1 // pred_check
      _
    $region79: #{tpu_custom_call.1} parent=1 // pred_check_branch
      %243 = sbr.rel (0) target = $region81
    $region80: #{tpu_custom_call.1} parent=1 // pred_region
      %s245 = ssub.s32 1024, 1024
      %246 = vsyncadd [#allocation24], %s245
      %s247 = sshll.u32 [#allocation25], 4
      %s248 = int_to_ptr.vmem [resolvable:$true] %s247
      %253 = dma.hbm_to_vmem [thread:$0]  %s39, 1024, %s248, [#allocation24], 128, 128, 8
    $region81: #{tpu_custom_call.1} parent=1 // pred_fallthru
      _
    // Predicated region
    $region82: #{tpu_custom_call.1} parent=1 // pred_check
      _
    $region83: #{tpu_custom_call.1} parent=1 // pred_check_branch
      %255 = sbr.rel (0) target = $region85
    $region84: #{tpu_custom_call.1} parent=1 // pred_region
      %s257 = ssub.s32 16, 16
      %258 = vsyncadd [#allocation27], %s257
      %s260 = sshll.u32 [#allocation26], 4
      %s261 = int_to_ptr.vmem [resolvable:$true] %s260
      %263 = dma.hbm_to_vmem [thread:$0]  %s41, 16, %s261, [#allocation27]
    $region85: #{tpu_custom_call.1} parent=1 // pred_fallthru
      _
    // Predicated region
    $region86: #{tpu_custom_call.1} parent=1 // pred_check
      _
    $region87: #{tpu_custom_call.1} parent=1 // pred_check_branch
      %265 = sbr.rel (0) target = $region89
    $region88: #{tpu_custom_call.1} parent=1 // pred_region
      %s267 = ssub.s32 1792, 1792
      %268 = vsyncadd [#allocation27], %s267
      %s269 = sshll.u32 [#allocation28], 4
      %s270 = int_to_ptr.vmem [resolvable:$true] %s269
      %275 = dma.hbm_to_vmem [thread:$0]  %s43, 1792, %s270, [#allocation27], 256, 256, 16
    $region89: #{tpu_custom_call.1} parent=1 // pred_fallthru
      _
    // Predicated region
    $region90: #{tpu_custom_call.1} parent=1 // pred_check
      _
    $region91: #{tpu_custom_call.1} parent=1 // pred_check_branch
      %277 = sbr.rel (0) target = $region93
    $region92: #{tpu_custom_call.1} parent=1 // pred_region
      _
    $region93: #{tpu_custom_call.1} parent=1 // pred_fallthru
      _
    // Predicated region
    $region94: #{tpu_custom_call.1} parent=1 // pred_check
      _
    $region95: #{tpu_custom_call.1} parent=1 // pred_check_branch
      %279 = sbr.rel (0) target = $region97
    $region96: #{tpu_custom_call.1} parent=1 // pred_region
      _
    $region97: #{tpu_custom_call.1} parent=1 // pred_fallthru
      _
    // Predicated region
    $region98: #{tpu_custom_call.1} parent=1 // pred_check
      _
    $region99: #{tpu_custom_call.1} parent=1 // pred_check_branch
      %281 = sbr.rel (0) target = $region101
    $region100: #{tpu_custom_call.1} parent=1 // pred_region
      _
    $region101: #{tpu_custom_call.1} parent=1 // pred_fallthru
      _
    // Predicated region
    $region102: #{tpu_custom_call.1} parent=1 // pred_check
      _
    $region103: #{tpu_custom_call.1} parent=1 // pred_check_branch
      %283 = sbr.rel (0) target = $region105
    $region104: #{tpu_custom_call.1} parent=1 // pred_region
      %s285 = ssub.s32 48, 48
      %286 = vsyncadd [#allocation30], %s285
      %s288 = sshll.u32 [#allocation29], 4
      %s289 = int_to_ptr.vmem [resolvable:$true] %s288
      %291 = dma.hbm_to_vmem [thread:$0]  %s51, 48, %s289, [#allocation30]
    $region105: #{tpu_custom_call.1} parent=1 // pred_fallthru
      _
    // Predicated region
    $region106: #{tpu_custom_call.1} parent=1 // pred_check
      _
    $region107: #{tpu_custom_call.1} parent=1 // pred_check_branch
      %293 = sbr.rel (0) target = $region109
    $region108: #{tpu_custom_call.1} parent=1 // pred_region
      %s295 = ssub.s32 18432, 18432
      %296 = vsyncadd [#allocation30], %s295
      %s297 = sshll.u32 [#allocation31], 4
      %s298 = int_to_ptr.vmem [resolvable:$true] %s297
      %303 = dma.hbm_to_vmem [thread:$0]  %s53, 18432, %s298, [#allocation30], 384, 384, 24
    $region109: #{tpu_custom_call.1} parent=1 // pred_fallthru
      _
    // Predicated region
    $region110: #{tpu_custom_call.1} parent=1 // pred_check
      _
    $region111: #{tpu_custom_call.1} parent=1 // pred_check_branch
      %305 = sbr.rel (0) target = $region113
    $region112: #{tpu_custom_call.1} parent=1 // pred_region
      _
    $region113: #{tpu_custom_call.1} parent=1 // pred_fallthru
      _
    // Predicated region
    $region114: #{tpu_custom_call.1} parent=1 // pred_check
      _
    $region115: #{tpu_custom_call.1} parent=1 // pred_check_branch
      %307 = sbr.rel (0) target = $region117
    $region116: #{tpu_custom_call.1} parent=1 // pred_region
      %s309 = ssub.s32 6144, 6144
      %310 = vsyncadd [#allocation33], %s309
      %s311 = sshll.u32 [#allocation32], 4
      %s312 = int_to_ptr.vmem [resolvable:$true] %s311
      %317 = dma.hbm_to_vmem [thread:$0]  %s57, 6144, %s312, [#allocation33], 128, 128, 8
    $region117: #{tpu_custom_call.1} parent=1 // pred_fallthru
      _
    // Predicated region
    $region118: #{tpu_custom_call.1} parent=1 // pred_check
      _
    $region119: #{tpu_custom_call.1} parent=1 // pred_check_branch
      %319 = sbr.rel (0) target = $region121
    $region120: #{tpu_custom_call.1} parent=1 // pred_region
      _
    $region121: #{tpu_custom_call.1} parent=1 // pred_fallthru
      _
    // Predicated region
    $region122: #{tpu_custom_call.1} parent=1 // pred_check
      _
    $region123: #{tpu_custom_call.1} parent=1 // pred_check_branch
      %321 = sbr.rel (0) target = $region125
    $region124: #{tpu_custom_call.1} parent=1 // pred_region
      _
    $region125: #{tpu_custom_call.1} parent=1 // pred_fallthru
      _
    // Predicated region
    $region126: #{tpu_custom_call.1} parent=1 // pred_check
      _
    $region127: #{tpu_custom_call.1} parent=1 // pred_check_branch
      %323 = sbr.rel (0) target = $region129
    $region128: #{tpu_custom_call.1} parent=1 // pred_region
      _
    $region129: #{tpu_custom_call.1} parent=1 // pred_fallthru
      _
    // Predicated region
    $region130: #{tpu_custom_call.1} parent=1 // pred_check
      _
    $region131: #{tpu_custom_call.1} parent=1 // pred_check_branch
      %325 = sbr.rel (0) target = $region133
    $region132: #{tpu_custom_call.1} parent=1 // pred_region
      %326 = dma.done [#allocation3], 128
    $region133: #{tpu_custom_call.1} parent=1 // pred_fallthru
      _
    // Predicated region
    $region134: #{tpu_custom_call.1} parent=1 // pred_check
      _
    $region135: #{tpu_custom_call.1} parent=1 // pred_check_branch
      %328 = sbr.rel (0) target = $region137
    $region136: #{tpu_custom_call.1} parent=1 // pred_region
      %329 = dma.done [#allocation6], 896
    $region137: #{tpu_custom_call.1} parent=1 // pred_fallthru
      _
    // Predicated region
    $region138: #{tpu_custom_call.1} parent=1 // pred_check
      _
    $region139: #{tpu_custom_call.1} parent=1 // pred_check_branch
      %331 = sbr.rel (0) target = $region141
    $region140: #{tpu_custom_call.1} parent=1 // pred_region
      %332 = dma.done [#allocation6], 16
    $region141: #{tpu_custom_call.1} parent=1 // pred_fallthru
      _
    // Predicated region
    $region142: #{tpu_custom_call.1} parent=1 // pred_check
      _
    $region143: #{tpu_custom_call.1} parent=1 // pred_check_branch
      %334 = sbr.rel (0) target = $region145
    $region144: #{tpu_custom_call.1} parent=1 // pred_region
      %335 = dma.done [#allocation9], 1024
    $region145: #{tpu_custom_call.1} parent=1 // pred_fallthru
      _
    // Predicated region
    $region146: #{tpu_custom_call.1} parent=1 // pred_check
      _
    $region147: #{tpu_custom_call.1} parent=1 // pred_check_branch
      %337 = sbr.rel (0) target = $region149
    $region148: #{tpu_custom_call.1} parent=1 // pred_region
      %338 = dma.done [#allocation9], 16
    $region149: #{tpu_custom_call.1} parent=1 // pred_fallthru
      _
    // Predicated region
    $region150: #{tpu_custom_call.1} parent=1 // pred_check
      _
    $region151: #{tpu_custom_call.1} parent=1 // pred_check_branch
      %340 = sbr.rel (0) target = $region153
    $region152: #{tpu_custom_call.1} parent=1 // pred_region
      %341 = dma.done [#allocation12], 16
    $region153: #{tpu_custom_call.1} parent=1 // pred_fallthru
      _
    // Predicated region
    $region154: #{tpu_custom_call.1} parent=1 // pred_check
      _
    $region155: #{tpu_custom_call.1} parent=1 // pred_check_branch
      %343 = sbr.rel (0) target = $region157
    $region156: #{tpu_custom_call.1} parent=1 // pred_region
      %344 = dma.done [#allocation12], 896
    $region157: #{tpu_custom_call.1} parent=1 // pred_fallthru
      _
    // Predicated region
    $region158: #{tpu_custom_call.1} parent=1 // pred_check
      _
    $region159: #{tpu_custom_call.1} parent=1 // pred_check_branch
      %346 = sbr.rel (0) target = $region161
    $region160: #{tpu_custom_call.1} parent=1 // pred_region
      %347 = dma.done [#allocation15], 16
    $region161: #{tpu_custom_call.1} parent=1 // pred_fallthru
      _
    // Predicated region
    $region162: #{tpu_custom_call.1} parent=1 // pred_check
      _
    $region163: #{tpu_custom_call.1} parent=1 // pred_check_branch
      %349 = sbr.rel (0) target = $region165
    $region164: #{tpu_custom_call.1} parent=1 // pred_region
      %350 = dma.done [#allocation15], 1024
    $region165: #{tpu_custom_call.1} parent=1 // pred_fallthru
      _
    // Predicated region
    $region166: #{tpu_custom_call.1} parent=1 // pred_check
      _
    $region167: #{tpu_custom_call.1} parent=1 // pred_check_branch
      %352 = sbr.rel (0) target = $region169
    $region168: #{tpu_custom_call.1} parent=1 // pred_region
      %353 = dma.done [#allocation18], 16
    $region169: #{tpu_custom_call.1} parent=1 // pred_fallthru
      _
    // Predicated region
    $region170: #{tpu_custom_call.1} parent=1 // pred_check
      _
    $region171: #{tpu_custom_call.1} parent=1 // pred_check_branch
      %355 = sbr.rel (0) target = $region173
    $region172: #{tpu_custom_call.1} parent=1 // pred_region
      %356 = dma.done [#allocation18], 16
    $region173: #{tpu_custom_call.1} parent=1 // pred_fallthru
      _
    // Predicated region
    $region174: #{tpu_custom_call.1} parent=1 // pred_check
      _
    $region175: #{tpu_custom_call.1} parent=1 // pred_check_branch
      %358 = sbr.rel (0) target = $region177
    $region176: #{tpu_custom_call.1} parent=1 // pred_region
      %359 = dma.done [#allocation21], 16
    $region177: #{tpu_custom_call.1} parent=1 // pred_fallthru
      _
    // Predicated region
    $region178: #{tpu_custom_call.1} parent=1 // pred_check
      _
    $region179: #{tpu_custom_call.1} parent=1 // pred_check_branch
      %361 = sbr.rel (0) target = $region181
    $region180: #{tpu_custom_call.1} parent=1 // pred_region
      %362 = dma.done [#allocation21], 1024
    $region181: #{tpu_custom_call.1} parent=1 // pred_fallthru
      _
    // Predicated region
    $region182: #{tpu_custom_call.1} parent=1 // pred_check
      _
    $region183: #{tpu_custom_call.1} parent=1 // pred_check_branch
      %364 = sbr.rel (0) target = $region185
    $region184: #{tpu_custom_call.1} parent=1 // pred_region
      %365 = dma.done [#allocation24], 16
    $region185: #{tpu_custom_call.1} parent=1 // pred_fallthru
      _
    // Predicated region
    $region186: #{tpu_custom_call.1} parent=1 // pred_check
      _
    $region187: #{tpu_custom_call.1} parent=1 // pred_check_branch
      %367 = sbr.rel (0) target = $region189
    $region188: #{tpu_custom_call.1} parent=1 // pred_region
      %368 = dma.done [#allocation24], 1024
    $region189: #{tpu_custom_call.1} parent=1 // pred_fallthru
      _
    // Predicated region
    $region190: #{tpu_custom_call.1} parent=1 // pred_check
      _
    $region191: #{tpu_custom_call.1} parent=1 // pred_check_branch
      %370 = sbr.rel (0) target = $region193
    $region192: #{tpu_custom_call.1} parent=1 // pred_region
      %371 = dma.done [#allocation27], 16
    $region193: #{tpu_custom_call.1} parent=1 // pred_fallthru
      _
    // Predicated region
    $region194: #{tpu_custom_call.1} parent=1 // pred_check
      _
    $region195: #{tpu_custom_call.1} parent=1 // pred_check_branch
      %373 = sbr.rel (0) target = $region197
    $region196: #{tpu_custom_call.1} parent=1 // pred_region
      %374 = dma.done [#allocation27], 1792
    $region197: #{tpu_custom_call.1} parent=1 // pred_fallthru
      _
    // Predicated region
    $region198: #{tpu_custom_call.1} parent=1 // pred_check
      _
    $region199: #{tpu_custom_call.1} parent=1 // pred_check_branch
      %376 = sbr.rel (0) target = $region201
    $region200: #{tpu_custom_call.1} parent=1 // pred_region
      %377 = dma.done [#allocation30], 48
    $region201: #{tpu_custom_call.1} parent=1 // pred_fallthru
      _
    // Predicated region
    $region202: #{tpu_custom_call.1} parent=1 // pred_check
      _
    $region203: #{tpu_custom_call.1} parent=1 // pred_check_branch
      %379 = sbr.rel (0) target = $region205
    $region204: #{tpu_custom_call.1} parent=1 // pred_region
      %380 = dma.done [#allocation30], 18432
    $region205: #{tpu_custom_call.1} parent=1 // pred_fallthru
      _
    // Predicated region
    $region206: #{tpu_custom_call.1} parent=1 // pred_check
      _
    $region207: #{tpu_custom_call.1} parent=1 // pred_check_branch
      %382 = sbr.rel (0) target = $region209
    $region208: #{tpu_custom_call.1} parent=1 // pred_region
      %383 = dma.done [#allocation33], 6144
    $region209: #{tpu_custom_call.1} parent=1 // pred_fallthru
      _
    %v384 = vld [vmem:[%s1] sm:$0xff]
    %v385 = vld [vmem:[#allocation2] sm:$0xff]
    %v386 = vld [vmem:[%s5] sm:$0xff]
    %v387 = vld [vmem:[%s5 + $0x8] sm:$0xff]
    %v388 = vld [vmem:[%s5 + $0x10] sm:$0xff]
    %v389 = vld [vmem:[%s5 + $0x18] sm:$0xff]
    %v390 = vld [vmem:[%s5 + $0x20] sm:$0xff]
    %v391 = vld [vmem:[%s5 + $0x28] sm:$0xff]
    %v392 = vld [vmem:[%s5 + $0x30] sm:$0xff]
    %v393 = vld [vmem:[%s5 + $0x38] sm:$0xff]
    %v394 = vld [vmem:[%s5 + $0x40] sm:$0xff]
    %v395 = vld [vmem:[%s5 + $0x48] sm:$0xff]
    %v396 = vld [vmem:[%s5 + $0x50] sm:$0xff]
    %v397 = vld [vmem:[%s5 + $0x58] sm:$0xff]
    %v398 = vld [vmem:[%s5 + $0x60] sm:$0xff]
    %v399 = vld [vmem:[%s5 + $0x68] sm:$0xff]
    %v400 = vld [vmem:[%s5 + $0x70] sm:$0xff]
    %v401 = vld [vmem:[%s5 + $0x78] sm:$0xff]
    %v402 = vld [vmem:[#allocation5] sm:$0xff]
    %v403 = vld [vmem:[#allocation5 + $0x8] sm:$0xff]
    %v404 = vld [vmem:[#allocation5 + $0x10] sm:$0xff]
    %v405 = vld [vmem:[#allocation5 + $0x18] sm:$0xff]
    %v406 = vld [vmem:[#allocation5 + $0x20] sm:$0xff]
    %v407 = vld [vmem:[#allocation5 + $0x28] sm:$0xff]
    %v408 = vld [vmem:[#allocation5 + $0x30] sm:$0xf]
    %vm409 = vcmask 424960
    %v411 = vsel %vm409, %v384, 0
    %vm413 = vcmask 1043456
    %v415 = vsel %vm413, %v408, 0
    %417 = vmatprep.subr.mxu0 0.0
    %418 = vmatpush1.msra.mxu0 %v402
    %419 = vmatprep.subr.mxu0 0.0
    %420 = vmatpush1.msra.mxu0 %v403
    %421 = vmatprep.subr.mxu0 0.0
    %422 = vmatpush1.msra.mxu0 %v404
    %423 = vmatprep.subr.mxu0 0.0
    %424 = vmatpush1.msra.mxu0 %v405
    %425 = vmatprep.subr.mxu0 0.0
    %426 = vmatpush1.msra.mxu0 %v406
    %427 = vmatprep.subr.mxu0 0.0
    %428 = vmatpush1.msra.mxu0 %v407
    %429 = vmatprep.subr.mxu0 0.0
    %430 = vmatpush1.msra.mxu0 %v415
    %431 = vmatprep.subr.mxu0 0.0
    %432 = vmatpush1.msra.mxu0 0.0
    %433 = vmatprep.subr.mxu0 0.0
    %434 = vmatpush1.msra.mxu0 0.0
    %435 = vmatprep.subr.mxu0 0.0
    %436 = vmatpush1.msra.mxu0 0.0
    %437 = vmatprep.subr.mxu0 0.0
    %438 = vmatpush1.msra.mxu0 0.0
    %439 = vmatprep.subr.mxu0 0.0
    %440 = vmatpush1.msra.mxu0 0.0
    %441 = vmatprep.subr.mxu0 0.0
    %442 = vmatpush1.msra.mxu0 0.0
    %443 = vmatprep.subr.mxu0 0.0
    %444 = vmatpush1.msra.mxu0 0.0
    %445 = vmatprep.subr.mxu0 0.0
    %446 = vmatpush1.msra.mxu0 0.0
    %447 = vmatprep.subr.mxu0 0.0
    %448 = vmatpush1.msra.mxu0 0.0
    %449 = vmatprep.subr.mxu0 0.0
    %450 = vmatpush1.msra.mxu0 0.0
    %451 = vmatprep.subr.mxu0 0.0
    %452 = vmatpush1.msra.mxu0 0.0
    %453 = vmatprep.subr.mxu0 0.0
    %454 = vmatpush1.msra.mxu0 0.0
    %455 = vmatprep.subr.mxu0 0.0
    %456 = vmatpush1.msra.mxu0 0.0
    %457 = vmatprep.subr.mxu0 0.0
    %458 = vmatpush1.msra.mxu0 0.0
    %459 = vmatprep.subr.mxu0 0.0
    %460 = vmatpush1.msra.mxu0 0.0
    %461 = vmatprep.subr.mxu0 0.0
    %462 = vmatpush1.msra.mxu0 0.0
    %463 = vmatprep.subr.mxu0 0.0
    %464 = vmatpush1.msra.mxu0 0.0
    %465 = vmatprep.subr.mxu0 0.0
    %466 = vmatpush1.msra.mxu0 0.0
    %467 = vmatprep.subr.mxu0 0.0
    %468 = vmatpush1.msra.mxu0 0.0
    %469 = vmatprep.subr.mxu0 0.0
    %470 = vmatpush1.msra.mxu0 0.0
    %471 = vmatprep.subr.mxu0 0.0
    %472 = vmatpush1.msra.mxu0 0.0
    %473 = vmatprep.subr.mxu0 0.0
    %474 = vmatpush1.msra.mxu0 0.0
    %475 = vmatprep.subr.mxu0 0.0
    %476 = vmatpush1.msra.mxu0 0.0
    %477 = vmatprep.subr.mxu0 0.0
    %478 = vmatpush1.msra.mxu0 0.0
    %479 = vmatprep.subr.mxu0 0.0
    %480 = vmatpush1.msra.mxu0 0.0
    %481 = vmatprep.mubr.f32.mxu0 0.0
    %482 = vmatmul.mubr.f32.gmra.mrb[0].mxu0 %v411
    %v483 = vpop.f32.mrb[0].mxu0
    %v484 = vadd.f32 0.0, %v483
    %v485 = vpop.f32.mrb[0].mxu0
    %486 = vdwg.mxu0
    %487 = vmatprep.subr.mxu0 0.0
    %488 = vmatpush1.msra.mxu0 %v386
    %489 = vmatprep.subr.mxu0 0.0
    %490 = vmatpush1.msra.mxu0 %v387
    %491 = vmatprep.subr.mxu0 0.0
    %492 = vmatpush1.msra.mxu0 %v388
    %493 = vmatprep.subr.mxu0 0.0
    %494 = vmatpush1.msra.mxu0 %v389
    %495 = vmatprep.subr.mxu0 0.0
    %496 = vmatpush1.msra.mxu0 %v390
    %497 = vmatprep.subr.mxu0 0.0
    %498 = vmatpush1.msra.mxu0 %v391
    %499 = vmatprep.subr.mxu0 0.0
    %500 = vmatpush1.msra.mxu0 %v392
    %501 = vmatprep.subr.mxu0 0.0
    %502 = vmatpush1.msra.mxu0 %v393
    %503 = vmatprep.subr.mxu0 0.0
    %504 = vmatpush1.msra.mxu0 %v394
    %505 = vmatprep.subr.mxu0 0.0
    %506 = vmatpush1.msra.mxu0 %v395
    %507 = vmatprep.subr.mxu0 0.0
    %508 = vmatpush1.msra.mxu0 %v396
    %509 = vmatprep.subr.mxu0 0.0
    %510 = vmatpush1.msra.mxu0 %v397
    %511 = vmatprep.subr.mxu0 0.0
    %512 = vmatpush1.msra.mxu0 %v398
    %513 = vmatprep.subr.mxu0 0.0
    %514 = vmatpush1.msra.mxu0 %v399
    %515 = vmatprep.subr.mxu0 0.0
    %516 = vmatpush1.msra.mxu0 %v400
    %517 = vmatprep.subr.mxu0 0.0
    %518 = vmatpush1.msra.mxu0 %v401
    %519 = vmatprep.subr.mxu0 0.0
    %520 = vmatpush1.msra.mxu0 0.0
    %521 = vmatprep.subr.mxu0 0.0
    %522 = vmatpush1.msra.mxu0 0.0
    %523 = vmatprep.subr.mxu0 0.0
    %524 = vmatpush1.msra.mxu0 0.0
    %525 = vmatprep.subr.mxu0 0.0
    %526 = vmatpush1.msra.mxu0 0.0
    %527 = vmatprep.subr.mxu0 0.0
    %528 = vmatpush1.msra.mxu0 0.0
    %529 = vmatprep.subr.mxu0 0.0
    %530 = vmatpush1.msra.mxu0 0.0
    %531 = vmatprep.subr.mxu0 0.0
    %532 = vmatpush1.msra.mxu0 0.0
    %533 = vmatprep.subr.mxu0 0.0
    %534 = vmatpush1.msra.mxu0 0.0
    %535 = vmatprep.subr.mxu0 0.0
    %536 = vmatpush1.msra.mxu0 0.0
    %537 = vmatprep.subr.mxu0 0.0
    %538 = vmatpush1.msra.mxu0 0.0
    %539 = vmatprep.subr.mxu0 0.0
    %540 = vmatpush1.msra.mxu0 0.0
    %541 = vmatprep.subr.mxu0 0.0
    %542 = vmatpush1.msra.mxu0 0.0
    %543 = vmatprep.subr.mxu0 0.0
    %544 = vmatpush1.msra.mxu0 0.0
    %545 = vmatprep.subr.mxu0 0.0
    %546 = vmatpush1.msra.mxu0 0.0
    %547 = vmatprep.subr.mxu0 0.0
    %548 = vmatpush1.msra.mxu0 0.0
    %549 = vmatprep.subr.mxu0 0.0
    %550 = vmatpush1.msra.mxu0 0.0
    %551 = vmatprep.mubr.f32.mxu0 0.0
    %552 = vmatmul.mubr.f32.gmra.mrb[0].mxu0 %v385
    %v553 = vpop.f32.mrb[0].mxu0
    %v554 = vadd.f32 %v484, %v553
    %v555 = vpop.f32.mrb[0].mxu0
    %556 = vdwg.mxu0
    %v557 = vld [vmem:[#allocation7] sm:$0x1]
    %v559 = vlaneseq
    %v560 = vshrl.u32 %v559, 7
    %v561 = vsub.s32 0, %v560
    %v562 = vrot.slane %v557, %v561
    %v564 = vadd.f32 %v554, %v562
    %v565 = vmul.f32 %v564, 0.01
    %v566 = vmax.f32 %v564, %v565
    %v567 = vld [vmem:[#allocation8] sm:$0xff]
    %v568 = vld [vmem:[#allocation8 + $0x8] sm:$0xff]
    %v569 = vld [vmem:[#allocation8 + $0x10] sm:$0xff]
    %v570 = vld [vmem:[#allocation8 + $0x18] sm:$0xff]
    %v571 = vld [vmem:[#allocation8 + $0x20] sm:$0xff]
    %v572 = vld [vmem:[#allocation8 + $0x28] sm:$0xff]
    %v573 = vld [vmem:[#allocation8 + $0x30] sm:$0xff]
    %v574 = vld [vmem:[#allocation8 + $0x38] sm:$0xff]
    %v575 = vld [vmem:[#allocation10] sm:$0x1]
    %v577 = vlaneseq
    %v578 = vshrl.u32 %v577, 7
    %v579 = vsub.s32 0, %v578
    %v580 = vrot.slane %v575, %v579
    %vm582 = vcmask 523264
    %v584 = vsel %vm582, %v566, 0
    %586 = vmatprep.subr.mxu0 0.0
    %587 = vmatpush1.msra.mxu0 %v567
    %588 = vmatprep.subr.mxu0 0.0
    %589 = vmatpush1.msra.mxu0 %v568
    %590 = vmatprep.subr.mxu0 0.0
    %591 = vmatpush1.msra.mxu0 %v569
    %592 = vmatprep.subr.mxu0 0.0
    %593 = vmatpush1.msra.mxu0 %v570
    %594 = vmatprep.subr.mxu0 0.0
    %595 = vmatpush1.msra.mxu0 %v571
    %596 = vmatprep.subr.mxu0 0.0
    %597 = vmatpush1.msra.mxu0 %v572
    %598 = vmatprep.subr.mxu0 0.0
    %599 = vmatpush1.msra.mxu0 %v573
    %600 = vmatprep.subr.mxu0 0.0
    %601 = vmatpush1.msra.mxu0 %v574
    %602 = vmatprep.subr.mxu0 0.0
    %603 = vmatpush1.msra.mxu0 0.0
    %604 = vmatprep.subr.mxu0 0.0
    %605 = vmatpush1.msra.mxu0 0.0
    %606 = vmatprep.subr.mxu0 0.0
    %607 = vmatpush1.msra.mxu0 0.0
    %608 = vmatprep.subr.mxu0 0.0
    %609 = vmatpush1.msra.mxu0 0.0
    %610 = vmatprep.subr.mxu0 0.0
    %611 = vmatpush1.msra.mxu0 0.0
    %612 = vmatprep.subr.mxu0 0.0
    %613 = vmatpush1.msra.mxu0 0.0
    %614 = vmatprep.subr.mxu0 0.0
    %615 = vmatpush1.msra.mxu0 0.0
    %616 = vmatprep.subr.mxu0 0.0
    %617 = vmatpush1.msra.mxu0 0.0
    %618 = vmatprep.subr.mxu0 0.0
    %619 = vmatpush1.msra.mxu0 0.0
    %620 = vmatprep.subr.mxu0 0.0
    %621 = vmatpush1.msra.mxu0 0.0
    %622 = vmatprep.subr.mxu0 0.0
    %623 = vmatpush1.msra.mxu0 0.0
    %624 = vmatprep.subr.mxu0 0.0
    %625 = vmatpush1.msra.mxu0 0.0
    %626 = vmatprep.subr.mxu0 0.0
    %627 = vmatpush1.msra.mxu0 0.0
    %628 = vmatprep.subr.mxu0 0.0
    %629 = vmatpush1.msra.mxu0 0.0
    %630 = vmatprep.subr.mxu0 0.0
    %631 = vmatpush1.msra.mxu0 0.0
    %632 = vmatprep.subr.mxu0 0.0
    %633 = vmatpush1.msra.mxu0 0.0
    %634 = vmatprep.subr.mxu0 0.0
    %635 = vmatpush1.msra.mxu0 0.0
    %636 = vmatprep.subr.mxu0 0.0
    %637 = vmatpush1.msra.mxu0 0.0
    %638 = vmatprep.subr.mxu0 0.0
    %639 = vmatpush1.msra.mxu0 0.0
    %640 = vmatprep.subr.mxu0 0.0
    %641 = vmatpush1.msra.mxu0 0.0
    %642 = vmatprep.subr.mxu0 0.0
    %643 = vmatpush1.msra.mxu0 0.0
    %644 = vmatprep.subr.mxu0 0.0
    %645 = vmatpush1.msra.mxu0 0.0
    %646 = vmatprep.subr.mxu0 0.0
    %647 = vmatpush1.msra.mxu0 0.0
    %648 = vmatprep.subr.mxu0 0.0
    %649 = vmatpush1.msra.mxu0 0.0
    %650 = vmatprep.mubr.f32.mxu0 0.0
    %651 = vmatmul.mubr.f32.gmra.mrb[0].mxu0 %v584
    %v652 = vpop.f32.mrb[0].mxu0
    %v653 = vadd.f32 %v580, %v652
    %v654 = vpop.f32.mrb[0].mxu0
    %655 = vdwg.mxu0
    %v656 = vmul.f32 %v653, 0.01
    %v657 = vmax.f32 %v653, %v656
    %v658 = vld [vmem:[%s15] sm:$0xff]
    %v659 = vld [vmem:[%s15 + $0x8] sm:$0xff]
    %v660 = vld [vmem:[%s15 + $0x10] sm:$0xff]
    %v661 = vld [vmem:[%s15 + $0x18] sm:$0xff]
    %v662 = vld [vmem:[%s15 + $0x20] sm:$0xff]
    %v663 = vld [vmem:[%s15 + $0x28] sm:$0xff]
    %v664 = vld [vmem:[%s15 + $0x30] sm:$0xff]
    %v665 = vld [vmem:[%s15 + $0x38] sm:$0xff]
    %v666 = vld [vmem:[#allocation11] sm:$0x1]
    %v668 = vlaneseq
    %v669 = vshrl.u32 %v668, 7
    %v670 = vsub.s32 0, %v669
    %v671 = vrot.slane %v666, %v670
    %v674 = vsel %vm582, %v657, 0
    %676 = vmatprep.subr.mxu0 0.0
    %677 = vmatpush1.msra.mxu0 %v658
    %678 = vmatprep.subr.mxu0 0.0
    %679 = vmatpush1.msra.mxu0 %v659
    %680 = vmatprep.subr.mxu0 0.0
    %681 = vmatpush1.msra.mxu0 %v660
    %682 = vmatprep.subr.mxu0 0.0
    %683 = vmatpush1.msra.mxu0 %v661
    %684 = vmatprep.subr.mxu0 0.0
    %685 = vmatpush1.msra.mxu0 %v662
    %686 = vmatprep.subr.mxu0 0.0
    %687 = vmatpush1.msra.mxu0 %v663
    %688 = vmatprep.subr.mxu0 0.0
    %689 = vmatpush1.msra.mxu0 %v664
    %690 = vmatprep.subr.mxu0 0.0
    %691 = vmatpush1.msra.mxu0 %v665
    %692 = vmatprep.subr.mxu0 0.0
    %693 = vmatpush1.msra.mxu0 0.0
    %694 = vmatprep.subr.mxu0 0.0
    %695 = vmatpush1.msra.mxu0 0.0
    %696 = vmatprep.subr.mxu0 0.0
    %697 = vmatpush1.msra.mxu0 0.0
    %698 = vmatprep.subr.mxu0 0.0
    %699 = vmatpush1.msra.mxu0 0.0
    %700 = vmatprep.subr.mxu0 0.0
    %701 = vmatpush1.msra.mxu0 0.0
    %702 = vmatprep.subr.mxu0 0.0
    %703 = vmatpush1.msra.mxu0 0.0
    %704 = vmatprep.subr.mxu0 0.0
    %705 = vmatpush1.msra.mxu0 0.0
    %706 = vmatprep.subr.mxu0 0.0
    %707 = vmatpush1.msra.mxu0 0.0
    %708 = vmatprep.subr.mxu0 0.0
    %709 = vmatpush1.msra.mxu0 0.0
    %710 = vmatprep.subr.mxu0 0.0
    %711 = vmatpush1.msra.mxu0 0.0
    %712 = vmatprep.subr.mxu0 0.0
    %713 = vmatpush1.msra.mxu0 0.0
    %714 = vmatprep.subr.mxu0 0.0
    %715 = vmatpush1.msra.mxu0 0.0
    %716 = vmatprep.subr.mxu0 0.0
    %717 = vmatpush1.msra.mxu0 0.0
    %718 = vmatprep.subr.mxu0 0.0
    %719 = vmatpush1.msra.mxu0 0.0
    %720 = vmatprep.subr.mxu0 0.0
    %721 = vmatpush1.msra.mxu0 0.0
    %722 = vmatprep.subr.mxu0 0.0
    %723 = vmatpush1.msra.mxu0 0.0
    %724 = vmatprep.subr.mxu0 0.0
    %725 = vmatpush1.msra.mxu0 0.0
    %726 = vmatprep.subr.mxu0 0.0
    %727 = vmatpush1.msra.mxu0 0.0
    %728 = vmatprep.subr.mxu0 0.0
    %729 = vmatpush1.msra.mxu0 0.0
    %730 = vmatprep.subr.mxu0 0.0
    %731 = vmatpush1.msra.mxu0 0.0
    %732 = vmatprep.subr.mxu0 0.0
    %733 = vmatpush1.msra.mxu0 0.0
    %734 = vmatprep.subr.mxu0 0.0
    %735 = vmatpush1.msra.mxu0 0.0
    %736 = vmatprep.subr.mxu0 0.0
    %737 = vmatpush1.msra.mxu0 0.0
    %738 = vmatprep.subr.mxu0 0.0
    %739 = vmatpush1.msra.mxu0 0.0
    %740 = vmatprep.mubr.f32.mxu0 0.0
    %741 = vmatmul.mubr.f32.gmra.mrb[0].mxu0 %v674
    %v742 = vpop.f32.mrb[0].mxu0
    %v743 = vadd.f32 %v671, %v742
    %v744 = vpop.f32.mrb[0].mxu0
    %745 = vdwg.mxu0
    %v746 = vmul.f32 %v384, %v743
    %v747 = vld [vmem:[#allocation13] sm:$0xff]
    %v748 = vld [vmem:[#allocation13 + $0x8] sm:$0xff]
    %v749 = vld [vmem:[#allocation13 + $0x10] sm:$0xff]
    %v750 = vld [vmem:[#allocation13 + $0x18] sm:$0xff]
    %v751 = vld [vmem:[#allocation13 + $0x20] sm:$0xff]
    %v752 = vld [vmem:[#allocation13 + $0x28] sm:$0xff]
    %v753 = vld [vmem:[#allocation13 + $0x30] sm:$0xf]
    %v754 = vld [vmem:[#allocation14] sm:$0x1]
    %v756 = vlaneseq
    %v757 = vshrl.u32 %v756, 7
    %v758 = vsub.s32 0, %v757
    %v759 = vrot.slane %v754, %v758
    %v762 = vsel %vm409, %v746, 0
    %v765 = vsel %vm413, %v753, 0
    %767 = vmatprep.subr.mxu0 0.0
    %768 = vmatpush1.msra.mxu0 %v747
    %769 = vmatprep.subr.mxu0 0.0
    %770 = vmatpush1.msra.mxu0 %v748
    %771 = vmatprep.subr.mxu0 0.0
    %772 = vmatpush1.msra.mxu0 %v749
    %773 = vmatprep.subr.mxu0 0.0
    %774 = vmatpush1.msra.mxu0 %v750
    %775 = vmatprep.subr.mxu0 0.0
    %776 = vmatpush1.msra.mxu0 %v751
    %777 = vmatprep.subr.mxu0 0.0
    %778 = vmatpush1.msra.mxu0 %v752
    %779 = vmatprep.subr.mxu0 0.0
    %780 = vmatpush1.msra.mxu0 %v765
    %781 = vmatprep.subr.mxu0 0.0
    %782 = vmatpush1.msra.mxu0 0.0
    %783 = vmatprep.subr.mxu0 0.0
    %784 = vmatpush1.msra.mxu0 0.0
    %785 = vmatprep.subr.mxu0 0.0
    %786 = vmatpush1.msra.mxu0 0.0
    %787 = vmatprep.subr.mxu0 0.0
    %788 = vmatpush1.msra.mxu0 0.0
    %789 = vmatprep.subr.mxu0 0.0
    %790 = vmatpush1.msra.mxu0 0.0
    %791 = vmatprep.subr.mxu0 0.0
    %792 = vmatpush1.msra.mxu0 0.0
    %793 = vmatprep.subr.mxu0 0.0
    %794 = vmatpush1.msra.mxu0 0.0
    %795 = vmatprep.subr.mxu0 0.0
    %796 = vmatpush1.msra.mxu0 0.0
    %797 = vmatprep.subr.mxu0 0.0
    %798 = vmatpush1.msra.mxu0 0.0
    %799 = vmatprep.subr.mxu0 0.0
    %800 = vmatpush1.msra.mxu0 0.0
    %801 = vmatprep.subr.mxu0 0.0
    %802 = vmatpush1.msra.mxu0 0.0
    %803 = vmatprep.subr.mxu0 0.0
    %804 = vmatpush1.msra.mxu0 0.0
    %805 = vmatprep.subr.mxu0 0.0
    %806 = vmatpush1.msra.mxu0 0.0
    %807 = vmatprep.subr.mxu0 0.0
    %808 = vmatpush1.msra.mxu0 0.0
    %809 = vmatprep.subr.mxu0 0.0
    %810 = vmatpush1.msra.mxu0 0.0
    %811 = vmatprep.subr.mxu0 0.0
    %812 = vmatpush1.msra.mxu0 0.0
    %813 = vmatprep.subr.mxu0 0.0
    %814 = vmatpush1.msra.mxu0 0.0
    %815 = vmatprep.subr.mxu0 0.0
    %816 = vmatpush1.msra.mxu0 0.0
    %817 = vmatprep.subr.mxu0 0.0
    %818 = vmatpush1.msra.mxu0 0.0
    %819 = vmatprep.subr.mxu0 0.0
    %820 = vmatpush1.msra.mxu0 0.0
    %821 = vmatprep.subr.mxu0 0.0
    %822 = vmatpush1.msra.mxu0 0.0
    %823 = vmatprep.subr.mxu0 0.0
    %824 = vmatpush1.msra.mxu0 0.0
    %825 = vmatprep.subr.mxu0 0.0
    %826 = vmatpush1.msra.mxu0 0.0
    %827 = vmatprep.subr.mxu0 0.0
    %828 = vmatpush1.msra.mxu0 0.0
    %829 = vmatprep.subr.mxu0 0.0
    %830 = vmatpush1.msra.mxu0 0.0
    %831 = vmatprep.mubr.f32.mxu0 0.0
    %832 = vmatmul.mubr.f32.gmra.mrb[0].mxu0 %v762
    %v833 = vpop.f32.mrb[0].mxu0
    %v834 = vadd.f32 %v759, %v833
    %v835 = vpop.f32.mrb[0].mxu0
    %836 = vdwg.mxu0
    %v837 = vmul.f32 %v834, 0.01
    %v838 = vmax.f32 %v834, %v837
    %v839 = vld [vmem:[#allocation16] sm:$0xff]
    %v840 = vld [vmem:[#allocation16 + $0x8] sm:$0xff]
    %v841 = vld [vmem:[#allocation16 + $0x10] sm:$0xff]
    %v842 = vld [vmem:[#allocation16 + $0x18] sm:$0xff]
    %v843 = vld [vmem:[#allocation16 + $0x20] sm:$0xff]
    %v844 = vld [vmem:[#allocation16 + $0x28] sm:$0xff]
    %v845 = vld [vmem:[#allocation16 + $0x30] sm:$0xff]
    %v846 = vld [vmem:[#allocation16 + $0x38] sm:$0xff]
    %v847 = vld [vmem:[#allocation17] sm:$0x1]
    %v849 = vlaneseq
    %v850 = vshrl.u32 %v849, 7
    %v851 = vsub.s32 0, %v850
    %v852 = vrot.slane %v847, %v851
    %v855 = vsel %vm582, %v838, 0
    %857 = vmatprep.subr.mxu0 0.0
    %858 = vmatpush1.msra.mxu0 %v839
    %859 = vmatprep.subr.mxu0 0.0
    %860 = vmatpush1.msra.mxu0 %v840
    %861 = vmatprep.subr.mxu0 0.0
    %862 = vmatpush1.msra.mxu0 %v841
    %863 = vmatprep.subr.mxu0 0.0
    %864 = vmatpush1.msra.mxu0 %v842
    %865 = vmatprep.subr.mxu0 0.0
    %866 = vmatpush1.msra.mxu0 %v843
    %867 = vmatprep.subr.mxu0 0.0
    %868 = vmatpush1.msra.mxu0 %v844
    %869 = vmatprep.subr.mxu0 0.0
    %870 = vmatpush1.msra.mxu0 %v845
    %871 = vmatprep.subr.mxu0 0.0
    %872 = vmatpush1.msra.mxu0 %v846
    %873 = vmatprep.subr.mxu0 0.0
    %874 = vmatpush1.msra.mxu0 0.0
    %875 = vmatprep.subr.mxu0 0.0
    %876 = vmatpush1.msra.mxu0 0.0
    %877 = vmatprep.subr.mxu0 0.0
    %878 = vmatpush1.msra.mxu0 0.0
    %879 = vmatprep.subr.mxu0 0.0
    %880 = vmatpush1.msra.mxu0 0.0
    %881 = vmatprep.subr.mxu0 0.0
    %882 = vmatpush1.msra.mxu0 0.0
    %883 = vmatprep.subr.mxu0 0.0
    %884 = vmatpush1.msra.mxu0 0.0
    %885 = vmatprep.subr.mxu0 0.0
    %886 = vmatpush1.msra.mxu0 0.0
    %887 = vmatprep.subr.mxu0 0.0
    %888 = vmatpush1.msra.mxu0 0.0
    %889 = vmatprep.subr.mxu0 0.0
    %890 = vmatpush1.msra.mxu0 0.0
    %891 = vmatprep.subr.mxu0 0.0
    %892 = vmatpush1.msra.mxu0 0.0
    %893 = vmatprep.subr.mxu0 0.0
    %894 = vmatpush1.msra.mxu0 0.0
    %895 = vmatprep.subr.mxu0 0.0
    %896 = vmatpush1.msra.mxu0 0.0
    %897 = vmatprep.subr.mxu0 0.0
    %898 = vmatpush1.msra.mxu0 0.0
    %899 = vmatprep.subr.mxu0 0.0
    %900 = vmatpush1.msra.mxu0 0.0
    %901 = vmatprep.subr.mxu0 0.0
    %902 = vmatpush1.msra.mxu0 0.0
    %903 = vmatprep.subr.mxu0 0.0
    %904 = vmatpush1.msra.mxu0 0.0
    %905 = vmatprep.subr.mxu0 0.0
    %906 = vmatpush1.msra.mxu0 0.0
    %907 = vmatprep.subr.mxu0 0.0
    %908 = vmatpush1.msra.mxu0 0.0
    %909 = vmatprep.subr.mxu0 0.0
    %910 = vmatpush1.msra.mxu0 0.0
    %911 = vmatprep.subr.mxu0 0.0
    %912 = vmatpush1.msra.mxu0 0.0
    %913 = vmatprep.subr.mxu0 0.0
    %914 = vmatpush1.msra.mxu0 0.0
    %915 = vmatprep.subr.mxu0 0.0
    %916 = vmatpush1.msra.mxu0 0.0
    %917 = vmatprep.subr.mxu0 0.0
    %918 = vmatpush1.msra.mxu0 0.0
    %919 = vmatprep.subr.mxu0 0.0
    %920 = vmatpush1.msra.mxu0 0.0
    %921 = vmatprep.mubr.f32.mxu0 0.0
    %922 = vmatmul.mubr.f32.gmra.mrb[0].mxu0 %v855
    %v923 = vpop.f32.mrb[0].mxu0
    %v924 = vadd.f32 %v852, %v923
    %v925 = vpop.f32.mrb[0].mxu0
    %926 = vdwg.mxu0
    %v927 = vmul.f32 %v924, 0.01
    %v928 = vmax.f32 %v924, %v927
    %v929 = vld [vmem:[%s27] sm:$0xff]
    %v930 = vld [vmem:[%s27 + $0x8] sm:$0xff]
    %v931 = vld [vmem:[%s27 + $0x10] sm:$0xff]
    %v932 = vld [vmem:[%s27 + $0x18] sm:$0xff]
    %v933 = vld [vmem:[%s27 + $0x20] sm:$0xff]
    %v934 = vld [vmem:[%s27 + $0x28] sm:$0xff]
    %v935 = vld [vmem:[%s27 + $0x30] sm:$0xff]
    %v936 = vld [vmem:[%s27 + $0x38] sm:$0xff]
    %v937 = vld [vmem:[#allocation19] sm:$0x1]
    %v939 = vlaneseq
    %v940 = vshrl.u32 %v939, 7
    %v941 = vsub.s32 0, %v940
    %v942 = vrot.slane %v937, %v941
    %v945 = vsel %vm582, %v928, 0
    %947 = vmatprep.subr.mxu0 0.0
    %948 = vmatpush1.msra.mxu0 %v929
    %949 = vmatprep.subr.mxu0 0.0
    %950 = vmatpush1.msra.mxu0 %v930
    %951 = vmatprep.subr.mxu0 0.0
    %952 = vmatpush1.msra.mxu0 %v931
    %953 = vmatprep.subr.mxu0 0.0
    %954 = vmatpush1.msra.mxu0 %v932
    %955 = vmatprep.subr.mxu0 0.0
    %956 = vmatpush1.msra.mxu0 %v933
    %957 = vmatprep.subr.mxu0 0.0
    %958 = vmatpush1.msra.mxu0 %v934
    %959 = vmatprep.subr.mxu0 0.0
    %960 = vmatpush1.msra.mxu0 %v935
    %961 = vmatprep.subr.mxu0 0.0
    %962 = vmatpush1.msra.mxu0 %v936
    %963 = vmatprep.subr.mxu0 0.0
    %964 = vmatpush1.msra.mxu0 0.0
    %965 = vmatprep.subr.mxu0 0.0
    %966 = vmatpush1.msra.mxu0 0.0
    %967 = vmatprep.subr.mxu0 0.0
    %968 = vmatpush1.msra.mxu0 0.0
    %969 = vmatprep.subr.mxu0 0.0
    %970 = vmatpush1.msra.mxu0 0.0
    %971 = vmatprep.subr.mxu0 0.0
    %972 = vmatpush1.msra.mxu0 0.0
    %973 = vmatprep.subr.mxu0 0.0
    %974 = vmatpush1.msra.mxu0 0.0
    %975 = vmatprep.subr.mxu0 0.0
    %976 = vmatpush1.msra.mxu0 0.0
    %977 = vmatprep.subr.mxu0 0.0
    %978 = vmatpush1.msra.mxu0 0.0
    %979 = vmatprep.subr.mxu0 0.0
    %980 = vmatpush1.msra.mxu0 0.0
    %981 = vmatprep.subr.mxu0 0.0
    %982 = vmatpush1.msra.mxu0 0.0
    %983 = vmatprep.subr.mxu0 0.0
    %984 = vmatpush1.msra.mxu0 0.0
    %985 = vmatprep.subr.mxu0 0.0
    %986 = vmatpush1.msra.mxu0 0.0
    %987 = vmatprep.subr.mxu0 0.0
    %988 = vmatpush1.msra.mxu0 0.0
    %989 = vmatprep.subr.mxu0 0.0
    %990 = vmatpush1.msra.mxu0 0.0
    %991 = vmatprep.subr.mxu0 0.0
    %992 = vmatpush1.msra.mxu0 0.0
    %993 = vmatprep.subr.mxu0 0.0
    %994 = vmatpush1.msra.mxu0 0.0
    %995 = vmatprep.subr.mxu0 0.0
    %996 = vmatpush1.msra.mxu0 0.0
    %997 = vmatprep.subr.mxu0 0.0
    %998 = vmatpush1.msra.mxu0 0.0
    %999 = vmatprep.subr.mxu0 0.0
    %1000 = vmatpush1.msra.mxu0 0.0
    %1001 = vmatprep.subr.mxu0 0.0
    %1002 = vmatpush1.msra.mxu0 0.0
    %1003 = vmatprep.subr.mxu0 0.0
    %1004 = vmatpush1.msra.mxu0 0.0
    %1005 = vmatprep.subr.mxu0 0.0
    %1006 = vmatpush1.msra.mxu0 0.0
    %1007 = vmatprep.subr.mxu0 0.0
    %1008 = vmatpush1.msra.mxu0 0.0
    %1009 = vmatprep.subr.mxu0 0.0
    %1010 = vmatpush1.msra.mxu0 0.0
    %1011 = vmatprep.mubr.f32.mxu0 0.0
    %1012 = vmatmul.mubr.f32.gmra.mrb[0].mxu0 %v945
    %v1013 = vpop.f32.mrb[0].mxu0
    %v1014 = vadd.f32 %v942, %v1013
    %v1015 = vpop.f32.mrb[0].mxu0
    %1016 = vdwg.mxu0
    %v1017 = vmul.f32 %v746, %v1014
    %v1018 = vld [vmem:[%s31] sm:$0xff]
    %v1019 = vld [vmem:[%s31 + $0x8] sm:$0xff]
    %v1020 = vld [vmem:[%s31 + $0x10] sm:$0xff]
    %v1021 = vld [vmem:[%s31 + $0x18] sm:$0xff]
    %v1022 = vld [vmem:[%s31 + $0x20] sm:$0xff]
    %v1023 = vld [vmem:[%s31 + $0x28] sm:$0xff]
    %v1024 = vld [vmem:[%s31 + $0x30] sm:$0xff]
    %v1025 = vld [vmem:[%s31 + $0x38] sm:$0xff]
    %v1026 = vld [vmem:[%s31 + $0x40] sm:$0xff]
    %v1027 = vld [vmem:[%s31 + $0x48] sm:$0xff]
    %v1028 = vld [vmem:[%s31 + $0x50] sm:$0xff]
    %v1029 = vld [vmem:[%s31 + $0x58] sm:$0xff]
    %v1030 = vld [vmem:[%s31 + $0x60] sm:$0xff]
    %v1031 = vld [vmem:[%s31 + $0x68] sm:$0xff]
    %v1032 = vld [vmem:[%s31 + $0x70] sm:$0xff]
    %v1033 = vld [vmem:[%s31 + $0x78] sm:$0xff]
    %v1034 = vld [vmem:[#allocation20] sm:$0x1]
    %v1036 = vlaneseq
    %v1037 = vshrl.u32 %v1036, 7
    %v1038 = vsub.s32 0, %v1037
    %v1039 = vrot.slane %v1034, %v1038
    %1041 = vmatprep.subr.mxu0 0.0
    %1042 = vmatpush1.msra.mxu0 %v1018
    %1043 = vmatprep.subr.mxu0 0.0
    %1044 = vmatpush1.msra.mxu0 %v1019
    %1045 = vmatprep.subr.mxu0 0.0
    %1046 = vmatpush1.msra.mxu0 %v1020
    %1047 = vmatprep.subr.mxu0 0.0
    %1048 = vmatpush1.msra.mxu0 %v1021
    %1049 = vmatprep.subr.mxu0 0.0
    %1050 = vmatpush1.msra.mxu0 %v1022
    %1051 = vmatprep.subr.mxu0 0.0
    %1052 = vmatpush1.msra.mxu0 %v1023
    %1053 = vmatprep.subr.mxu0 0.0
    %1054 = vmatpush1.msra.mxu0 %v1024
    %1055 = vmatprep.subr.mxu0 0.0
    %1056 = vmatpush1.msra.mxu0 %v1025
    %1057 = vmatprep.subr.mxu0 0.0
    %1058 = vmatpush1.msra.mxu0 %v1026
    %1059 = vmatprep.subr.mxu0 0.0
    %1060 = vmatpush1.msra.mxu0 %v1027
    %1061 = vmatprep.subr.mxu0 0.0
    %1062 = vmatpush1.msra.mxu0 %v1028
    %1063 = vmatprep.subr.mxu0 0.0
    %1064 = vmatpush1.msra.mxu0 %v1029
    %1065 = vmatprep.subr.mxu0 0.0
    %1066 = vmatpush1.msra.mxu0 %v1030
    %1067 = vmatprep.subr.mxu0 0.0
    %1068 = vmatpush1.msra.mxu0 %v1031
    %1069 = vmatprep.subr.mxu0 0.0
    %1070 = vmatpush1.msra.mxu0 %v1032
    %1071 = vmatprep.subr.mxu0 0.0
    %1072 = vmatpush1.msra.mxu0 %v1033
    %1073 = vmatprep.subr.mxu0 0.0
    %1074 = vmatpush1.msra.mxu0 0.0
    %1075 = vmatprep.subr.mxu0 0.0
    %1076 = vmatpush1.msra.mxu0 0.0
    %1077 = vmatprep.subr.mxu0 0.0
    %1078 = vmatpush1.msra.mxu0 0.0
    %1079 = vmatprep.subr.mxu0 0.0
    %1080 = vmatpush1.msra.mxu0 0.0
    %1081 = vmatprep.subr.mxu0 0.0
    %1082 = vmatpush1.msra.mxu0 0.0
    %1083 = vmatprep.subr.mxu0 0.0
    %1084 = vmatpush1.msra.mxu0 0.0
    %1085 = vmatprep.subr.mxu0 0.0
    %1086 = vmatpush1.msra.mxu0 0.0
    %1087 = vmatprep.subr.mxu0 0.0
    %1088 = vmatpush1.msra.mxu0 0.0
    %1089 = vmatprep.subr.mxu0 0.0
    %1090 = vmatpush1.msra.mxu0 0.0
    %1091 = vmatprep.subr.mxu0 0.0
    %1092 = vmatpush1.msra.mxu0 0.0
    %1093 = vmatprep.subr.mxu0 0.0
    %1094 = vmatpush1.msra.mxu0 0.0
    %1095 = vmatprep.subr.mxu0 0.0
    %1096 = vmatpush1.msra.mxu0 0.0
    %1097 = vmatprep.subr.mxu0 0.0
    %1098 = vmatpush1.msra.mxu0 0.0
    %1099 = vmatprep.subr.mxu0 0.0
    %1100 = vmatpush1.msra.mxu0 0.0
    %1101 = vmatprep.subr.mxu0 0.0
    %1102 = vmatpush1.msra.mxu0 0.0
    %1103 = vmatprep.subr.mxu0 0.0
    %1104 = vmatpush1.msra.mxu0 0.0
    %1105 = vmatprep.mubr.f32.mxu0 0.0
    %1106 = vmatmul.mubr.f32.gmra.mrb[0].mxu0 %v385
    %v1107 = vpop.f32.mrb[0].mxu0
    %v1108 = vadd.f32 %v1039, %v1107
    %v1109 = vpop.f32.mrb[0].mxu0
    %1110 = vdwg.mxu0
    %v1111 = vmul.f32 %v1108, 0.01
    %v1112 = vmax.f32 %v1108, %v1111
    %v1113 = vld [vmem:[#allocation22] sm:$0xff]
    %v1114 = vld [vmem:[#allocation22 + $0x8] sm:$0xff]
    %v1115 = vld [vmem:[#allocation22 + $0x10] sm:$0xff]
    %v1116 = vld [vmem:[#allocation22 + $0x18] sm:$0xff]
    %v1117 = vld [vmem:[#allocation22 + $0x20] sm:$0xff]
    %v1118 = vld [vmem:[#allocation22 + $0x28] sm:$0xff]
    %v1119 = vld [vmem:[#allocation22 + $0x30] sm:$0xff]
    %v1120 = vld [vmem:[#allocation22 + $0x38] sm:$0xff]
    %v1121 = vld [vmem:[#allocation23] sm:$0x1]
    %v1123 = vlaneseq
    %v1124 = vshrl.u32 %v1123, 7
    %v1125 = vsub.s32 0, %v1124
    %v1126 = vrot.slane %v1121, %v1125
    %v1129 = vsel %vm582, %v1112, 0
    %1131 = vmatprep.subr.mxu0 0.0
    %1132 = vmatpush1.msra.mxu0 %v1113
    %1133 = vmatprep.subr.mxu0 0.0
    %1134 = vmatpush1.msra.mxu0 %v1114
    %1135 = vmatprep.subr.mxu0 0.0
    %1136 = vmatpush1.msra.mxu0 %v1115
    %1137 = vmatprep.subr.mxu0 0.0
    %1138 = vmatpush1.msra.mxu0 %v1116
    %1139 = vmatprep.subr.mxu0 0.0
    %1140 = vmatpush1.msra.mxu0 %v1117
    %1141 = vmatprep.subr.mxu0 0.0
    %1142 = vmatpush1.msra.mxu0 %v1118
    %1143 = vmatprep.subr.mxu0 0.0
    %1144 = vmatpush1.msra.mxu0 %v1119
    %1145 = vmatprep.subr.mxu0 0.0
    %1146 = vmatpush1.msra.mxu0 %v1120
    %1147 = vmatprep.subr.mxu0 0.0
    %1148 = vmatpush1.msra.mxu0 0.0
    %1149 = vmatprep.subr.mxu0 0.0
    %1150 = vmatpush1.msra.mxu0 0.0
    %1151 = vmatprep.subr.mxu0 0.0
    %1152 = vmatpush1.msra.mxu0 0.0
    %1153 = vmatprep.subr.mxu0 0.0
    %1154 = vmatpush1.msra.mxu0 0.0
    %1155 = vmatprep.subr.mxu0 0.0
    %1156 = vmatpush1.msra.mxu0 0.0
    %1157 = vmatprep.subr.mxu0 0.0
    %1158 = vmatpush1.msra.mxu0 0.0
    %1159 = vmatprep.subr.mxu0 0.0
    %1160 = vmatpush1.msra.mxu0 0.0
    %1161 = vmatprep.subr.mxu0 0.0
    %1162 = vmatpush1.msra.mxu0 0.0
    %1163 = vmatprep.subr.mxu0 0.0
    %1164 = vmatpush1.msra.mxu0 0.0
    %1165 = vmatprep.subr.mxu0 0.0
    %1166 = vmatpush1.msra.mxu0 0.0
    %1167 = vmatprep.subr.mxu0 0.0
    %1168 = vmatpush1.msra.mxu0 0.0
    %1169 = vmatprep.subr.mxu0 0.0
    %1170 = vmatpush1.msra.mxu0 0.0
    %1171 = vmatprep.subr.mxu0 0.0
    %1172 = vmatpush1.msra.mxu0 0.0
    %1173 = vmatprep.subr.mxu0 0.0
    %1174 = vmatpush1.msra.mxu0 0.0
    %1175 = vmatprep.subr.mxu0 0.0
    %1176 = vmatpush1.msra.mxu0 0.0
    %1177 = vmatprep.subr.mxu0 0.0
    %1178 = vmatpush1.msra.mxu0 0.0
    %1179 = vmatprep.subr.mxu0 0.0
    %1180 = vmatpush1.msra.mxu0 0.0
    %1181 = vmatprep.subr.mxu0 0.0
    %1182 = vmatpush1.msra.mxu0 0.0
    %1183 = vmatprep.subr.mxu0 0.0
    %1184 = vmatpush1.msra.mxu0 0.0
    %1185 = vmatprep.subr.mxu0 0.0
    %1186 = vmatpush1.msra.mxu0 0.0
    %1187 = vmatprep.subr.mxu0 0.0
    %1188 = vmatpush1.msra.mxu0 0.0
    %1189 = vmatprep.subr.mxu0 0.0
    %1190 = vmatpush1.msra.mxu0 0.0
    %1191 = vmatprep.subr.mxu0 0.0
    %1192 = vmatpush1.msra.mxu0 0.0
    %1193 = vmatprep.subr.mxu0 0.0
    %1194 = vmatpush1.msra.mxu0 0.0
    %1195 = vmatprep.mubr.f32.mxu0 0.0
    %1196 = vmatmul.mubr.f32.gmra.mrb[0].mxu0 %v1129
    %v1197 = vpop.f32.mrb[0].mxu0
    %v1198 = vadd.f32 %v1126, %v1197
    %v1199 = vpop.f32.mrb[0].mxu0
    %1200 = vdwg.mxu0
    %v1201 = vmul.f32 %v1198, 0.01
    %v1202 = vmax.f32 %v1198, %v1201
    %v1203 = vld [vmem:[#allocation25] sm:$0xff]
    %v1204 = vld [vmem:[#allocation25 + $0x8] sm:$0xff]
    %v1205 = vld [vmem:[#allocation25 + $0x10] sm:$0xff]
    %v1206 = vld [vmem:[#allocation25 + $0x18] sm:$0xff]
    %v1207 = vld [vmem:[#allocation25 + $0x20] sm:$0xff]
    %v1208 = vld [vmem:[#allocation25 + $0x28] sm:$0xff]
    %v1209 = vld [vmem:[#allocation25 + $0x30] sm:$0xff]
    %v1210 = vld [vmem:[#allocation25 + $0x38] sm:$0xff]
    %v1211 = vld [vmem:[#allocation26] sm:$0x1]
    %v1213 = vlaneseq
    %v1214 = vshrl.u32 %v1213, 7
    %v1215 = vsub.s32 0, %v1214
    %v1216 = vrot.slane %v1211, %v1215
    %v1219 = vsel %vm582, %v1202, 0
    %1221 = vmatprep.subr.mxu0 0.0
    %1222 = vmatpush1.msra.mxu0 %v1203
    %1223 = vmatprep.subr.mxu0 0.0
    %1224 = vmatpush1.msra.mxu0 %v1204
    %1225 = vmatprep.subr.mxu0 0.0
    %1226 = vmatpush1.msra.mxu0 %v1205
    %1227 = vmatprep.subr.mxu0 0.0
    %1228 = vmatpush1.msra.mxu0 %v1206
    %1229 = vmatprep.subr.mxu0 0.0
    %1230 = vmatpush1.msra.mxu0 %v1207
    %1231 = vmatprep.subr.mxu0 0.0
    %1232 = vmatpush1.msra.mxu0 %v1208
    %1233 = vmatprep.subr.mxu0 0.0
    %1234 = vmatpush1.msra.mxu0 %v1209
    %1235 = vmatprep.subr.mxu0 0.0
    %1236 = vmatpush1.msra.mxu0 %v1210
    %1237 = vmatprep.subr.mxu0 0.0
    %1238 = vmatpush1.msra.mxu0 0.0
    %1239 = vmatprep.subr.mxu0 0.0
    %1240 = vmatpush1.msra.mxu0 0.0
    %1241 = vmatprep.subr.mxu0 0.0
    %1242 = vmatpush1.msra.mxu0 0.0
    %1243 = vmatprep.subr.mxu0 0.0
    %1244 = vmatpush1.msra.mxu0 0.0
    %1245 = vmatprep.subr.mxu0 0.0
    %1246 = vmatpush1.msra.mxu0 0.0
    %1247 = vmatprep.subr.mxu0 0.0
    %1248 = vmatpush1.msra.mxu0 0.0
    %1249 = vmatprep.subr.mxu0 0.0
    %1250 = vmatpush1.msra.mxu0 0.0
    %1251 = vmatprep.subr.mxu0 0.0
    %1252 = vmatpush1.msra.mxu0 0.0
    %1253 = vmatprep.subr.mxu0 0.0
    %1254 = vmatpush1.msra.mxu0 0.0
    %1255 = vmatprep.subr.mxu0 0.0
    %1256 = vmatpush1.msra.mxu0 0.0
    %1257 = vmatprep.subr.mxu0 0.0
    %1258 = vmatpush1.msra.mxu0 0.0
    %1259 = vmatprep.subr.mxu0 0.0
    %1260 = vmatpush1.msra.mxu0 0.0
    %1261 = vmatprep.subr.mxu0 0.0
    %1262 = vmatpush1.msra.mxu0 0.0
    %1263 = vmatprep.subr.mxu0 0.0
    %1264 = vmatpush1.msra.mxu0 0.0
    %1265 = vmatprep.subr.mxu0 0.0
    %1266 = vmatpush1.msra.mxu0 0.0
    %1267 = vmatprep.subr.mxu0 0.0
    %1268 = vmatpush1.msra.mxu0 0.0
    %1269 = vmatprep.subr.mxu0 0.0
    %1270 = vmatpush1.msra.mxu0 0.0
    %1271 = vmatprep.subr.mxu0 0.0
    %1272 = vmatpush1.msra.mxu0 0.0
    %1273 = vmatprep.subr.mxu0 0.0
    %1274 = vmatpush1.msra.mxu0 0.0
    %1275 = vmatprep.subr.mxu0 0.0
    %1276 = vmatpush1.msra.mxu0 0.0
    %1277 = vmatprep.subr.mxu0 0.0
    %1278 = vmatpush1.msra.mxu0 0.0
    %1279 = vmatprep.subr.mxu0 0.0
    %1280 = vmatpush1.msra.mxu0 0.0
    %1281 = vmatprep.subr.mxu0 0.0
    %1282 = vmatpush1.msra.mxu0 0.0
    %1283 = vmatprep.subr.mxu0 0.0
    %1284 = vmatpush1.msra.mxu0 0.0
    %1285 = vmatprep.mubr.f32.mxu0 0.0
    %1286 = vmatmul.mubr.f32.gmra.mrb[0].mxu0 %v1219
    %v1287 = vpop.f32.mrb[0].mxu0
    %v1288 = vadd.f32 %v1216, %v1287
    %v1289 = vpop.f32.mrb[0].mxu0
    %1290 = vdwg.mxu0
    %v1291 = vld [vmem:[#allocation28] sm:$0xff]
    %v1292 = vld [vmem:[#allocation28 + $0x8] sm:$0xff]
    %v1293 = vld [vmem:[#allocation28 + $0x10] sm:$0xff]
    %v1294 = vld [vmem:[#allocation28 + $0x18] sm:$0xff]
    %v1295 = vld [vmem:[#allocation28 + $0x20] sm:$0xff]
    %v1296 = vld [vmem:[#allocation28 + $0x28] sm:$0xff]
    %v1297 = vld [vmem:[#allocation28 + $0x30] sm:$0xff]
    %v1298 = vld [vmem:[#allocation28 + $0x38] sm:$0xff]
    %v1299 = vld [vmem:[#allocation28 + $0x40] sm:$0xff]
    %v1300 = vld [vmem:[#allocation28 + $0x48] sm:$0xff]
    %v1301 = vld [vmem:[#allocation28 + $0x50] sm:$0xff]
    %v1302 = vld [vmem:[#allocation28 + $0x58] sm:$0xff]
    %v1303 = vld [vmem:[#allocation28 + $0x60] sm:$0xf]
    %v1304 = vld [vmem:[#allocation28 + $0x68] sm:$0xf]
    %v1305 = vld [vmem:[%s45] sm:$0xff]
    %v1306 = vld [vmem:[%s45 + $0x8] sm:$0xff]
    %v1307 = vld [vmem:[%s45 + $0x10] sm:$0xff]
    %v1308 = vld [vmem:[%s45 + $0x18] sm:$0xff]
    %v1309 = vld [vmem:[%s45 + $0x20] sm:$0xff]
    %v1310 = vld [vmem:[%s45 + $0x28] sm:$0xff]
    %v1311 = vld [vmem:[%s45 + $0x30] sm:$0xff]
    %v1312 = vld [vmem:[%s45 + $0x38] sm:$0xff]
    %v1313 = vld [vmem:[%s45 + $0x40] sm:$0xff]
    %v1314 = vld [vmem:[%s45 + $0x48] sm:$0xff]
    %v1315 = vld [vmem:[%s45 + $0x50] sm:$0xff]
    %v1316 = vld [vmem:[%s45 + $0x58] sm:$0xff]
    %v1317 = vld [vmem:[%s45 + $0x60] sm:$0xff]
    %v1318 = vld [vmem:[%s45 + $0x68] sm:$0xff]
    %v1319 = vld [vmem:[%s45 + $0x70] sm:$0xff]
    %v1320 = vld [vmem:[%s45 + $0x78] sm:$0xff]
    %v1322 = vsel %vm582, %v1288, 0
    %1324 = vmatprep.subr.mxu0 %v1306
    %1325 = vmatpush1.msra.mxu0 %v1305
    %1326 = vmatprep.subr.mxu0 %v1308
    %1327 = vmatpush1.msra.mxu0 %v1307
    %1328 = vmatprep.subr.mxu0 %v1310
    %1329 = vmatpush1.msra.mxu0 %v1309
    %1330 = vmatprep.subr.mxu0 %v1312
    %1331 = vmatpush1.msra.mxu0 %v1311
    %1332 = vmatprep.subr.mxu0 %v1314
    %1333 = vmatpush1.msra.mxu0 %v1313
    %1334 = vmatprep.subr.mxu0 %v1316
    %1335 = vmatpush1.msra.mxu0 %v1315
    %1336 = vmatprep.subr.mxu0 %v1318
    %1337 = vmatpush1.msra.mxu0 %v1317
    %1338 = vmatprep.subr.mxu0 %v1320
    %1339 = vmatpush1.msra.mxu0 %v1319
    %1340 = vmatprep.subr.mxu0 0.0
    %1341 = vmatpush1.msra.mxu0 0.0
    %1342 = vmatprep.subr.mxu0 0.0
    %1343 = vmatpush1.msra.mxu0 0.0
    %1344 = vmatprep.subr.mxu0 0.0
    %1345 = vmatpush1.msra.mxu0 0.0
    %1346 = vmatprep.subr.mxu0 0.0
    %1347 = vmatpush1.msra.mxu0 0.0
    %1348 = vmatprep.subr.mxu0 0.0
    %1349 = vmatpush1.msra.mxu0 0.0
    %1350 = vmatprep.subr.mxu0 0.0
    %1351 = vmatpush1.msra.mxu0 0.0
    %1352 = vmatprep.subr.mxu0 0.0
    %1353 = vmatpush1.msra.mxu0 0.0
    %1354 = vmatprep.subr.mxu0 0.0
    %1355 = vmatpush1.msra.mxu0 0.0
    %1356 = vmatprep.subr.mxu0 0.0
    %1357 = vmatpush1.msra.mxu0 0.0
    %1358 = vmatprep.subr.mxu0 0.0
    %1359 = vmatpush1.msra.mxu0 0.0
    %1360 = vmatprep.subr.mxu0 0.0
    %1361 = vmatpush1.msra.mxu0 0.0
    %1362 = vmatprep.subr.mxu0 0.0
    %1363 = vmatpush1.msra.mxu0 0.0
    %1364 = vmatprep.subr.mxu0 0.0
    %1365 = vmatpush1.msra.mxu0 0.0
    %1366 = vmatprep.subr.mxu0 0.0
    %1367 = vmatpush1.msra.mxu0 0.0
    %1368 = vmatprep.subr.mxu0 0.0
    %1369 = vmatpush1.msra.mxu0 0.0
    %1370 = vmatprep.subr.mxu0 0.0
    %1371 = vmatpush1.msra.mxu0 0.0
    %1372 = vmatprep.subr.mxu0 0.0
    %1373 = vmatpush1.msra.mxu0 0.0
    %1374 = vmatprep.subr.mxu0 0.0
    %1375 = vmatpush1.msra.mxu0 0.0
    %1376 = vmatprep.subr.mxu0 0.0
    %1377 = vmatpush1.msra.mxu0 0.0
    %1378 = vmatprep.subr.mxu0 0.0
    %1379 = vmatpush1.msra.mxu0 0.0
    %1380 = vmatprep.subr.mxu0 0.0
    %1381 = vmatpush1.msra.mxu0 0.0
    %1382 = vmatprep.subr.mxu0 0.0
    %1383 = vmatpush1.msra.mxu0 0.0
    %1384 = vmatprep.subr.mxu0 0.0
    %1385 = vmatpush1.msra.mxu0 0.0
    %1386 = vmatprep.subr.mxu0 0.0
    %1387 = vmatpush1.msra.mxu0 0.0
    %1388 = vmatprep.mubr.f32.mxu0 0.0
    %1389 = vmatmul.mubr.f32.gmra.mrb[0].mxu0 %v1322
    %v1390 = vpop.f32.mrb[0].mxu0
    %v1391 = vadd.f32 0.0, %v1390
    %v1392 = vpop.f32.mrb[0].mxu0
    %v1393 = vadd.f32 0.0, %v1392
    %1394 = vdwg.mxu0
    %v1396 = vsel %vm409, %v1017, 0
    %v1399 = vsel %vm413, %v1303, 0
    %v1402 = vsel %vm413, %v1304, 0
    %1404 = vmatprep.subr.mxu0 %v1292
    %1405 = vmatpush1.msra.mxu0 %v1291
    %1406 = vmatprep.subr.mxu0 %v1294
    %1407 = vmatpush1.msra.mxu0 %v1293
    %1408 = vmatprep.subr.mxu0 %v1296
    %1409 = vmatpush1.msra.mxu0 %v1295
    %1410 = vmatprep.subr.mxu0 %v1298
    %1411 = vmatpush1.msra.mxu0 %v1297
    %1412 = vmatprep.subr.mxu0 %v1300
    %1413 = vmatpush1.msra.mxu0 %v1299
    %1414 = vmatprep.subr.mxu0 %v1302
    %1415 = vmatpush1.msra.mxu0 %v1301
    %1416 = vmatprep.subr.mxu0 %v1402
    %1417 = vmatpush1.msra.mxu0 %v1399
    %1418 = vmatprep.subr.mxu0 0.0
    %1419 = vmatpush1.msra.mxu0 0.0
    %1420 = vmatprep.subr.mxu0 0.0
    %1421 = vmatpush1.msra.mxu0 0.0
    %1422 = vmatprep.subr.mxu0 0.0
    %1423 = vmatpush1.msra.mxu0 0.0
    %1424 = vmatprep.subr.mxu0 0.0
    %1425 = vmatpush1.msra.mxu0 0.0
    %1426 = vmatprep.subr.mxu0 0.0
    %1427 = vmatpush1.msra.mxu0 0.0
    %1428 = vmatprep.subr.mxu0 0.0
    %1429 = vmatpush1.msra.mxu0 0.0
    %1430 = vmatprep.subr.mxu0 0.0
    %1431 = vmatpush1.msra.mxu0 0.0
    %1432 = vmatprep.subr.mxu0 0.0
    %1433 = vmatpush1.msra.mxu0 0.0
    %1434 = vmatprep.subr.mxu0 0.0
    %1435 = vmatpush1.msra.mxu0 0.0
    %1436 = vmatprep.subr.mxu0 0.0
    %1437 = vmatpush1.msra.mxu0 0.0
    %1438 = vmatprep.subr.mxu0 0.0
    %1439 = vmatpush1.msra.mxu0 0.0
    %1440 = vmatprep.subr.mxu0 0.0
    %1441 = vmatpush1.msra.mxu0 0.0
    %1442 = vmatprep.subr.mxu0 0.0
    %1443 = vmatpush1.msra.mxu0 0.0
    %1444 = vmatprep.subr.mxu0 0.0
    %1445 = vmatpush1.msra.mxu0 0.0
    %1446 = vmatprep.subr.mxu0 0.0
    %1447 = vmatpush1.msra.mxu0 0.0
    %1448 = vmatprep.subr.mxu0 0.0
    %1449 = vmatpush1.msra.mxu0 0.0
    %1450 = vmatprep.subr.mxu0 0.0
    %1451 = vmatpush1.msra.mxu0 0.0
    %1452 = vmatprep.subr.mxu0 0.0
    %1453 = vmatpush1.msra.mxu0 0.0
    %1454 = vmatprep.subr.mxu0 0.0
    %1455 = vmatpush1.msra.mxu0 0.0
    %1456 = vmatprep.subr.mxu0 0.0
    %1457 = vmatpush1.msra.mxu0 0.0
    %1458 = vmatprep.subr.mxu0 0.0
    %1459 = vmatpush1.msra.mxu0 0.0
    %1460 = vmatprep.subr.mxu0 0.0
    %1461 = vmatpush1.msra.mxu0 0.0
    %1462 = vmatprep.subr.mxu0 0.0
    %1463 = vmatpush1.msra.mxu0 0.0
    %1464 = vmatprep.subr.mxu0 0.0
    %1465 = vmatpush1.msra.mxu0 0.0
    %1466 = vmatprep.subr.mxu0 0.0
    %1467 = vmatpush1.msra.mxu0 0.0
    %1468 = vmatprep.mubr.f32.mxu0 0.0
    %1469 = vmatmul.mubr.f32.gmra.mrb[0].mxu0 %v1396
    %v1470 = vpop.f32.mrb[0].mxu0
    %v1471 = vadd.f32 %v1391, %v1470
    %v1472 = vpop.f32.mrb[0].mxu0
    %v1473 = vadd.f32 %v1393, %v1472
    %1474 = vdwg.mxu0
    %v1475 = vld [vmem:[%s47] sm:$0x3]
    %v1477 = vlaneseq
    %v1478 = vshrl.u32 %v1477, 7
    %v1479 = vsub.s32 0, %v1478
    %v1480 = vrot.slane %v1475, %v1479
    %v1481 = vlaneseq
    %v1482 = vshrl.u32 %v1481, 7
    %v1483 = vsub.s32 1, %v1482
    %v1484 = vrot.slane %v1475, %v1483
    %v1487 = vadd.f32 %v1471, %v1480
    %v1488 = vadd.f32 %v1473, %v1484
    %v1489 = vmul.f32 %v1487, 0.01
    %v1490 = vmul.f32 %v1488, 0.01
    %v1491 = vmax.f32 %v1487, %v1489
    %v1492 = vmax.f32 %v1488, %v1490
    %v1493 = vld [vmem:[%s49] sm:$0xff]
    %v1494 = vld [vmem:[%s49 + $0x8] sm:$0xff]
    %v1495 = vld [vmem:[%s49 + $0x10] sm:$0xff]
    %v1496 = vld [vmem:[%s49 + $0x18] sm:$0xff]
    %v1497 = vld [vmem:[%s49 + $0x20] sm:$0xff]
    %v1498 = vld [vmem:[%s49 + $0x28] sm:$0xff]
    %v1499 = vld [vmem:[%s49 + $0x30] sm:$0xff]
    %v1500 = vld [vmem:[%s49 + $0x38] sm:$0xff]
    %v1501 = vld [vmem:[%s49 + $0x40] sm:$0xff]
    %v1502 = vld [vmem:[%s49 + $0x48] sm:$0xff]
    %v1503 = vld [vmem:[%s49 + $0x50] sm:$0xff]
    %v1504 = vld [vmem:[%s49 + $0x58] sm:$0xff]
    %v1505 = vld [vmem:[%s49 + $0x60] sm:$0xff]
    %v1506 = vld [vmem:[%s49 + $0x68] sm:$0xff]
    %v1507 = vld [vmem:[%s49 + $0x70] sm:$0xff]
    %v1508 = vld [vmem:[%s49 + $0x78] sm:$0xff]
    %v1509 = vld [vmem:[%s49 + $0x80] sm:$0xff]
    %v1510 = vld [vmem:[%s49 + $0x88] sm:$0xff]
    %v1511 = vld [vmem:[%s49 + $0x90] sm:$0xff]
    %v1512 = vld [vmem:[%s49 + $0x98] sm:$0xff]
    %v1513 = vld [vmem:[%s49 + $0xa0] sm:$0xff]
    %v1514 = vld [vmem:[%s49 + $0xa8] sm:$0xff]
    %v1515 = vld [vmem:[%s49 + $0xb0] sm:$0xff]
    %v1516 = vld [vmem:[%s49 + $0xb8] sm:$0xff]
    %v1517 = vld [vmem:[%s49 + $0xc0] sm:$0xff]
    %v1518 = vld [vmem:[%s49 + $0xc8] sm:$0xff]
    %v1519 = vld [vmem:[%s49 + $0xd0] sm:$0xff]
    %v1520 = vld [vmem:[%s49 + $0xd8] sm:$0xff]
    %v1521 = vld [vmem:[%s49 + $0xe0] sm:$0xff]
    %v1522 = vld [vmem:[%s49 + $0xe8] sm:$0xff]
    %v1523 = vld [vmem:[%s49 + $0xf0] sm:$0xff]
    %v1524 = vld [vmem:[%s49 + $0xf8] sm:$0xff]
    %v1525 = vld [vmem:[%s49 + $0x100] sm:$0xff]
    %v1526 = vld [vmem:[%s49 + $0x108] sm:$0xff]
    %v1527 = vld [vmem:[%s49 + $0x110] sm:$0xff]
    %v1528 = vld [vmem:[%s49 + $0x118] sm:$0xff]
    %v1529 = vld [vmem:[%s49 + $0x120] sm:$0xff]
    %v1530 = vld [vmem:[%s49 + $0x128] sm:$0xff]
    %v1531 = vld [vmem:[%s49 + $0x130] sm:$0xff]
    %v1532 = vld [vmem:[%s49 + $0x138] sm:$0xff]
    %v1533 = vld [vmem:[%s49 + $0x140] sm:$0xff]
    %v1534 = vld [vmem:[%s49 + $0x148] sm:$0xff]
    %v1535 = vld [vmem:[%s49 + $0x150] sm:$0xff]
    %v1536 = vld [vmem:[%s49 + $0x158] sm:$0xff]
    %v1537 = vld [vmem:[%s49 + $0x160] sm:$0xff]
    %v1538 = vld [vmem:[%s49 + $0x168] sm:$0xff]
    %v1539 = vld [vmem:[%s49 + $0x170] sm:$0xff]
    %v1540 = vld [vmem:[%s49 + $0x178] sm:$0xff]
    %v1541 = vld [vmem:[%s49 + $0x180] sm:$0xff]
    %v1542 = vld [vmem:[%s49 + $0x188] sm:$0xff]
    %v1543 = vld [vmem:[%s49 + $0x190] sm:$0xff]
    %v1544 = vld [vmem:[%s49 + $0x198] sm:$0xff]
    %v1545 = vld [vmem:[%s49 + $0x1a0] sm:$0xff]
    %v1546 = vld [vmem:[%s49 + $0x1a8] sm:$0xff]
    %v1547 = vld [vmem:[%s49 + $0x1b0] sm:$0xff]
    %v1548 = vld [vmem:[%s49 + $0x1b8] sm:$0xff]
    %v1549 = vld [vmem:[%s49 + $0x1c0] sm:$0xff]
    %v1550 = vld [vmem:[%s49 + $0x1c8] sm:$0xff]
    %v1551 = vld [vmem:[%s49 + $0x1d0] sm:$0xff]
    %v1552 = vld [vmem:[%s49 + $0x1d8] sm:$0xff]
    %v1553 = vld [vmem:[%s49 + $0x1e0] sm:$0xff]
    %v1554 = vld [vmem:[%s49 + $0x1e8] sm:$0xff]
    %v1555 = vld [vmem:[%s49 + $0x1f0] sm:$0xff]
    %v1556 = vld [vmem:[%s49 + $0x1f8] sm:$0xff]
    %v1557 = vld [vmem:[%s49 + $0x200] sm:$0xff]
    %v1558 = vld [vmem:[%s49 + $0x208] sm:$0xff]
    %v1559 = vld [vmem:[%s49 + $0x210] sm:$0xff]
    %v1560 = vld [vmem:[%s49 + $0x218] sm:$0xff]
    %v1561 = vld [vmem:[%s49 + $0x220] sm:$0xff]
    %v1562 = vld [vmem:[%s49 + $0x228] sm:$0xff]
    %v1563 = vld [vmem:[%s49 + $0x230] sm:$0xff]
    %v1564 = vld [vmem:[%s49 + $0x238] sm:$0xff]
    %v1565 = vld [vmem:[#allocation29] sm:$0x7]
    %v1567 = vlaneseq
    %v1568 = vshrl.u32 %v1567, 7
    %v1569 = vsub.s32 0, %v1568
    %v1570 = vrot.slane %v1565, %v1569
    %v1571 = vlaneseq
    %v1572 = vshrl.u32 %v1571, 7
    %v1573 = vsub.s32 1, %v1572
    %v1574 = vrot.slane %v1565, %v1573
    %v1575 = vlaneseq
    %v1576 = vshrl.u32 %v1575, 7
    %v1577 = vsub.s32 2, %v1576
    %v1578 = vrot.slane %v1565, %v1577
    %v1583 = vsel %vm582, %v1492, 0
    %1585 = vmatprep.subr.mxu0 %v1494
    %1586 = vmatpush1.msra.mxu0 %v1493
    %1587 = vmatprep.subr.mxu0 %v1497
    %1588 = vmatpush1.msra.mxu0 %v1496
    %1589 = vmatprep.subr.mxu0 %v1500
    %1590 = vmatpush1.msra.mxu0 %v1499
    %1591 = vmatprep.subr.mxu0 %v1503
    %1592 = vmatpush1.msra.mxu0 %v1502
    %1593 = vmatprep.subr.mxu0 %v1506
    %1594 = vmatpush1.msra.mxu0 %v1505
    %1595 = vmatprep.subr.mxu0 %v1509
    %1596 = vmatpush1.msra.mxu0 %v1508
    %1597 = vmatprep.subr.mxu0 %v1512
    %1598 = vmatpush1.msra.mxu0 %v1511
    %1599 = vmatprep.subr.mxu0 %v1515
    %1600 = vmatpush1.msra.mxu0 %v1514
    %1601 = vmatprep.subr.mxu0 %v1518
    %1602 = vmatpush1.msra.mxu0 %v1517
    %1603 = vmatprep.subr.mxu0 %v1521
    %1604 = vmatpush1.msra.mxu0 %v1520
    %1605 = vmatprep.subr.mxu0 %v1524
    %1606 = vmatpush1.msra.mxu0 %v1523
    %1607 = vmatprep.subr.mxu0 %v1527
    %1608 = vmatpush1.msra.mxu0 %v1526
    %1609 = vmatprep.subr.mxu0 %v1530
    %1610 = vmatpush1.msra.mxu0 %v1529
    %1611 = vmatprep.subr.mxu0 %v1533
    %1612 = vmatpush1.msra.mxu0 %v1532
    %1613 = vmatprep.subr.mxu0 %v1536
    %1614 = vmatpush1.msra.mxu0 %v1535
    %1615 = vmatprep.subr.mxu0 %v1539
    %1616 = vmatpush1.msra.mxu0 %v1538
    %1617 = vmatprep.subr.mxu0 %v1542
    %1618 = vmatpush1.msra.mxu0 %v1541
    %1619 = vmatprep.subr.mxu0 %v1545
    %1620 = vmatpush1.msra.mxu0 %v1544
    %1621 = vmatprep.subr.mxu0 %v1548
    %1622 = vmatpush1.msra.mxu0 %v1547
    %1623 = vmatprep.subr.mxu0 %v1551
    %1624 = vmatpush1.msra.mxu0 %v1550
    %1625 = vmatprep.subr.mxu0 %v1554
    %1626 = vmatpush1.msra.mxu0 %v1553
    %1627 = vmatprep.subr.mxu0 %v1557
    %1628 = vmatpush1.msra.mxu0 %v1556
    %1629 = vmatprep.subr.mxu0 %v1560
    %1630 = vmatpush1.msra.mxu0 %v1559
    %1631 = vmatprep.subr.mxu0 %v1563
    %1632 = vmatpush1.msra.mxu0 %v1562
    %1633 = vmatprep.subr.mxu0 0.0
    %1634 = vmatpush1.msra.mxu0 0.0
    %1635 = vmatprep.subr.mxu0 0.0
    %1636 = vmatpush1.msra.mxu0 0.0
    %1637 = vmatprep.subr.mxu0 0.0
    %1638 = vmatpush1.msra.mxu0 0.0
    %1639 = vmatprep.subr.mxu0 0.0
    %1640 = vmatpush1.msra.mxu0 0.0
    %1641 = vmatprep.subr.mxu0 0.0
    %1642 = vmatpush1.msra.mxu0 0.0
    %1643 = vmatprep.subr.mxu0 0.0
    %1644 = vmatpush1.msra.mxu0 0.0
    %1645 = vmatprep.subr.mxu0 0.0
    %1646 = vmatpush1.msra.mxu0 0.0
    %1647 = vmatprep.subr.mxu0 0.0
    %1648 = vmatpush1.msra.mxu0 0.0
    %1649 = vmatprep.mubr.f32.mxu0 %v1583
    %1650 = vmatmul.mubr.f32.gmra.mrb[0].mxu0 %v1491
    %v1651 = vpop.f32.mrb[0].mxu0
    %v1652 = vadd.f32 %v1570, %v1651
    %v1653 = vpop.f32.mrb[0].mxu0
    %v1654 = vadd.f32 %v1574, %v1653
    %1655 = vdwg.mxu0
    %1656 = vmatprep.subr.mxu0 0.0
    %1657 = vmatpush1.msra.mxu0 %v1495
    %1658 = vmatprep.subr.mxu0 0.0
    %1659 = vmatpush1.msra.mxu0 %v1498
    %1660 = vmatprep.subr.mxu0 0.0
    %1661 = vmatpush1.msra.mxu0 %v1501
    %1662 = vmatprep.subr.mxu0 0.0
    %1663 = vmatpush1.msra.mxu0 %v1504
    %1664 = vmatprep.subr.mxu0 0.0
    %1665 = vmatpush1.msra.mxu0 %v1507
    %1666 = vmatprep.subr.mxu0 0.0
    %1667 = vmatpush1.msra.mxu0 %v1510
    %1668 = vmatprep.subr.mxu0 0.0
    %1669 = vmatpush1.msra.mxu0 %v1513
    %1670 = vmatprep.subr.mxu0 0.0
    %1671 = vmatpush1.msra.mxu0 %v1516
    %1672 = vmatprep.subr.mxu0 0.0
    %1673 = vmatpush1.msra.mxu0 %v1519
    %1674 = vmatprep.subr.mxu0 0.0
    %1675 = vmatpush1.msra.mxu0 %v1522
    %1676 = vmatprep.subr.mxu0 0.0
    %1677 = vmatpush1.msra.mxu0 %v1525
    %1678 = vmatprep.subr.mxu0 0.0
    %1679 = vmatpush1.msra.mxu0 %v1528
    %1680 = vmatprep.subr.mxu0 0.0
    %1681 = vmatpush1.msra.mxu0 %v1531
    %1682 = vmatprep.subr.mxu0 0.0
    %1683 = vmatpush1.msra.mxu0 %v1534
    %1684 = vmatprep.subr.mxu0 0.0
    %1685 = vmatpush1.msra.mxu0 %v1537
    %1686 = vmatprep.subr.mxu0 0.0
    %1687 = vmatpush1.msra.mxu0 %v1540
    %1688 = vmatprep.subr.mxu0 0.0
    %1689 = vmatpush1.msra.mxu0 %v1543
    %1690 = vmatprep.subr.mxu0 0.0
    %1691 = vmatpush1.msra.mxu0 %v1546
    %1692 = vmatprep.subr.mxu0 0.0
    %1693 = vmatpush1.msra.mxu0 %v1549
    %1694 = vmatprep.subr.mxu0 0.0
    %1695 = vmatpush1.msra.mxu0 %v1552
    %1696 = vmatprep.subr.mxu0 0.0
    %1697 = vmatpush1.msra.mxu0 %v1555
    %1698 = vmatprep.subr.mxu0 0.0
    %1699 = vmatpush1.msra.mxu0 %v1558
    %1700 = vmatprep.subr.mxu0 0.0
    %1701 = vmatpush1.msra.mxu0 %v1561
    %1702 = vmatprep.subr.mxu0 0.0
    %1703 = vmatpush1.msra.mxu0 %v1564
    %1704 = vmatprep.subr.mxu0 0.0
    %1705 = vmatpush1.msra.mxu0 0.0
    %1706 = vmatprep.subr.mxu0 0.0
    %1707 = vmatpush1.msra.mxu0 0.0
    %1708 = vmatprep.subr.mxu0 0.0
    %1709 = vmatpush1.msra.mxu0 0.0
    %1710 = vmatprep.subr.mxu0 0.0
    %1711 = vmatpush1.msra.mxu0 0.0
    %1712 = vmatprep.subr.mxu0 0.0
    %1713 = vmatpush1.msra.mxu0 0.0
    %1714 = vmatprep.subr.mxu0 0.0
    %1715 = vmatpush1.msra.mxu0 0.0
    %1716 = vmatprep.subr.mxu0 0.0
    %1717 = vmatpush1.msra.mxu0 0.0
    %1718 = vmatprep.subr.mxu0 0.0
    %1719 = vmatpush1.msra.mxu0 0.0
    %1720 = vmatprep.mubr.f32.mxu0 %v1583
    %1721 = vmatmul.mubr.f32.gmra.mrb[0].mxu0 %v1491
    %v1722 = vpop.f32.mrb[0].mxu0
    %v1723 = vadd.f32 %v1578, %v1722
    %v1724 = vpop.f32.mrb[0].mxu0
    %1725 = vdwg.mxu0
    %v1726 = vmul.f32 %v1652, 0.01
    %v1727 = vmul.f32 %v1654, 0.01
    %v1728 = vmul.f32 %v1723, 0.01
    %v1729 = vmax.f32 %v1652, %v1726
    %v1730 = vmax.f32 %v1654, %v1727
    %v1731 = vmax.f32 %v1723, %v1728
    %v1732 = vld [vmem:[#allocation31] sm:$0xff]
    %v1733 = vld [vmem:[#allocation31 + $0x8] sm:$0xff]
    %v1734 = vld [vmem:[#allocation31 + $0x10] sm:$0xff]
    %v1735 = vld [vmem:[#allocation31 + $0x18] sm:$0xff]
    %v1736 = vld [vmem:[#allocation31 + $0x20] sm:$0xff]
    %v1737 = vld [vmem:[#allocation31 + $0x28] sm:$0xff]
    %v1738 = vld [vmem:[#allocation31 + $0x30] sm:$0xff]
    %v1739 = vld [vmem:[#allocation31 + $0x38] sm:$0xff]
    %v1740 = vld [vmem:[#allocation31 + $0x40] sm:$0xff]
    %v1741 = vld [vmem:[#allocation31 + $0x48] sm:$0xff]
    %v1742 = vld [vmem:[#allocation31 + $0x50] sm:$0xff]
    %v1743 = vld [vmem:[#allocation31 + $0x58] sm:$0xff]
    %v1744 = vld [vmem:[#allocation31 + $0x60] sm:$0xff]
    %v1745 = vld [vmem:[#allocation31 + $0x68] sm:$0xff]
    %v1746 = vld [vmem:[#allocation31 + $0x70] sm:$0xff]
    %v1747 = vld [vmem:[#allocation31 + $0x78] sm:$0xff]
    %v1748 = vld [vmem:[#allocation31 + $0x80] sm:$0xff]
    %v1749 = vld [vmem:[#allocation31 + $0x88] sm:$0xff]
    %v1750 = vld [vmem:[#allocation31 + $0x90] sm:$0xff]
    %v1751 = vld [vmem:[#allocation31 + $0x98] sm:$0xff]
    %v1752 = vld [vmem:[#allocation31 + $0xa0] sm:$0xff]
    %v1753 = vld [vmem:[#allocation31 + $0xa8] sm:$0xff]
    %v1754 = vld [vmem:[#allocation31 + $0xb0] sm:$0xff]
    %v1755 = vld [vmem:[#allocation31 + $0xb8] sm:$0xff]
    %v1756 = vld [vmem:[#allocation31 + $0xc0] sm:$0xff]
    %v1757 = vld [vmem:[#allocation31 + $0xc8] sm:$0xff]
    %v1758 = vld [vmem:[#allocation31 + $0xd0] sm:$0xff]
    %v1759 = vld [vmem:[#allocation31 + $0xd8] sm:$0xff]
    %v1760 = vld [vmem:[#allocation31 + $0xe0] sm:$0xff]
    %v1761 = vld [vmem:[#allocation31 + $0xe8] sm:$0xff]
    %v1762 = vld [vmem:[#allocation31 + $0xf0] sm:$0xff]
    %v1763 = vld [vmem:[#allocation31 + $0xf8] sm:$0xff]
    %v1764 = vld [vmem:[#allocation31 + $0x100] sm:$0xff]
    %v1765 = vld [vmem:[#allocation31 + $0x108] sm:$0xff]
    %v1766 = vld [vmem:[#allocation31 + $0x110] sm:$0xff]
    %v1767 = vld [vmem:[#allocation31 + $0x118] sm:$0xff]
    %v1768 = vld [vmem:[#allocation31 + $0x120] sm:$0xff]
    %v1769 = vld [vmem:[#allocation31 + $0x128] sm:$0xff]
    %v1770 = vld [vmem:[#allocation31 + $0x130] sm:$0xff]
    %v1771 = vld [vmem:[#allocation31 + $0x138] sm:$0xff]
    %v1772 = vld [vmem:[#allocation31 + $0x140] sm:$0xff]
    %v1773 = vld [vmem:[#allocation31 + $0x148] sm:$0xff]
    %v1774 = vld [vmem:[#allocation31 + $0x150] sm:$0xff]
    %v1775 = vld [vmem:[#allocation31 + $0x158] sm:$0xff]
    %v1776 = vld [vmem:[#allocation31 + $0x160] sm:$0xff]
    %v1777 = vld [vmem:[#allocation31 + $0x168] sm:$0xff]
    %v1778 = vld [vmem:[#allocation31 + $0x170] sm:$0xff]
    %v1779 = vld [vmem:[#allocation31 + $0x178] sm:$0xff]
    %v1780 = vld [vmem:[#allocation31 + $0x180] sm:$0xff]
    %v1781 = vld [vmem:[#allocation31 + $0x188] sm:$0xff]
    %v1782 = vld [vmem:[#allocation31 + $0x190] sm:$0xff]
    %v1783 = vld [vmem:[#allocation31 + $0x198] sm:$0xff]
    %v1784 = vld [vmem:[#allocation31 + $0x1a0] sm:$0xff]
    %v1785 = vld [vmem:[#allocation31 + $0x1a8] sm:$0xff]
    %v1786 = vld [vmem:[#allocation31 + $0x1b0] sm:$0xff]
    %v1787 = vld [vmem:[#allocation31 + $0x1b8] sm:$0xff]
    %v1788 = vld [vmem:[#allocation31 + $0x1c0] sm:$0xff]
    %v1789 = vld [vmem:[#allocation31 + $0x1c8] sm:$0xff]
    %v1790 = vld [vmem:[#allocation31 + $0x1d0] sm:$0xff]
    %v1791 = vld [vmem:[#allocation31 + $0x1d8] sm:$0xff]
    %v1792 = vld [vmem:[#allocation31 + $0x1e0] sm:$0xff]
    %v1793 = vld [vmem:[#allocation31 + $0x1e8] sm:$0xff]
    %v1794 = vld [vmem:[#allocation31 + $0x1f0] sm:$0xff]
    %v1795 = vld [vmem:[#allocation31 + $0x1f8] sm:$0xff]
    %v1796 = vld [vmem:[#allocation31 + $0x200] sm:$0xff]
    %v1797 = vld [vmem:[#allocation31 + $0x208] sm:$0xff]
    %v1798 = vld [vmem:[#allocation31 + $0x210] sm:$0xff]
    %v1799 = vld [vmem:[#allocation31 + $0x218] sm:$0xff]
    %v1800 = vld [vmem:[#allocation31 + $0x220] sm:$0xff]
    %v1801 = vld [vmem:[#allocation31 + $0x228] sm:$0xff]
    %v1802 = vld [vmem:[#allocation31 + $0x230] sm:$0xff]
    %v1803 = vld [vmem:[#allocation31 + $0x238] sm:$0xff]
    %v1804 = vld [vmem:[#allocation31 + $0x240] sm:$0xff]
    %v1805 = vld [vmem:[#allocation31 + $0x248] sm:$0xff]
    %v1806 = vld [vmem:[#allocation31 + $0x250] sm:$0xff]
    %v1807 = vld [vmem:[#allocation31 + $0x258] sm:$0xff]
    %v1808 = vld [vmem:[#allocation31 + $0x260] sm:$0xff]
    %v1809 = vld [vmem:[#allocation31 + $0x268] sm:$0xff]
    %v1810 = vld [vmem:[#allocation31 + $0x270] sm:$0xff]
    %v1811 = vld [vmem:[#allocation31 + $0x278] sm:$0xff]
    %v1812 = vld [vmem:[#allocation31 + $0x280] sm:$0xff]
    %v1813 = vld [vmem:[#allocation31 + $0x288] sm:$0xff]
    %v1814 = vld [vmem:[#allocation31 + $0x290] sm:$0xff]
    %v1815 = vld [vmem:[#allocation31 + $0x298] sm:$0xff]
    %v1816 = vld [vmem:[#allocation31 + $0x2a0] sm:$0xff]
    %v1817 = vld [vmem:[#allocation31 + $0x2a8] sm:$0xff]
    %v1818 = vld [vmem:[#allocation31 + $0x2b0] sm:$0xff]
    %v1819 = vld [vmem:[#allocation31 + $0x2b8] sm:$0xff]
    %v1820 = vld [vmem:[#allocation31 + $0x2c0] sm:$0xff]
    %v1821 = vld [vmem:[#allocation31 + $0x2c8] sm:$0xff]
    %v1822 = vld [vmem:[#allocation31 + $0x2d0] sm:$0xff]
    %v1823 = vld [vmem:[#allocation31 + $0x2d8] sm:$0xff]
    %v1824 = vld [vmem:[#allocation31 + $0x2e0] sm:$0xff]
    %v1825 = vld [vmem:[#allocation31 + $0x2e8] sm:$0xff]
    %v1826 = vld [vmem:[#allocation31 + $0x2f0] sm:$0xff]
    %v1827 = vld [vmem:[#allocation31 + $0x2f8] sm:$0xff]
    %v1828 = vld [vmem:[#allocation31 + $0x300] sm:$0xff]
    %v1829 = vld [vmem:[#allocation31 + $0x308] sm:$0xff]
    %v1830 = vld [vmem:[#allocation31 + $0x310] sm:$0xff]
    %v1831 = vld [vmem:[#allocation31 + $0x318] sm:$0xff]
    %v1832 = vld [vmem:[#allocation31 + $0x320] sm:$0xff]
    %v1833 = vld [vmem:[#allocation31 + $0x328] sm:$0xff]
    %v1834 = vld [vmem:[#allocation31 + $0x330] sm:$0xff]
    %v1835 = vld [vmem:[#allocation31 + $0x338] sm:$0xff]
    %v1836 = vld [vmem:[#allocation31 + $0x340] sm:$0xff]
    %v1837 = vld [vmem:[#allocation31 + $0x348] sm:$0xff]
    %v1838 = vld [vmem:[#allocation31 + $0x350] sm:$0xff]
    %v1839 = vld [vmem:[#allocation31 + $0x358] sm:$0xff]
    %v1840 = vld [vmem:[#allocation31 + $0x360] sm:$0xff]
    %v1841 = vld [vmem:[#allocation31 + $0x368] sm:$0xff]
    %v1842 = vld [vmem:[#allocation31 + $0x370] sm:$0xff]
    %v1843 = vld [vmem:[#allocation31 + $0x378] sm:$0xff]
    %v1844 = vld [vmem:[#allocation31 + $0x380] sm:$0xff]
    %v1845 = vld [vmem:[#allocation31 + $0x388] sm:$0xff]
    %v1846 = vld [vmem:[#allocation31 + $0x390] sm:$0xff]
    %v1847 = vld [vmem:[#allocation31 + $0x398] sm:$0xff]
    %v1848 = vld [vmem:[#allocation31 + $0x3a0] sm:$0xff]
    %v1849 = vld [vmem:[#allocation31 + $0x3a8] sm:$0xff]
    %v1850 = vld [vmem:[#allocation31 + $0x3b0] sm:$0xff]
    %v1851 = vld [vmem:[#allocation31 + $0x3b8] sm:$0xff]
    %v1852 = vld [vmem:[#allocation31 + $0x3c0] sm:$0xff]
    %v1853 = vld [vmem:[#allocation31 + $0x3c8] sm:$0xff]
    %v1854 = vld [vmem:[#allocation31 + $0x3d0] sm:$0xff]
    %v1855 = vld [vmem:[#allocation31 + $0x3d8] sm:$0xff]
    %v1856 = vld [vmem:[#allocation31 + $0x3e0] sm:$0xff]
    %v1857 = vld [vmem:[#allocation31 + $0x3e8] sm:$0xff]
    %v1858 = vld [vmem:[#allocation31 + $0x3f0] sm:$0xff]
    %v1859 = vld [vmem:[#allocation31 + $0x3f8] sm:$0xff]
    %v1860 = vld [vmem:[#allocation31 + $0x400] sm:$0xff]
    %v1861 = vld [vmem:[#allocation31 + $0x408] sm:$0xff]
    %v1862 = vld [vmem:[#allocation31 + $0x410] sm:$0xff]
    %v1863 = vld [vmem:[#allocation31 + $0x418] sm:$0xff]
    %v1864 = vld [vmem:[#allocation31 + $0x420] sm:$0xff]
    %v1865 = vld [vmem:[#allocation31 + $0x428] sm:$0xff]
    %v1866 = vld [vmem:[#allocation31 + $0x430] sm:$0xff]
    %v1867 = vld [vmem:[#allocation31 + $0x438] sm:$0xff]
    %v1868 = vld [vmem:[#allocation31 + $0x440] sm:$0xff]
    %v1869 = vld [vmem:[#allocation31 + $0x448] sm:$0xff]
    %v1870 = vld [vmem:[#allocation31 + $0x450] sm:$0xff]
    %v1871 = vld [vmem:[#allocation31 + $0x458] sm:$0xff]
    %v1872 = vld [vmem:[#allocation31 + $0x460] sm:$0xff]
    %v1873 = vld [vmem:[#allocation31 + $0x468] sm:$0xff]
    %v1874 = vld [vmem:[#allocation31 + $0x470] sm:$0xff]
    %v1875 = vld [vmem:[#allocation31 + $0x478] sm:$0xff]
    %v1876 = vld [vmem:[%s55] sm:$0x7]
    %v1878 = vlaneseq
    %v1879 = vshrl.u32 %v1878, 7
    %v1880 = vsub.s32 0, %v1879
    %v1881 = vrot.slane %v1876, %v1880
    %v1882 = vlaneseq
    %v1883 = vshrl.u32 %v1882, 7
    %v1884 = vsub.s32 1, %v1883
    %v1885 = vrot.slane %v1876, %v1884
    %v1886 = vlaneseq
    %v1887 = vshrl.u32 %v1886, 7
    %v1888 = vsub.s32 2, %v1887
    %v1889 = vrot.slane %v1876, %v1888
    %1893 = vmatprep.subr.mxu0 %v1733
    %1894 = vmatpush1.msra.mxu0 %v1732
    %1895 = vmatprep.subr.mxu0 %v1736
    %1896 = vmatpush1.msra.mxu0 %v1735
    %1897 = vmatprep.subr.mxu0 %v1739
    %1898 = vmatpush1.msra.mxu0 %v1738
    %1899 = vmatprep.subr.mxu0 %v1742
    %1900 = vmatpush1.msra.mxu0 %v1741
    %1901 = vmatprep.subr.mxu0 %v1745
    %1902 = vmatpush1.msra.mxu0 %v1744
    %1903 = vmatprep.subr.mxu0 %v1748
    %1904 = vmatpush1.msra.mxu0 %v1747
    %1905 = vmatprep.subr.mxu0 %v1751
    %1906 = vmatpush1.msra.mxu0 %v1750
    %1907 = vmatprep.subr.mxu0 %v1754
    %1908 = vmatpush1.msra.mxu0 %v1753
    %1909 = vmatprep.subr.mxu0 %v1757
    %1910 = vmatpush1.msra.mxu0 %v1756
    %1911 = vmatprep.subr.mxu0 %v1760
    %1912 = vmatpush1.msra.mxu0 %v1759
    %1913 = vmatprep.subr.mxu0 %v1763
    %1914 = vmatpush1.msra.mxu0 %v1762
    %1915 = vmatprep.subr.mxu0 %v1766
    %1916 = vmatpush1.msra.mxu0 %v1765
    %1917 = vmatprep.subr.mxu0 %v1769
    %1918 = vmatpush1.msra.mxu0 %v1768
    %1919 = vmatprep.subr.mxu0 %v1772
    %1920 = vmatpush1.msra.mxu0 %v1771
    %1921 = vmatprep.subr.mxu0 %v1775
    %1922 = vmatpush1.msra.mxu0 %v1774
    %1923 = vmatprep.subr.mxu0 %v1778
    %1924 = vmatpush1.msra.mxu0 %v1777
    %1925 = vmatprep.subr.mxu0 %v1781
    %1926 = vmatpush1.msra.mxu0 %v1780
    %1927 = vmatprep.subr.mxu0 %v1784
    %1928 = vmatpush1.msra.mxu0 %v1783
    %1929 = vmatprep.subr.mxu0 %v1787
    %1930 = vmatpush1.msra.mxu0 %v1786
    %1931 = vmatprep.subr.mxu0 %v1790
    %1932 = vmatpush1.msra.mxu0 %v1789
    %1933 = vmatprep.subr.mxu0 %v1793
    %1934 = vmatpush1.msra.mxu0 %v1792
    %1935 = vmatprep.subr.mxu0 %v1796
    %1936 = vmatpush1.msra.mxu0 %v1795
    %1937 = vmatprep.subr.mxu0 %v1799
    %1938 = vmatpush1.msra.mxu0 %v1798
    %1939 = vmatprep.subr.mxu0 %v1802
    %1940 = vmatpush1.msra.mxu0 %v1801
    %1941 = vmatprep.subr.mxu0 %v1805
    %1942 = vmatpush1.msra.mxu0 %v1804
    %1943 = vmatprep.subr.mxu0 %v1808
    %1944 = vmatpush1.msra.mxu0 %v1807
    %1945 = vmatprep.subr.mxu0 %v1811
    %1946 = vmatpush1.msra.mxu0 %v1810
    %1947 = vmatprep.subr.mxu0 %v1814
    %1948 = vmatpush1.msra.mxu0 %v1813
    %1949 = vmatprep.subr.mxu0 %v1817
    %1950 = vmatpush1.msra.mxu0 %v1816
    %1951 = vmatprep.subr.mxu0 %v1820
    %1952 = vmatpush1.msra.mxu0 %v1819
    %1953 = vmatprep.subr.mxu0 %v1823
    %1954 = vmatpush1.msra.mxu0 %v1822
    %1955 = vmatprep.subr.mxu0 %v1826
    %1956 = vmatpush1.msra.mxu0 %v1825
    %1957 = vmatprep.mubr.f32.mxu0 %v1730
    %1958 = vmatmul.mubr.f32.gmra.mrb[0].mxu0 %v1729
    %v1959 = vpop.f32.mrb[0].mxu0
    %v1960 = vadd.f32 %v1881, %v1959
    %v1961 = vpop.f32.mrb[0].mxu0
    %v1962 = vadd.f32 %v1885, %v1961
    %1963 = vdwg.mxu0
    %1964 = vmatprep.subr.mxu0 %v1829
    %1965 = vmatpush1.msra.mxu0 %v1828
    %1966 = vmatprep.subr.mxu0 %v1832
    %1967 = vmatpush1.msra.mxu0 %v1831
    %1968 = vmatprep.subr.mxu0 %v1835
    %1969 = vmatpush1.msra.mxu0 %v1834
    %1970 = vmatprep.subr.mxu0 %v1838
    %1971 = vmatpush1.msra.mxu0 %v1837
    %1972 = vmatprep.subr.mxu0 %v1841
    %1973 = vmatpush1.msra.mxu0 %v1840
    %1974 = vmatprep.subr.mxu0 %v1844
    %1975 = vmatpush1.msra.mxu0 %v1843
    %1976 = vmatprep.subr.mxu0 %v1847
    %1977 = vmatpush1.msra.mxu0 %v1846
    %1978 = vmatprep.subr.mxu0 %v1850
    %1979 = vmatpush1.msra.mxu0 %v1849
    %1980 = vmatprep.subr.mxu0 %v1853
    %1981 = vmatpush1.msra.mxu0 %v1852
    %1982 = vmatprep.subr.mxu0 %v1856
    %1983 = vmatpush1.msra.mxu0 %v1855
    %1984 = vmatprep.subr.mxu0 %v1859
    %1985 = vmatpush1.msra.mxu0 %v1858
    %1986 = vmatprep.subr.mxu0 %v1862
    %1987 = vmatpush1.msra.mxu0 %v1861
    %1988 = vmatprep.subr.mxu0 %v1865
    %1989 = vmatpush1.msra.mxu0 %v1864
    %1990 = vmatprep.subr.mxu0 %v1868
    %1991 = vmatpush1.msra.mxu0 %v1867
    %1992 = vmatprep.subr.mxu0 %v1871
    %1993 = vmatpush1.msra.mxu0 %v1870
    %1994 = vmatprep.subr.mxu0 %v1874
    %1995 = vmatpush1.msra.mxu0 %v1873
    %1996 = vmatprep.subr.mxu0 0.0
    %1997 = vmatpush1.msra.mxu0 0.0
    %1998 = vmatprep.subr.mxu0 0.0
    %1999 = vmatpush1.msra.mxu0 0.0
    %2000 = vmatprep.subr.mxu0 0.0
    %2001 = vmatpush1.msra.mxu0 0.0
    %2002 = vmatprep.subr.mxu0 0.0
    %2003 = vmatpush1.msra.mxu0 0.0
    %2004 = vmatprep.subr.mxu0 0.0
    %2005 = vmatpush1.msra.mxu0 0.0
    %2006 = vmatprep.subr.mxu0 0.0
    %2007 = vmatpush1.msra.mxu0 0.0
    %2008 = vmatprep.subr.mxu0 0.0
    %2009 = vmatpush1.msra.mxu0 0.0
    %2010 = vmatprep.subr.mxu0 0.0
    %2011 = vmatpush1.msra.mxu0 0.0
    %2012 = vmatprep.subr.mxu0 0.0
    %2013 = vmatpush1.msra.mxu0 0.0
    %2014 = vmatprep.subr.mxu0 0.0
    %2015 = vmatpush1.msra.mxu0 0.0
    %2016 = vmatprep.subr.mxu0 0.0
    %2017 = vmatpush1.msra.mxu0 0.0
    %2018 = vmatprep.subr.mxu0 0.0
    %2019 = vmatpush1.msra.mxu0 0.0
    %2020 = vmatprep.subr.mxu0 0.0
    %2021 = vmatpush1.msra.mxu0 0.0
    %2022 = vmatprep.subr.mxu0 0.0
    %2023 = vmatpush1.msra.mxu0 0.0
    %2024 = vmatprep.subr.mxu0 0.0
    %2025 = vmatpush1.msra.mxu0 0.0
    %2026 = vmatprep.subr.mxu0 0.0
    %2027 = vmatpush1.msra.mxu0 0.0
    %2028 = vmatprep.mubr.f32.mxu0 0.0
    %2029 = vmatmul.mubr.f32.gmra.mrb[0].mxu0 %v1731
    %v2030 = vpop.f32.mrb[0].mxu0
    %v2031 = vadd.f32 %v1960, %v2030
    %v2032 = vpop.f32.mrb[0].mxu0
    %v2033 = vadd.f32 %v1962, %v2032
    %2034 = vdwg.mxu0
    %2035 = vmatprep.subr.mxu0 0.0
    %2036 = vmatpush1.msra.mxu0 %v1734
    %2037 = vmatprep.subr.mxu0 0.0
    %2038 = vmatpush1.msra.mxu0 %v1737
    %2039 = vmatprep.subr.mxu0 0.0
    %2040 = vmatpush1.msra.mxu0 %v1740
    %2041 = vmatprep.subr.mxu0 0.0
    %2042 = vmatpush1.msra.mxu0 %v1743
    %2043 = vmatprep.subr.mxu0 0.0
    %2044 = vmatpush1.msra.mxu0 %v1746
    %2045 = vmatprep.subr.mxu0 0.0
    %2046 = vmatpush1.msra.mxu0 %v1749
    %2047 = vmatprep.subr.mxu0 0.0
    %2048 = vmatpush1.msra.mxu0 %v1752
    %2049 = vmatprep.subr.mxu0 0.0
    %2050 = vmatpush1.msra.mxu0 %v1755
    %2051 = vmatprep.subr.mxu0 0.0
    %2052 = vmatpush1.msra.mxu0 %v1758
    %2053 = vmatprep.subr.mxu0 0.0
    %2054 = vmatpush1.msra.mxu0 %v1761
    %2055 = vmatprep.subr.mxu0 0.0
    %2056 = vmatpush1.msra.mxu0 %v1764
    %2057 = vmatprep.subr.mxu0 0.0
    %2058 = vmatpush1.msra.mxu0 %v1767
    %2059 = vmatprep.subr.mxu0 0.0
    %2060 = vmatpush1.msra.mxu0 %v1770
    %2061 = vmatprep.subr.mxu0 0.0
    %2062 = vmatpush1.msra.mxu0 %v1773
    %2063 = vmatprep.subr.mxu0 0.0
    %2064 = vmatpush1.msra.mxu0 %v1776
    %2065 = vmatprep.subr.mxu0 0.0
    %2066 = vmatpush1.msra.mxu0 %v1779
    %2067 = vmatprep.subr.mxu0 0.0
    %2068 = vmatpush1.msra.mxu0 %v1782
    %2069 = vmatprep.subr.mxu0 0.0
    %2070 = vmatpush1.msra.mxu0 %v1785
    %2071 = vmatprep.subr.mxu0 0.0
    %2072 = vmatpush1.msra.mxu0 %v1788
    %2073 = vmatprep.subr.mxu0 0.0
    %2074 = vmatpush1.msra.mxu0 %v1791
    %2075 = vmatprep.subr.mxu0 0.0
    %2076 = vmatpush1.msra.mxu0 %v1794
    %2077 = vmatprep.subr.mxu0 0.0
    %2078 = vmatpush1.msra.mxu0 %v1797
    %2079 = vmatprep.subr.mxu0 0.0
    %2080 = vmatpush1.msra.mxu0 %v1800
    %2081 = vmatprep.subr.mxu0 0.0
    %2082 = vmatpush1.msra.mxu0 %v1803
    %2083 = vmatprep.subr.mxu0 0.0
    %2084 = vmatpush1.msra.mxu0 %v1806
    %2085 = vmatprep.subr.mxu0 0.0
    %2086 = vmatpush1.msra.mxu0 %v1809
    %2087 = vmatprep.subr.mxu0 0.0
    %2088 = vmatpush1.msra.mxu0 %v1812
    %2089 = vmatprep.subr.mxu0 0.0
    %2090 = vmatpush1.msra.mxu0 %v1815
    %2091 = vmatprep.subr.mxu0 0.0
    %2092 = vmatpush1.msra.mxu0 %v1818
    %2093 = vmatprep.subr.mxu0 0.0
    %2094 = vmatpush1.msra.mxu0 %v1821
    %2095 = vmatprep.subr.mxu0 0.0
    %2096 = vmatpush1.msra.mxu0 %v1824
    %2097 = vmatprep.subr.mxu0 0.0
    %2098 = vmatpush1.msra.mxu0 %v1827
    %2099 = vmatprep.mubr.f32.mxu0 %v1730
    %2100 = vmatmul.mubr.f32.gmra.mrb[0].mxu0 %v1729
    %v2101 = vpop.f32.mrb[0].mxu0
    %v2102 = vadd.f32 %v1889, %v2101
    %v2103 = vpop.f32.mrb[0].mxu0
    %2104 = vdwg.mxu0
    %2105 = vmatprep.subr.mxu0 0.0
    %2106 = vmatpush1.msra.mxu0 %v1830
    %2107 = vmatprep.subr.mxu0 0.0
    %2108 = vmatpush1.msra.mxu0 %v1833
    %2109 = vmatprep.subr.mxu0 0.0
    %2110 = vmatpush1.msra.mxu0 %v1836
    %2111 = vmatprep.subr.mxu0 0.0
    %2112 = vmatpush1.msra.mxu0 %v1839
    %2113 = vmatprep.subr.mxu0 0.0
    %2114 = vmatpush1.msra.mxu0 %v1842
    %2115 = vmatprep.subr.mxu0 0.0
    %2116 = vmatpush1.msra.mxu0 %v1845
    %2117 = vmatprep.subr.mxu0 0.0
    %2118 = vmatpush1.msra.mxu0 %v1848
    %2119 = vmatprep.subr.mxu0 0.0
    %2120 = vmatpush1.msra.mxu0 %v1851
    %2121 = vmatprep.subr.mxu0 0.0
    %2122 = vmatpush1.msra.mxu0 %v1854
    %2123 = vmatprep.subr.mxu0 0.0
    %2124 = vmatpush1.msra.mxu0 %v1857
    %2125 = vmatprep.subr.mxu0 0.0
    %2126 = vmatpush1.msra.mxu0 %v1860
    %2127 = vmatprep.subr.mxu0 0.0
    %2128 = vmatpush1.msra.mxu0 %v1863
    %2129 = vmatprep.subr.mxu0 0.0
    %2130 = vmatpush1.msra.mxu0 %v1866
    %2131 = vmatprep.subr.mxu0 0.0
    %2132 = vmatpush1.msra.mxu0 %v1869
    %2133 = vmatprep.subr.mxu0 0.0
    %2134 = vmatpush1.msra.mxu0 %v1872
    %2135 = vmatprep.subr.mxu0 0.0
    %2136 = vmatpush1.msra.mxu0 %v1875
    %2137 = vmatprep.subr.mxu0 0.0
    %2138 = vmatpush1.msra.mxu0 0.0
    %2139 = vmatprep.subr.mxu0 0.0
    %2140 = vmatpush1.msra.mxu0 0.0
    %2141 = vmatprep.subr.mxu0 0.0
    %2142 = vmatpush1.msra.mxu0 0.0
    %2143 = vmatprep.subr.mxu0 0.0
    %2144 = vmatpush1.msra.mxu0 0.0
    %2145 = vmatprep.subr.mxu0 0.0
    %2146 = vmatpush1.msra.mxu0 0.0
    %2147 = vmatprep.subr.mxu0 0.0
    %2148 = vmatpush1.msra.mxu0 0.0
    %2149 = vmatprep.subr.mxu0 0.0
    %2150 = vmatpush1.msra.mxu0 0.0
    %2151 = vmatprep.subr.mxu0 0.0
    %2152 = vmatpush1.msra.mxu0 0.0
    %2153 = vmatprep.subr.mxu0 0.0
    %2154 = vmatpush1.msra.mxu0 0.0
    %2155 = vmatprep.subr.mxu0 0.0
    %2156 = vmatpush1.msra.mxu0 0.0
    %2157 = vmatprep.subr.mxu0 0.0
    %2158 = vmatpush1.msra.mxu0 0.0
    %2159 = vmatprep.subr.mxu0 0.0
    %2160 = vmatpush1.msra.mxu0 0.0
    %2161 = vmatprep.subr.mxu0 0.0
    %2162 = vmatpush1.msra.mxu0 0.0
    %2163 = vmatprep.subr.mxu0 0.0
    %2164 = vmatpush1.msra.mxu0 0.0
    %2165 = vmatprep.subr.mxu0 0.0
    %2166 = vmatpush1.msra.mxu0 0.0
    %2167 = vmatprep.subr.mxu0 0.0
    %2168 = vmatpush1.msra.mxu0 0.0
    %2169 = vmatprep.mubr.f32.mxu0 0.0
    %2170 = vmatmul.mubr.f32.gmra.mrb[0].mxu0 %v1731
    %v2171 = vpop.f32.mrb[0].mxu0
    %v2172 = vadd.f32 %v2102, %v2171
    %v2173 = vpop.f32.mrb[0].mxu0
    %2174 = vdwg.mxu0
    %v2175 = vmul.f32 %v2031, 0.01
    %v2176 = vmul.f32 %v2033, 0.01
    %v2177 = vmul.f32 %v2172, 0.01
    %v2178 = vmax.f32 %v2031, %v2175
    %v2179 = vmax.f32 %v2033, %v2176
    %v2180 = vmax.f32 %v2172, %v2177
    %v2181 = vld [vmem:[#allocation32] sm:$0xff]
    %v2182 = vld [vmem:[#allocation32 + $0x8] sm:$0xff]
    %v2183 = vld [vmem:[#allocation32 + $0x10] sm:$0xff]
    %v2184 = vld [vmem:[#allocation32 + $0x18] sm:$0xff]
    %v2185 = vld [vmem:[#allocation32 + $0x20] sm:$0xff]
    %v2186 = vld [vmem:[#allocation32 + $0x28] sm:$0xff]
    %v2187 = vld [vmem:[#allocation32 + $0x30] sm:$0xff]
    %v2188 = vld [vmem:[#allocation32 + $0x38] sm:$0xff]
    %v2189 = vld [vmem:[#allocation32 + $0x40] sm:$0xff]
    %v2190 = vld [vmem:[#allocation32 + $0x48] sm:$0xff]
    %v2191 = vld [vmem:[#allocation32 + $0x50] sm:$0xff]
    %v2192 = vld [vmem:[#allocation32 + $0x58] sm:$0xff]
    %v2193 = vld [vmem:[#allocation32 + $0x60] sm:$0xff]
    %v2194 = vld [vmem:[#allocation32 + $0x68] sm:$0xff]
    %v2195 = vld [vmem:[#allocation32 + $0x70] sm:$0xff]
    %v2196 = vld [vmem:[#allocation32 + $0x78] sm:$0xff]
    %v2197 = vld [vmem:[#allocation32 + $0x80] sm:$0xff]
    %v2198 = vld [vmem:[#allocation32 + $0x88] sm:$0xff]
    %v2199 = vld [vmem:[#allocation32 + $0x90] sm:$0xff]
    %v2200 = vld [vmem:[#allocation32 + $0x98] sm:$0xff]
    %v2201 = vld [vmem:[#allocation32 + $0xa0] sm:$0xff]
    %v2202 = vld [vmem:[#allocation32 + $0xa8] sm:$0xff]
    %v2203 = vld [vmem:[#allocation32 + $0xb0] sm:$0xff]
    %v2204 = vld [vmem:[#allocation32 + $0xb8] sm:$0xff]
    %v2205 = vld [vmem:[#allocation32 + $0xc0] sm:$0xff]
    %v2206 = vld [vmem:[#allocation32 + $0xc8] sm:$0xff]
    %v2207 = vld [vmem:[#allocation32 + $0xd0] sm:$0xff]
    %v2208 = vld [vmem:[#allocation32 + $0xd8] sm:$0xff]
    %v2209 = vld [vmem:[#allocation32 + $0xe0] sm:$0xff]
    %v2210 = vld [vmem:[#allocation32 + $0xe8] sm:$0xff]
    %v2211 = vld [vmem:[#allocation32 + $0xf0] sm:$0xff]
    %v2212 = vld [vmem:[#allocation32 + $0xf8] sm:$0xff]
    %v2213 = vld [vmem:[#allocation32 + $0x100] sm:$0xff]
    %v2214 = vld [vmem:[#allocation32 + $0x108] sm:$0xff]
    %v2215 = vld [vmem:[#allocation32 + $0x110] sm:$0xff]
    %v2216 = vld [vmem:[#allocation32 + $0x118] sm:$0xff]
    %v2217 = vld [vmem:[#allocation32 + $0x120] sm:$0xff]
    %v2218 = vld [vmem:[#allocation32 + $0x128] sm:$0xff]
    %v2219 = vld [vmem:[#allocation32 + $0x130] sm:$0xff]
    %v2220 = vld [vmem:[#allocation32 + $0x138] sm:$0xff]
    %v2221 = vld [vmem:[#allocation32 + $0x140] sm:$0xff]
    %v2222 = vld [vmem:[#allocation32 + $0x148] sm:$0xff]
    %v2223 = vld [vmem:[#allocation32 + $0x150] sm:$0xff]
    %v2224 = vld [vmem:[#allocation32 + $0x158] sm:$0xff]
    %v2225 = vld [vmem:[#allocation32 + $0x160] sm:$0xff]
    %v2226 = vld [vmem:[#allocation32 + $0x168] sm:$0xff]
    %v2227 = vld [vmem:[#allocation32 + $0x170] sm:$0xff]
    %v2228 = vld [vmem:[#allocation32 + $0x178] sm:$0xff]
    %v2229 = vld [vmem:[%s59] sm:$0x1]
    %v2231 = vlaneseq
    %v2232 = vshrl.u32 %v2231, 7
    %v2233 = vsub.s32 0, %v2232
    %v2234 = vrot.slane %v2229, %v2233
    %2236 = vmatprep.subr.mxu0 0.0
    %2237 = vmatpush1.msra.mxu0 %v2181
    %2238 = vmatprep.subr.mxu0 0.0
    %2239 = vmatpush1.msra.mxu0 %v2182
    %2240 = vmatprep.subr.mxu0 0.0
    %2241 = vmatpush1.msra.mxu0 %v2183
    %2242 = vmatprep.subr.mxu0 0.0
    %2243 = vmatpush1.msra.mxu0 %v2184
    %2244 = vmatprep.subr.mxu0 0.0
    %2245 = vmatpush1.msra.mxu0 %v2185
    %2246 = vmatprep.subr.mxu0 0.0
    %2247 = vmatpush1.msra.mxu0 %v2186
    %2248 = vmatprep.subr.mxu0 0.0
    %2249 = vmatpush1.msra.mxu0 %v2187
    %2250 = vmatprep.subr.mxu0 0.0
    %2251 = vmatpush1.msra.mxu0 %v2188
    %2252 = vmatprep.subr.mxu0 0.0
    %2253 = vmatpush1.msra.mxu0 %v2189
    %2254 = vmatprep.subr.mxu0 0.0
    %2255 = vmatpush1.msra.mxu0 %v2190
    %2256 = vmatprep.subr.mxu0 0.0
    %2257 = vmatpush1.msra.mxu0 %v2191
    %2258 = vmatprep.subr.mxu0 0.0
    %2259 = vmatpush1.msra.mxu0 %v2192
    %2260 = vmatprep.subr.mxu0 0.0
    %2261 = vmatpush1.msra.mxu0 %v2193
    %2262 = vmatprep.subr.mxu0 0.0
    %2263 = vmatpush1.msra.mxu0 %v2194
    %2264 = vmatprep.subr.mxu0 0.0
    %2265 = vmatpush1.msra.mxu0 %v2195
    %2266 = vmatprep.subr.mxu0 0.0
    %2267 = vmatpush1.msra.mxu0 %v2196
    %2268 = vmatprep.subr.mxu0 0.0
    %2269 = vmatpush1.msra.mxu0 %v2197
    %2270 = vmatprep.subr.mxu0 0.0
    %2271 = vmatpush1.msra.mxu0 %v2198
    %2272 = vmatprep.subr.mxu0 0.0
    %2273 = vmatpush1.msra.mxu0 %v2199
    %2274 = vmatprep.subr.mxu0 0.0
    %2275 = vmatpush1.msra.mxu0 %v2200
    %2276 = vmatprep.subr.mxu0 0.0
    %2277 = vmatpush1.msra.mxu0 %v2201
    %2278 = vmatprep.subr.mxu0 0.0
    %2279 = vmatpush1.msra.mxu0 %v2202
    %2280 = vmatprep.subr.mxu0 0.0
    %2281 = vmatpush1.msra.mxu0 %v2203
    %2282 = vmatprep.subr.mxu0 0.0
    %2283 = vmatpush1.msra.mxu0 %v2204
    %2284 = vmatprep.subr.mxu0 0.0
    %2285 = vmatpush1.msra.mxu0 %v2205
    %2286 = vmatprep.subr.mxu0 0.0
    %2287 = vmatpush1.msra.mxu0 %v2206
    %2288 = vmatprep.subr.mxu0 0.0
    %2289 = vmatpush1.msra.mxu0 %v2207
    %2290 = vmatprep.subr.mxu0 0.0
    %2291 = vmatpush1.msra.mxu0 %v2208
    %2292 = vmatprep.subr.mxu0 0.0
    %2293 = vmatpush1.msra.mxu0 %v2209
    %2294 = vmatprep.subr.mxu0 0.0
    %2295 = vmatpush1.msra.mxu0 %v2210
    %2296 = vmatprep.subr.mxu0 0.0
    %2297 = vmatpush1.msra.mxu0 %v2211
    %2298 = vmatprep.subr.mxu0 0.0
    %2299 = vmatpush1.msra.mxu0 %v2212
    %2300 = vmatprep.mubr.f32.mxu0 %v2179
    %2301 = vmatmul.mubr.f32.gmra.mrb[0].mxu0 %v2178
    %v2302 = vpop.f32.mrb[0].mxu0
    %v2303 = vadd.f32 %v2234, %v2302
    %v2304 = vpop.f32.mrb[0].mxu0
    %2305 = vdwg.mxu0
    %2306 = vmatprep.subr.mxu0 0.0
    %2307 = vmatpush1.msra.mxu0 %v2213
    %2308 = vmatprep.subr.mxu0 0.0
    %2309 = vmatpush1.msra.mxu0 %v2214
    %2310 = vmatprep.subr.mxu0 0.0
    %2311 = vmatpush1.msra.mxu0 %v2215
    %2312 = vmatprep.subr.mxu0 0.0
    %2313 = vmatpush1.msra.mxu0 %v2216
    %2314 = vmatprep.subr.mxu0 0.0
    %2315 = vmatpush1.msra.mxu0 %v2217
    %2316 = vmatprep.subr.mxu0 0.0
    %2317 = vmatpush1.msra.mxu0 %v2218
    %2318 = vmatprep.subr.mxu0 0.0
    %2319 = vmatpush1.msra.mxu0 %v2219
    %2320 = vmatprep.subr.mxu0 0.0
    %2321 = vmatpush1.msra.mxu0 %v2220
    %2322 = vmatprep.subr.mxu0 0.0
    %2323 = vmatpush1.msra.mxu0 %v2221
    %2324 = vmatprep.subr.mxu0 0.0
    %2325 = vmatpush1.msra.mxu0 %v2222
    %2326 = vmatprep.subr.mxu0 0.0
    %2327 = vmatpush1.msra.mxu0 %v2223
    %2328 = vmatprep.subr.mxu0 0.0
    %2329 = vmatpush1.msra.mxu0 %v2224
    %2330 = vmatprep.subr.mxu0 0.0
    %2331 = vmatpush1.msra.mxu0 %v2225
    %2332 = vmatprep.subr.mxu0 0.0
    %2333 = vmatpush1.msra.mxu0 %v2226
    %2334 = vmatprep.subr.mxu0 0.0
    %2335 = vmatpush1.msra.mxu0 %v2227
    %2336 = vmatprep.subr.mxu0 0.0
    %2337 = vmatpush1.msra.mxu0 %v2228
    %2338 = vmatprep.subr.mxu0 0.0
    %2339 = vmatpush1.msra.mxu0 0.0
    %2340 = vmatprep.subr.mxu0 0.0
    %2341 = vmatpush1.msra.mxu0 0.0
    %2342 = vmatprep.subr.mxu0 0.0
    %2343 = vmatpush1.msra.mxu0 0.0
    %2344 = vmatprep.subr.mxu0 0.0
    %2345 = vmatpush1.msra.mxu0 0.0
    %2346 = vmatprep.subr.mxu0 0.0
    %2347 = vmatpush1.msra.mxu0 0.0
    %2348 = vmatprep.subr.mxu0 0.0
    %2349 = vmatpush1.msra.mxu0 0.0
    %2350 = vmatprep.subr.mxu0 0.0
    %2351 = vmatpush1.msra.mxu0 0.0
    %2352 = vmatprep.subr.mxu0 0.0
    %2353 = vmatpush1.msra.mxu0 0.0
    %2354 = vmatprep.subr.mxu0 0.0
    %2355 = vmatpush1.msra.mxu0 0.0
    %2356 = vmatprep.subr.mxu0 0.0
    %2357 = vmatpush1.msra.mxu0 0.0
    %2358 = vmatprep.subr.mxu0 0.0
    %2359 = vmatpush1.msra.mxu0 0.0
    %2360 = vmatprep.subr.mxu0 0.0
    %2361 = vmatpush1.msra.mxu0 0.0
    %2362 = vmatprep.subr.mxu0 0.0
    %2363 = vmatpush1.msra.mxu0 0.0
    %2364 = vmatprep.subr.mxu0 0.0
    %2365 = vmatpush1.msra.mxu0 0.0
    %2366 = vmatprep.subr.mxu0 0.0
    %2367 = vmatpush1.msra.mxu0 0.0
    %2368 = vmatprep.subr.mxu0 0.0
    %2369 = vmatpush1.msra.mxu0 0.0
    %2370 = vmatprep.mubr.f32.mxu0 0.0
    %2371 = vmatmul.mubr.f32.gmra.mrb[0].mxu0 %v2180
    %v2372 = vpop.f32.mrb[0].mxu0
    %v2373 = vadd.f32 %v2303, %v2372
    %v2374 = vpop.f32.mrb[0].mxu0
    %2375 = vdwg.mxu0
    %v2376 = vxor.u32 %v2373, 2147483648
    %v2377 = vmul.f32 %v2376, 1.442695
    %v2378 = vpow.pop %v2377
    %v2379 = vadd.f32 %v2378, 1.0
    %v2380 = vrcp.pop %v2379
    %v2381 = vmul.f32 1.0, %v2380
    %v2382 = vld [vmem:[%s61] sm:$0x1]
    %v2384 = vlaneseq
    %v2385 = vshrl.u32 %v2384, 7
    %v2386 = vsub.s32 0, %v2385
    %v2387 = vrot.slane %v2382, %v2386
    %v2389 = vmul.f32 %v2381, %v2387
    %v2390 = vld [vmem:[%s63] sm:$0x1]
    %v2392 = vlaneseq
    %v2393 = vshrl.u32 %v2392, 7
    %v2394 = vsub.s32 0, %v2393
    %v2395 = vrot.slane %v2390, %v2394
    %v2397 = vsub.f32 %v2389, %v2395
    %2398 = vst [vmem:[#allocation34] sm:$0xff] %v2397
    // Predicated region
    $region210: #{tpu_custom_call.1} parent=1 // pred_check
      _
    $region211: #{tpu_custom_call.1} parent=1 // pred_check_branch
      %2400 = sbr.rel (0) target = $region213
    $region212: #{tpu_custom_call.1} parent=1 // pred_region
      %s2402 = ssub.s32 128, 128
      %2403 = vsyncadd [#allocation4], %s2402
      %s2405 = sshll.u32 [#allocation34], 4
      %s2406 = int_to_ptr.vmem [resolvable:$true] %s2405
      %2408 = dma.vmem_to_hbm [thread:$0]  %s2406, 128, %s65, [#allocation4]
    $region213: #{tpu_custom_call.1} parent=1 // pred_fallthru
      _
    // Predicated region
    $region214: #{tpu_custom_call.1} parent=1 // pred_check
      _
    $region215: #{tpu_custom_call.1} parent=1 // pred_check_branch
      %2410 = sbr.rel (0) target = $region217
    $region216: #{tpu_custom_call.1} parent=1 // pred_region
      %2411 = dma.done [#allocation4], 128
    $region217: #{tpu_custom_call.1} parent=1 // pred_fallthru
      _
    %2412 = vsyncpa [#allocation3], 1
    %2413 = vsyncpa [#allocation6], 1
    %2414 = vsyncpa [#allocation9], 1
    %2415 = vsyncpa [#allocation12], 1
    %2416 = vsyncpa [#allocation15], 1
    %2417 = vsyncpa [#allocation18], 1
    %2418 = vsyncpa [#allocation21], 1
    %2419 = vsyncpa [#allocation24], 1
    %2420 = vsyncpa [#allocation27], 1
    %2421 = vsyncpa [#allocation30], 1
    %2422 = vsyncpa [#allocation33], 1
    %2423 = vsyncpa [#allocation4], 1

</llo_original>
